<compile_context>
chip_gen: v7x
topology: tpu7x:2x2x1
jax: 0.10.0
libtpu: 0.0.40
codegen_flags: <defaults>
</compile_context>

<pallas_src>
import jax
import jax.numpy as jnp
from jax.experimental import pallas as pl
from jax.experimental.pallas import tpu as pltpu

STATE_DIM = 8
ACTION_DIM = 2
HIDDEN = 400
N_HIDDEN_MM = 4      # fc2..fc5 (the stacked 400x400 layers)


def _qnet_kernel(x_ref, w1_ref, wh_ref, w6_ref, bh_ref, b6_ref, out_ref):
    """Fused 6-layer MLP forward on one batch tile; all weights VMEM-resident.

    x_ref   : (TILE_B, S)     f32
    w1_ref  : (S, H)          f32
    wh_ref  : (4, H, H)       f32   (fc2..fc5 weights, stacked)
    w6_ref  : (H, A)          f32
    bh_ref  : (5, H)          f32   (biases of fc1..fc5, stacked)
    b6_ref  : (1, A)          f32
    out_ref : (TILE_B, A)     f32
    """
    # fc1 + ReLU
    h = jnp.dot(x_ref[...], w1_ref[...], preferred_element_type=jnp.float32)
    h = jnp.maximum(h + bh_ref[0:1, :], 0.0)

    # fc2..fc5 + ReLU (static unroll; weights already in VMEM)
    for i in range(N_HIDDEN_MM):
        h = jnp.dot(h, wh_ref[i], preferred_element_type=jnp.float32)
        h = jnp.maximum(h + bh_ref[i + 1:i + 2, :], 0.0)

    # output layer + sigmoid
    logits = jnp.dot(h, w6_ref[...], preferred_element_type=jnp.float32)
    logits = logits + b6_ref[...]
    out_ref[...] = 1.0 / (1.0 + jnp.exp(-logits))


def pack_params(params):
    """params: 6 tuples of (W[in,out] f32, b[out] f32) -> packed kernel operands."""
    (w1, b1), (w2, b2), (w3, b3), (w4, b4), (w5, b5), (w6, b6) = params
    wh = jnp.stack([w2, w3, w4, w5])            # (4, H, H) f32
    bh = jnp.stack([b1, b2, b3, b4, b5])        # (5, H)    f32
    return (w1, wh, w6, bh, b6.reshape(1, -1))  # b6 -> (1, A)


def _round_up(n, m):
    return (n + m - 1) // m * m


def qnet_forward(x, packed, *, tile_b=8):
    """x: (batch, state_dim) f32. packed: output of pack_params.

    For large-batch inference use tile_b=128+ so each MXU matmul has a full
    row tile; weights are fetched once and stay resident across batch tiles.
    """
    w1, wh, w6, bh, b6 = packed
    batch, state_dim = x.shape
    hidden = w1.shape[1]
    action_dim = w6.shape[1]

    # Pad the batch to a multiple of the batch tile (tile_b is a multiple of 8).
    tile_b = max(8, _round_up(tile_b, 8))
    padded_b = _round_up(batch, tile_b)
    if padded_b != batch:
        x = jnp.pad(x, ((0, padded_b - batch), (0, 0)))
    n_tiles = padded_b // tile_b

    # Weights: full-array VMEM blocks with a constant index_map -> resident
    # across all batch tiles (DMA'd once).
    resident = lambda a: pl.BlockSpec(a.shape, lambda i, nd=a.ndim: (0,) * nd)

    bytes_accessed = (x.size * 4 + padded_b * action_dim * 4
                      + sum(int(a.size) * a.dtype.itemsize
                            for a in (w1, wh, w6, bh, b6)))
    flops = 2 * padded_b * (state_dim * hidden
                            + N_HIDDEN_MM * hidden * hidden
                            + hidden * action_dim)

    out = pl.pallas_call(
        _qnet_kernel,
        grid=(n_tiles,),
        out_shape=jax.ShapeDtypeStruct((padded_b, action_dim), jnp.float32),
        in_specs=[pl.BlockSpec((tile_b, state_dim), lambda i: (i, 0)),
                  resident(w1),
                  resident(wh),
                  resident(w6),
                  resident(bh),
                  resident(b6)],
        out_specs=pl.BlockSpec((tile_b, action_dim), lambda i: (i, 0)),
        compiler_params=pltpu.CompilerParams(
            dimension_semantics=("parallel",)),
        cost_estimate=pl.CostEstimate(flops=flops,
                                      transcendentals=padded_b * action_dim,
                                      bytes_accessed=bytes_accessed),
    )(x, w1, wh, w6, bh, b6)

    return out[:batch]


def init_params(key, state_dim=STATE_DIM, action_dim=ACTION_DIM, hidden=HIDDEN):
    """Deterministic synthetic init (PyTorch-Linear-like uniform fan-in scaling).

    Weights are stored as (in_features, out_features) — the transpose of
    PyTorch's (out, in) layout — so the kernel computes x @ W + b.
    """
    dims = [(state_dim, hidden)] + [(hidden, hidden)] * 4 + [(hidden, action_dim)]
    params = []
    for fan_in, fan_out in dims:
        key, kw, kb = jax.random.split(key, 3)
        bound = 1.0 / (fan_in ** 0.5)
        w = jax.random.uniform(kw, (fan_in, fan_out), jnp.float32, -bound, bound)
        b = jax.random.uniform(kb, (fan_out,), jnp.float32, -bound, bound)
        params.append((w, b))
    return params


def qnet_reference(x, packed):
    """Pure-JAX f32 reference forward (same math as the PyTorch module)."""
    w1, wh, w6, bh, b6 = packed
    h = jnp.dot(x, w1, preferred_element_type=jnp.float32)
    h = jnp.maximum(h + bh[0:1, :], 0.0)
    for i in range(wh.shape[0]):
        h = jnp.dot(h, wh[i], preferred_element_type=jnp.float32)
        h = jnp.maximum(h + bh[i + 1:i + 2, :], 0.0)
    logits = jnp.dot(h, w6, preferred_element_type=jnp.float32) + b6
    return 1.0 / (1.0 + jnp.exp(-logits))


if __name__ == "__main__":
    key = jax.random.PRNGKey(0)
    key, kx = jax.random.split(key)

    BATCH = 32          # small demo batch; grid has 4 tiles of 8 rows each
    x = jax.random.normal(kx, (BATCH, STATE_DIM), jnp.float32)
    packed = pack_params(init_params(key))

    out = qnet_forward(x, packed, tile_b=8)
    out = jax.block_until_ready(out)

    ref = qnet_reference(x, packed)
    assert out.shape == (BATCH, ACTION_DIM), out.shape
    # f32 weights everywhere; small slack for MXU default-precision matmuls.
    assert jnp.allclose(out, ref, atol=1e-2, rtol=1e-2), (out, ref)

    print("KERNEL_OK")
</pallas_src>

<mosaic_0001>
module attributes {stable_mosaic.version = 11 : i64} {
  func.func @_qnet_kernel(%arg0: i32, %arg1: memref<8x8xf32, #tpu.memory_space<vmem>>, %arg2: memref<8x400xf32, #tpu.memory_space<vmem>>, %arg3: memref<4x400x400xf32, #tpu.memory_space<vmem>>, %arg4: memref<400x2xf32, #tpu.memory_space<vmem>>, %arg5: memref<5x400xf32, #tpu.memory_space<vmem>>, %arg6: memref<1x2xf32, #tpu.memory_space<vmem>>, %arg7: memref<8x2xf32, #tpu.memory_space<vmem>>) attributes {dimension_semantics = [#tpu.dimension_semantics<parallel>], iteration_bounds = array<i64: 4>, scalar_prefetch = 0 : i64, scratch_operands = 0 : i64, tpu.core_type = #tpu.core_type<tc>, window_params = [{transform_indices = @transform_0, window_bounds = array<i64: 8, 8>}, {pipeline_mode = #tpu.pipeline_mode<synchronous>, transform_indices = @transform_1, window_bounds = array<i64: 8, 400>}, {pipeline_mode = #tpu.pipeline_mode<synchronous>, transform_indices = @transform_2, window_bounds = array<i64: 4, 400, 400>}, {pipeline_mode = #tpu.pipeline_mode<synchronous>, transform_indices = @transform_3, window_bounds = array<i64: 400, 2>}, {pipeline_mode = #tpu.pipeline_mode<synchronous>, transform_indices = @transform_4, window_bounds = array<i64: 5, 400>}, {pipeline_mode = #tpu.pipeline_mode<synchronous>, transform_indices = @transform_5, window_bounds = array<i64: 1, 2>}, {transform_indices = @transform_6, window_bounds = array<i64: 8, 2>}]} {
    %c0 = arith.constant 0 : index
    %c0_0 = arith.constant 0 : index
    %0 = vector.load %arg1[%c0, %c0_0] : memref<8x8xf32, #tpu.memory_space<vmem>>, vector<8x8xf32>
    %c0_1 = arith.constant 0 : index
    %c0_2 = arith.constant 0 : index
    %1 = vector.load %arg2[%c0_1, %c0_2] : memref<8x400xf32, #tpu.memory_space<vmem>>, vector<8x400xf32>
    %cst = arith.constant dense<0.000000e+00> : vector<8x400xf32>
    %2 = tpu.matmul %0, %1, %cst {dimension_numbers = #tpu.dot_dimension_numbers<[1], [0], [0], [1], [0, 0, 1, 1], [], []>} : vector<8x8xf32>, vector<8x400xf32>, vector<8x400xf32> -> vector<8x400xf32>
    %c0_3 = arith.constant 0 : index
    %c0_4 = arith.constant 0 : index
    %3 = vector.load %arg5[%c0_3, %c0_4] : memref<5x400xf32, #tpu.memory_space<vmem>>, vector<1x400xf32>
    %4 = vector.broadcast %3 : vector<1x400xf32> to vector<8x400xf32>
    %5 = arith.addf %2, %4 : vector<8x400xf32>
    %cst_5 = arith.constant 0.000000e+00 : f32
    %6 = vector.broadcast %cst_5 : f32 to vector<8x400xf32>
    %7 = arith.maximumf %5, %6 : vector<8x400xf32>
    %c0_6 = arith.constant 0 : index
    %c0_7 = arith.constant 0 : index
    %c0_8 = arith.constant 0 : index
    %8 = vector.load %arg3[%c0_6, %c0_7, %c0_8] : memref<4x400x400xf32, #tpu.memory_space<vmem>>, vector<1x400x400xf32>
    %9 = vector.shape_cast %8 : vector<1x400x400xf32> to vector<400x400xf32>
    %cst_9 = arith.constant dense<0.000000e+00> : vector<8x400xf32>
    %10 = tpu.matmul %7, %9, %cst_9 {dimension_numbers = #tpu.dot_dimension_numbers<[1], [0], [0], [1], [0, 0, 1, 1], [], []>} : vector<8x400xf32>, vector<400x400xf32>, vector<8x400xf32> -> vector<8x400xf32>
    %c1 = arith.constant 1 : index
    %c0_10 = arith.constant 0 : index
    %11 = vector.load %arg5[%c1, %c0_10] : memref<5x400xf32, #tpu.memory_space<vmem>>, vector<1x400xf32>
    %12 = vector.broadcast %11 : vector<1x400xf32> to vector<8x400xf32>
    %13 = arith.addf %10, %12 : vector<8x400xf32>
    %cst_11 = arith.constant 0.000000e+00 : f32
    %14 = vector.broadcast %cst_11 : f32 to vector<8x400xf32>
    %15 = arith.maximumf %13, %14 : vector<8x400xf32>
    %c1_12 = arith.constant 1 : index
    %c0_13 = arith.constant 0 : index
    %c0_14 = arith.constant 0 : index
    %16 = vector.load %arg3[%c1_12, %c0_13, %c0_14] : memref<4x400x400xf32, #tpu.memory_space<vmem>>, vector<1x400x400xf32>
    %17 = vector.shape_cast %16 : vector<1x400x400xf32> to vector<400x400xf32>
    %cst_15 = arith.constant dense<0.000000e+00> : vector<8x400xf32>
    %18 = tpu.matmul %15, %17, %cst_15 {dimension_numbers = #tpu.dot_dimension_numbers<[1], [0], [0], [1], [0, 0, 1, 1], [], []>} : vector<8x400xf32>, vector<400x400xf32>, vector<8x400xf32> -> vector<8x400xf32>
    %c2 = arith.constant 2 : index
    %c0_16 = arith.constant 0 : index
    %19 = vector.load %arg5[%c2, %c0_16] : memref<5x400xf32, #tpu.memory_space<vmem>>, vector<1x400xf32>
    %20 = vector.broadcast %19 : vector<1x400xf32> to vector<8x400xf32>
    %21 = arith.addf %18, %20 : vector<8x400xf32>
    %cst_17 = arith.constant 0.000000e+00 : f32
    %22 = vector.broadcast %cst_17 : f32 to vector<8x400xf32>
    %23 = arith.maximumf %21, %22 : vector<8x400xf32>
    %c2_18 = arith.constant 2 : index
    %c0_19 = arith.constant 0 : index
    %c0_20 = arith.constant 0 : index
    %24 = vector.load %arg3[%c2_18, %c0_19, %c0_20] : memref<4x400x400xf32, #tpu.memory_space<vmem>>, vector<1x400x400xf32>
    %25 = vector.shape_cast %24 : vector<1x400x400xf32> to vector<400x400xf32>
    %cst_21 = arith.constant dense<0.000000e+00> : vector<8x400xf32>
    %26 = tpu.matmul %23, %25, %cst_21 {dimension_numbers = #tpu.dot_dimension_numbers<[1], [0], [0], [1], [0, 0, 1, 1], [], []>} : vector<8x400xf32>, vector<400x400xf32>, vector<8x400xf32> -> vector<8x400xf32>
    %c3 = arith.constant 3 : index
    %c0_22 = arith.constant 0 : index
    %27 = vector.load %arg5[%c3, %c0_22] : memref<5x400xf32, #tpu.memory_space<vmem>>, vector<1x400xf32>
    %28 = vector.broadcast %27 : vector<1x400xf32> to vector<8x400xf32>
    %29 = arith.addf %26, %28 : vector<8x400xf32>
    %cst_23 = arith.constant 0.000000e+00 : f32
    %30 = vector.broadcast %cst_23 : f32 to vector<8x400xf32>
    %31 = arith.maximumf %29, %30 : vector<8x400xf32>
    %c3_24 = arith.constant 3 : index
    %c0_25 = arith.constant 0 : index
    %c0_26 = arith.constant 0 : index
    %32 = vector.load %arg3[%c3_24, %c0_25, %c0_26] : memref<4x400x400xf32, #tpu.memory_space<vmem>>, vector<1x400x400xf32>
    %33 = vector.shape_cast %32 : vector<1x400x400xf32> to vector<400x400xf32>
    %cst_27 = arith.constant dense<0.000000e+00> : vector<8x400xf32>
    %34 = tpu.matmul %31, %33, %cst_27 {dimension_numbers = #tpu.dot_dimension_numbers<[1], [0], [0], [1], [0, 0, 1, 1], [], []>} : vector<8x400xf32>, vector<400x400xf32>, vector<8x400xf32> -> vector<8x400xf32>
    %c4 = arith.constant 4 : index
    %c0_28 = arith.constant 0 : index
    %35 = vector.load %arg5[%c4, %c0_28] : memref<5x400xf32, #tpu.memory_space<vmem>>, vector<1x400xf32>
    %36 = vector.broadcast %35 : vector<1x400xf32> to vector<8x400xf32>
    %37 = arith.addf %34, %36 : vector<8x400xf32>
    %cst_29 = arith.constant 0.000000e+00 : f32
    %38 = vector.broadcast %cst_29 : f32 to vector<8x400xf32>
    %39 = arith.maximumf %37, %38 : vector<8x400xf32>
    %c0_30 = arith.constant 0 : index
    %c0_31 = arith.constant 0 : index
    %40 = vector.load %arg4[%c0_30, %c0_31] : memref<400x2xf32, #tpu.memory_space<vmem>>, vector<400x2xf32>
    %cst_32 = arith.constant dense<0.000000e+00> : vector<8x2xf32>
    %41 = tpu.matmul %39, %40, %cst_32 {dimension_numbers = #tpu.dot_dimension_numbers<[1], [0], [0], [1], [0, 0, 1, 1], [], []>} : vector<8x400xf32>, vector<400x2xf32>, vector<8x2xf32> -> vector<8x2xf32>
    %c0_33 = arith.constant 0 : index
    %c0_34 = arith.constant 0 : index
    %42 = vector.load %arg6[%c0_33, %c0_34] : memref<1x2xf32, #tpu.memory_space<vmem>>, vector<1x2xf32>
    %43 = vector.broadcast %42 : vector<1x2xf32> to vector<8x2xf32>
    %44 = arith.addf %41, %43 : vector<8x2xf32>
    %cst_35 = arith.constant 0.000000e+00 : f32
    %45 = vector.broadcast %cst_35 : f32 to vector<8x2xf32>
    %46 = arith.subf %45, %44 : vector<8x2xf32>
    %47 = math.exp %46 : vector<8x2xf32>
    %cst_36 = arith.constant 1.000000e+00 : f32
    %48 = vector.broadcast %cst_36 : f32 to vector<8x2xf32>
    %49 = arith.addf %48, %47 : vector<8x2xf32>
    %cst_37 = arith.constant 1.000000e+00 : f32
    %50 = vector.broadcast %cst_37 : f32 to vector<8x2xf32>
    %51 = arith.divf %50, %49 : vector<8x2xf32>
    %c0_38 = arith.constant 0 : index
    %c0_39 = arith.constant 0 : index
    %52 = vector.load %arg7[%c0_38, %c0_39] : memref<8x2xf32, #tpu.memory_space<vmem>>, vector<8x2xf32>
    tpu.vector_store %arg7[%c0_38, %c0_39], %51 {strides = array<i32>} : memref<8x2xf32, #tpu.memory_space<vmem>>, vector<8x2xf32>,
    return
  }
  func.func @transform_0(%arg0: i32) -> (i32, i32) {
    %c0_i32 = arith.constant 0 : i32
    %c0_i32_0 = arith.constant 0 : i32
    return %arg0, %c0_i32 : i32, i32
  }
  func.func @transform_1(%arg0: i32) -> (i32, i32) {
    %c0_i32 = arith.constant 0 : i32
    %c0_i32_0 = arith.constant 0 : i32
    %c0_i32_1 = arith.constant 0 : i32
    return %c0_i32, %c0_i32_0 : i32, i32
  }
  func.func @transform_2(%arg0: i32) -> (i32, i32, i32) {
    %c0_i32 = arith.constant 0 : i32
    %c0_i32_0 = arith.constant 0 : i32
    %c0_i32_1 = arith.constant 0 : i32
    %c0_i32_2 = arith.constant 0 : i32
    return %c0_i32, %c0_i32_0, %c0_i32_1 : i32, i32, i32
  }
  func.func @transform_3(%arg0: i32) -> (i32, i32) {
    %c0_i32 = arith.constant 0 : i32
    %c0_i32_0 = arith.constant 0 : i32
    %c0_i32_1 = arith.constant 0 : i32
    return %c0_i32, %c0_i32_0 : i32, i32
  }
  func.func @transform_4(%arg0: i32) -> (i32, i32) {
    %c0_i32 = arith.constant 0 : i32
    %c0_i32_0 = arith.constant 0 : i32
    %c0_i32_1 = arith.constant 0 : i32
    return %c0_i32, %c0_i32_0 : i32, i32
  }
  func.func @transform_5(%arg0: i32) -> (i32, i32) {
    %c0_i32 = arith.constant 0 : i32
    %c0_i32_0 = arith.constant 0 : i32
    %c0_i32_1 = arith.constant 0 : i32
    return %c0_i32, %c0_i32_0 : i32, i32
  }
  func.func @transform_6(%arg0: i32) -> (i32, i32) {
    %c0_i32 = arith.constant 0 : i32
    %c0_i32_0 = arith.constant 0 : i32
    return %arg0, %c0_i32 : i32, i32
  }
}

</mosaic_0001>

<llo_original>
// kernel: tpu_custom_call.1
$region0: #{tpu_custom_call.1}
  #allocation0 [shape = 'u32[]', space=smem, size = 0x4, offset = 0x4, fixed_abs, tag = 'smem constant byte address 0x4 - core index']
  #allocation1 [shape = 'u32[144,128]{1,0:T(1,128)}', space=vmem, size = 0x12000, scoped, tag = 'internal scratch']
  %s0 = inlined_call_operand.vmem [shape: f32[32,8], index: 0, kind: input, shape index: {}]
  %s1 = inlined_call_operand.hbm [shape: f32[8,400], index: 1, kind: input, shape index: {}]
  %s2 = inlined_call_operand.hbm [shape: f32[4,400,400], index: 2, kind: input, shape index: {}]
  %s3 = inlined_call_operand.vmem [shape: f32[400,2], index: 3, kind: input, shape index: {}]
  %s4 = inlined_call_operand.hbm [shape: f32[5,400], index: 4, kind: input, shape index: {}]
  %s5 = inlined_call_operand.hbm [shape: f32[1,2], index: 5, kind: input, shape index: {}]
  %s6 = inlined_call_operand.vmem [shape: f32[32,2], index: 6, kind: output, shape index: {}]
  %s7 = sld [smem:[#allocation0]]
  $region73: #{tpu_custom_call.1} parent=0
    _
  %s9 = ssub.s32 1, %s7
  %s10 = scalar_select 0, %s9, %s7
  $region1: #{tpu_custom_call.1} parent=0
    #allocation2 [shape = 'u8[16384]{0}', space=vmem, size = 0x4000, scoped, tag = 'input window, operand 1, single buffered']
    #allocation3 [shape = 's32[2]{0}', space=sflag, size = 0x8, scoped, tag = 'scoped memory for tpu_custom_call.1']
    #allocation4 [shape = 'u8[3276800]{0}', space=vmem, size = 0x320000, scoped, tag = 'input window, operand 2, single buffered']
    #allocation5 [shape = 's32[1]{0}', space=sflag, size = 0x4, scoped, tag = 'scoped memory for tpu_custom_call.1']
    #allocation6 [shape = 'u8[16384]{0}', space=vmem, size = 0x4000, scoped, tag = 'input window, operand 4, single buffered']
    #allocation7 [shape = 'u8[512]{0}', space=vmem, size = 0x400, scoped, tag = 'input window, operand 5, single buffered']
    #allocation8 [shape = 's32[1]{0}', space=sflag, size = 0x4, scoped, tag = 'scoped memory for tpu_custom_call.1']
    %11 = vsyncpa [#allocation3], 0
    %12 = vsyncpa [#allocation5], 0
    %13 = vsyncpa [#allocation8], 0
    loop: start=0, step=1, limit=6
    $region2: #{tpu_custom_call.1} parent=1 // loop_pre_header
      _
    $region3: #{tpu_custom_call.1} parent=1 // loop_header
      %s15 = sphi 0, %s19
      %p16 = scmp.ge.s32.totalorder %s15, 6
      %s25 = sphi 0, %s27
      %s28 = sphi 0, %s25
      %s29 = sphi 0, %s28
      %s45 = sphi 0, %s29
      %s49 = sphi 0, %s49
      %s51 = sphi 0, %s49
      %s52 = sphi 0, %s51
      %s66 = sphi 0, %s52
      %s70 = sphi 0, %s70
      %s72 = sphi 0, %s70
      %s73 = sphi 0, %s72
      %s87 = sphi 0, %s73
      %s91 = sphi 0, %s91
      %s93 = sphi 0, %s91
      %s94 = sphi 0, %s93
      %s108 = sphi 0, %s94
      %s112 = sphi 0, %s112
      %s114 = sphi 0, %s112
      %s115 = sphi 0, %s114
      %s129 = sphi 0, %s115
      %s133 = sphi 0, %s133
      %s135 = sphi 0, %s133
      %s136 = sphi 0, %s135
      %s150 = sphi 0, %s136
      %s156 = sphi 0, %s158
      %s159 = sphi 0, %s156
      %s160 = sphi 0, %s159
      %s176 = sphi 0, %s160
    $region4: #{tpu_custom_call.1} parent=1 // loop_header_branch
      %18 = sbr.rel (%p16) target = $region8
    $region5: #{tpu_custom_call.1} parent=1 // loop_body
      %s20 = ssub.s32 %s15, 1
      %s21 = ssub.s32 %s15, 2
      %s22 = sadd.s32 %s15, 1
      %s23 = ssub.s32 %s15, %s22
      %p24 = scmp.eq.s32.totalorder %s23, 0
      %s26 = sadd.s32 %s25, 1
      %s27 = scalar_select %p24, %s25, %s26
      %p30 = pneg %p24
      %p31 = scmp.eq.s32.totalorder %s15, 3
      %p32 = por %p30, %p31
      %p33 = scmp.ne.s32.totalorder %s25, %s28
      %p34 = scmp.eq.s32.totalorder %s15, 0
      %p35 = por %p33, %p34
      %p36 = scmp.ne.s32.totalorder %s25, %s28
      %p37 = scmp.eq.s32.totalorder %s20, 3
      %p38 = por %p36, %p37
      %p39 = scmp.ne.s32.totalorder %s28, %s29
      %p40 = scmp.eq.s32.totalorder %s20, 0
      %p41 = por %p39, %p40
      %p42 = scmp.ne.s32.totalorder %s28, %s29
      %p43 = scmp.eq.s32.totalorder %s21, 3
      %p44 = por %p42, %p43
      %p46 = scmp.ne.s32.totalorder %s29, %s45
      %p47 = scmp.eq.s32.totalorder %s21, 0
      %p48 = por %p46, %p47
      %s50 = sadd.s32 %s49, 1
      %p53 = scmp.eq.s32.totalorder %s15, 3
      %p54 = scmp.ne.s32.totalorder %s49, %s51
      %p55 = scmp.eq.s32.totalorder %s15, 0
      %p56 = por %p54, %p55
      %p57 = scmp.ne.s32.totalorder %s49, %s51
      %p58 = scmp.eq.s32.totalorder %s20, 3
      %p59 = por %p57, %p58
      %p60 = scmp.ne.s32.totalorder %s51, %s52
      %p61 = scmp.eq.s32.totalorder %s20, 0
      %p62 = por %p60, %p61
      %p63 = scmp.ne.s32.totalorder %s51, %s52
      %p64 = scmp.eq.s32.totalorder %s21, 3
      %p65 = por %p63, %p64
      %p67 = scmp.ne.s32.totalorder %s52, %s66
      %p68 = scmp.eq.s32.totalorder %s21, 0
      %p69 = por %p67, %p68
      %s71 = sadd.s32 %s70, 1
      %p74 = scmp.eq.s32.totalorder %s15, 3
      %p75 = scmp.ne.s32.totalorder %s70, %s72
      %p76 = scmp.eq.s32.totalorder %s15, 0
      %p77 = por %p75, %p76
      %p78 = scmp.ne.s32.totalorder %s70, %s72
      %p79 = scmp.eq.s32.totalorder %s20, 3
      %p80 = por %p78, %p79
      %p81 = scmp.ne.s32.totalorder %s72, %s73
      %p82 = scmp.eq.s32.totalorder %s20, 0
      %p83 = por %p81, %p82
      %p84 = scmp.ne.s32.totalorder %s72, %s73
      %p85 = scmp.eq.s32.totalorder %s21, 3
      %p86 = por %p84, %p85
      %p88 = scmp.ne.s32.totalorder %s73, %s87
      %p89 = scmp.eq.s32.totalorder %s21, 0
      %p90 = por %p88, %p89
      %s92 = sadd.s32 %s91, 1
      %p95 = scmp.eq.s32.totalorder %s15, 3
      %p96 = scmp.ne.s32.totalorder %s91, %s93
      %p97 = scmp.eq.s32.totalorder %s15, 0
      %p98 = por %p96, %p97
      %p99 = scmp.ne.s32.totalorder %s91, %s93
      %p100 = scmp.eq.s32.totalorder %s20, 3
      %p101 = por %p99, %p100
      %p102 = scmp.ne.s32.totalorder %s93, %s94
      %p103 = scmp.eq.s32.totalorder %s20, 0
      %p104 = por %p102, %p103
      %p105 = scmp.ne.s32.totalorder %s93, %s94
      %p106 = scmp.eq.s32.totalorder %s21, 3
      %p107 = por %p105, %p106
      %p109 = scmp.ne.s32.totalorder %s94, %s108
      %p110 = scmp.eq.s32.totalorder %s21, 0
      %p111 = por %p109, %p110
      %s113 = sadd.s32 %s112, 1
      %p116 = scmp.eq.s32.totalorder %s15, 3
      %p117 = scmp.ne.s32.totalorder %s112, %s114
      %p118 = scmp.eq.s32.totalorder %s15, 0
      %p119 = por %p117, %p118
      %p120 = scmp.ne.s32.totalorder %s112, %s114
      %p121 = scmp.eq.s32.totalorder %s20, 3
      %p122 = por %p120, %p121
      %p123 = scmp.ne.s32.totalorder %s114, %s115
      %p124 = scmp.eq.s32.totalorder %s20, 0
      %p125 = por %p123, %p124
      %p126 = scmp.ne.s32.totalorder %s114, %s115
      %p127 = scmp.eq.s32.totalorder %s21, 3
      %p128 = por %p126, %p127
      %p130 = scmp.ne.s32.totalorder %s115, %s129
      %p131 = scmp.eq.s32.totalorder %s21, 0
      %p132 = por %p130, %p131
      %s134 = sadd.s32 %s133, 1
      %p137 = scmp.eq.s32.totalorder %s15, 3
      %p138 = scmp.ne.s32.totalorder %s133, %s135
      %p139 = scmp.eq.s32.totalorder %s15, 0
      %p140 = por %p138, %p139
      %p141 = scmp.ne.s32.totalorder %s133, %s135
      %p142 = scmp.eq.s32.totalorder %s20, 3
      %p143 = por %p141, %p142
      %p144 = scmp.ne.s32.totalorder %s135, %s136
      %p145 = scmp.eq.s32.totalorder %s20, 0
      %p146 = por %p144, %p145
      %p147 = scmp.ne.s32.totalorder %s135, %s136
      %p148 = scmp.eq.s32.totalorder %s21, 3
      %p149 = por %p147, %p148
      %p151 = scmp.ne.s32.totalorder %s136, %s150
      %p152 = scmp.eq.s32.totalorder %s21, 0
      %p153 = por %p151, %p152
      %s154 = ssub.s32 %s15, %s22
      %p155 = scmp.eq.s32.totalorder %s154, 0
      %s157 = sadd.s32 %s156, 1
      %s158 = scalar_select %p155, %s156, %s157
      %p161 = pneg %p155
      %p162 = scmp.eq.s32.totalorder %s15, 3
      %p163 = por %p161, %p162
      %p164 = scmp.ne.s32.totalorder %s156, %s159
      %p165 = scmp.eq.s32.totalorder %s15, 0
      %p166 = por %p164, %p165
      %p167 = scmp.ne.s32.totalorder %s156, %s159
      %p168 = scmp.eq.s32.totalorder %s20, 3
      %p169 = por %p167, %p168
      %p170 = scmp.ne.s32.totalorder %s159, %s160
      %p171 = scmp.eq.s32.totalorder %s20, 0
      %p172 = por %p170, %p171
      %p173 = scmp.ne.s32.totalorder %s159, %s160
      %p174 = scmp.eq.s32.totalorder %s21, 3
      %p175 = por %p173, %p174
      %p177 = scmp.ne.s32.totalorder %s160, %s176
      %p178 = scmp.eq.s32.totalorder %s21, 0
      %p179 = por %p177, %p178
      %p180 = scmp.le.s32.totalorder 1, %s15
      %p181 = scmp.lt.s32.totalorder %s15, 5
      %p182 = pnand %p180, %p181
      %p183 = pneg %p182
      // Predicated region
      $region9: #{tpu_custom_call.1} parent=5 // pred_check
        _
      $region10: #{tpu_custom_call.1} parent=5 // pred_check_branch
        %185 = sbr.rel (%p182) target = $region12
      $region11: #{tpu_custom_call.1} parent=5 // pred_region
        %s186 = ssub.s32 %s15, 1
        // Predicated region
        $region13: #{tpu_custom_call.1} parent=11 // pred_check
          %p187 = pneg %p62
        $region14: #{tpu_custom_call.1} parent=11 // pred_check_branch
          %189 = sbr.rel (%p187) target = $region16
        $region15: #{tpu_custom_call.1} parent=11 // pred_region
          %s191 = ssub.s32 512, 512
          %192 = vsyncadd [#allocation3], %s191
          %s194 = sshll.u32 [#allocation2], 4
          %s195 = int_to_ptr.vmem [resolvable:$true] %s194
          %197 = dma.hbm_to_vmem [thread:$0]  %s1, 512, %s195, [#allocation3]
        $region16: #{tpu_custom_call.1} parent=11 // pred_fallthru
          _
        // Predicated region
        $region17: #{tpu_custom_call.1} parent=11 // pred_check
          %p198 = pneg %p83
        $region18: #{tpu_custom_call.1} parent=11 // pred_check_branch
          %200 = sbr.rel (%p198) target = $region20
        $region19: #{tpu_custom_call.1} parent=11 // pred_region
          %s202 = ssub.s32 102400, 102400
          %203 = vsyncadd [#allocation5], %s202
          %s204 = sshll.u32 [#allocation4], 4
          %s205 = int_to_ptr.vmem [resolvable:$true] %s204
          %210 = dma.hbm_to_vmem [thread:$0]  %s2, 102400, %s205, [#allocation5], 512, 512, 32
        $region20: #{tpu_custom_call.1} parent=11 // pred_fallthru
          _
        // Predicated region
        $region21: #{tpu_custom_call.1} parent=11 // pred_check
          %p211 = pneg %p104
        $region22: #{tpu_custom_call.1} parent=11 // pred_check_branch
          %213 = sbr.rel (%p211) target = $region24
        $region23: #{tpu_custom_call.1} parent=11 // pred_region
          _
        $region24: #{tpu_custom_call.1} parent=11 // pred_fallthru
          _
        // Predicated region
        $region25: #{tpu_custom_call.1} parent=11 // pred_check
          %p214 = pneg %p125
        $region26: #{tpu_custom_call.1} parent=11 // pred_check_branch
          %216 = sbr.rel (%p214) target = $region28
        $region27: #{tpu_custom_call.1} parent=11 // pred_region
          %s218 = ssub.s32 512, 512
          %219 = vsyncadd [#allocation5], %s218
          %s221 = sshll.u32 [#allocation6], 4
          %s222 = int_to_ptr.vmem [resolvable:$true] %s221
          %224 = dma.hbm_to_vmem [thread:$0]  %s4, 512, %s222, [#allocation5]
        $region28: #{tpu_custom_call.1} parent=11 // pred_fallthru
          _
        // Predicated region
        $region29: #{tpu_custom_call.1} parent=11 // pred_check
          %p225 = pneg %p146
        $region30: #{tpu_custom_call.1} parent=11 // pred_check_branch
          %227 = sbr.rel (%p225) target = $region32
        $region31: #{tpu_custom_call.1} parent=11 // pred_region
          %s229 = ssub.s32 16, 16
          %230 = vsyncadd [#allocation8], %s229
          %s232 = sshll.u32 [#allocation7], 4
          %s233 = int_to_ptr.vmem [resolvable:$true] %s232
          %235 = dma.hbm_to_vmem [thread:$0]  %s5, 16, %s233, [#allocation8]
        $region32: #{tpu_custom_call.1} parent=11 // pred_fallthru
          _
      $region12: #{tpu_custom_call.1} parent=5 // pred_fallthru
        _
      %p236 = scmp.lt.s32.totalorder %s15, 4
      // Predicated region
      $region33: #{tpu_custom_call.1} parent=5 // pred_check
        %p237 = pneg %p236
      $region34: #{tpu_custom_call.1} parent=5 // pred_check_branch
        %239 = sbr.rel (%p237) target = $region36
      $region35: #{tpu_custom_call.1} parent=5 // pred_region
        // Predicated region
        $region37: #{tpu_custom_call.1} parent=35 // pred_check
          %p240 = pneg %p35
        $region38: #{tpu_custom_call.1} parent=35 // pred_check_branch
          %242 = sbr.rel (%p240) target = $region40
        $region39: #{tpu_custom_call.1} parent=35 // pred_region
          %p243 = scmp.lt.s32.totalorder %s15, 3
          %s244 = scalar_select %p243, %s15, 3
          %s245 = smul.addr %s244, 8
          %s246 = scalar_lea.vmem %s0, %s245
        $region40: #{tpu_custom_call.1} parent=35 // pred_fallthru
          _
      $region36: #{tpu_custom_call.1} parent=5 // pred_fallthru
        _
      %p247 = scmp.le.s32.totalorder 1, %s15
      %p248 = scmp.lt.s32.totalorder %s15, 5
      %p249 = pnand %p247, %p248
      %p250 = pneg %p249
      // Predicated region
      $region41: #{tpu_custom_call.1} parent=5 // pred_check
        _
      $region42: #{tpu_custom_call.1} parent=5 // pred_check_branch
        %252 = sbr.rel (%p249) target = $region44
      $region43: #{tpu_custom_call.1} parent=5 // pred_region
        %s253 = ssub.s32 %s15, 1
        // Predicated region
        $region45: #{tpu_custom_call.1} parent=43 // pred_check
          %p254 = pneg %p62
        $region46: #{tpu_custom_call.1} parent=43 // pred_check_branch
          %256 = sbr.rel (%p254) target = $region48
        $region47: #{tpu_custom_call.1} parent=43 // pred_region
          %257 = dma.done [#allocation3], 512
        $region48: #{tpu_custom_call.1} parent=43 // pred_fallthru
          _
        // Predicated region
        $region49: #{tpu_custom_call.1} parent=43 // pred_check
          %p258 = pneg %p83
        $region50: #{tpu_custom_call.1} parent=43 // pred_check_branch
          %260 = sbr.rel (%p258) target = $region52
        $region51: #{tpu_custom_call.1} parent=43 // pred_region
          %261 = dma.done [#allocation5], 102400
        $region52: #{tpu_custom_call.1} parent=43 // pred_fallthru
          _
        // Predicated region
        $region53: #{tpu_custom_call.1} parent=43 // pred_check
          %p262 = pneg %p125
        $region54: #{tpu_custom_call.1} parent=43 // pred_check_branch
          %264 = sbr.rel (%p262) target = $region56
        $region55: #{tpu_custom_call.1} parent=43 // pred_region
          %265 = dma.done [#allocation5], 512
        $region56: #{tpu_custom_call.1} parent=43 // pred_fallthru
          _
        // Predicated region
        $region57: #{tpu_custom_call.1} parent=43 // pred_check
          %p266 = pneg %p146
        $region58: #{tpu_custom_call.1} parent=43 // pred_check_branch
          %268 = sbr.rel (%p266) target = $region60
        $region59: #{tpu_custom_call.1} parent=43 // pred_region
          %269 = dma.done [#allocation8], 16
        $region60: #{tpu_custom_call.1} parent=43 // pred_fallthru
          _
        %p270 = scmp.lt.s32.totalorder %s20, 3
        %s271 = scalar_select %p270, %s20, 3
        %s272 = smul.addr %s271, 8
        %s273 = scalar_lea.vmem %s0, %s272
        %p274 = pneg %p41
        %p275 = pneg %p38
        %p276 = pneg %p62
        %p277 = pneg %p59
        %p278 = pneg %p83
        %p279 = pneg %p80
        %p280 = pneg %p104
        %p281 = pneg %p101
        %p282 = pneg %p125
        %p283 = pneg %p122
        %p284 = pneg %p146
        %p285 = pneg %p143
        %p286 = pneg %p172
        %p287 = pneg %p169
        %p288 = scmp.lt.s32.totalorder %s20, 3
        %s289 = scalar_select %p288, %s20, 3
        %s290 = smul.addr %s289, 8
        %s291 = scalar_lea.vmem %s6, %s290
        %p292 = scmp.lt.s32.totalorder %s20, 3
        %s293 = scalar_select %p292, %s20, 3
        %s294 = smul.addr %s293, 8
        %s295 = scalar_lea.vmem %s0, %s294
        %p296 = scmp.lt.s32.totalorder %s20, 3
        %s297 = scalar_select %p296, %s20, 3
        %s298 = smul.addr %s297, 8
        %s299 = scalar_lea.vmem %s6, %s298
        %v300 = vld [vmem:[%s295] sm:$0xff]
        %v301 = vld [vmem:[#allocation2] sm:$0xff]
        %v302 = vld [vmem:[#allocation2 + $0x8] sm:$0xff]
        %v303 = vld [vmem:[#allocation2 + $0x10] sm:$0xff]
        %v304 = vld [vmem:[#allocation2 + $0x18] sm:$0xff]
        %v305 = vld [vmem:[#allocation6] ss:$8 sm:$0xf]
        %v307 = vlaneseq
        %v308 = vshrl.u32 %v307, 7
        %v309 = vsub.s32 0, %v308
        %v310 = vrot.slane %v305, %v309
        %v311 = vlaneseq
        %v312 = vshrl.u32 %v311, 7
        %v313 = vsub.s32 1, %v312
        %v314 = vrot.slane %v305, %v313
        %v315 = vlaneseq
        %v316 = vshrl.u32 %v315, 7
        %v317 = vsub.s32 2, %v316
        %v318 = vrot.slane %v305, %v317
        %v319 = vlaneseq
        %v320 = vshrl.u32 %v319, 7
        %v321 = vsub.s32 3, %v320
        %v322 = vrot.slane %v305, %v321
        %vm327 = vcmask 64512
        %v329 = vsel %vm327, %v300, 0
        %331 = vmatprep.subr.mxu0 %v302
        %332 = vmatpush1.msra.mxu0 %v301
        %333 = vmatprep.subr.mxu0 0.0
        %334 = vmatpush1.msra.mxu0 0.0
        %335 = vmatprep.subr.mxu0 0.0
        %336 = vmatpush1.msra.mxu0 0.0
        %337 = vmatprep.subr.mxu0 0.0
        %338 = vmatpush1.msra.mxu0 0.0
        %339 = vmatprep.subr.mxu0 0.0
        %340 = vmatpush1.msra.mxu0 0.0
        %341 = vmatprep.subr.mxu0 0.0
        %342 = vmatpush1.msra.mxu0 0.0
        %343 = vmatprep.subr.mxu0 0.0
        %344 = vmatpush1.msra.mxu0 0.0
        %345 = vmatprep.subr.mxu0 0.0
        %346 = vmatpush1.msra.mxu0 0.0
        %347 = vmatprep.subr.mxu0 0.0
        %348 = vmatpush1.msra.mxu0 0.0
        %349 = vmatprep.subr.mxu0 0.0
        %350 = vmatpush1.msra.mxu0 0.0
        %351 = vmatprep.subr.mxu0 0.0
        %352 = vmatpush1.msra.mxu0 0.0
        %353 = vmatprep.subr.mxu0 0.0
        %354 = vmatpush1.msra.mxu0 0.0
        %355 = vmatprep.subr.mxu0 0.0
        %356 = vmatpush1.msra.mxu0 0.0
        %357 = vmatprep.subr.mxu0 0.0
        %358 = vmatpush1.msra.mxu0 0.0
        %359 = vmatprep.subr.mxu0 0.0
        %360 = vmatpush1.msra.mxu0 0.0
        %361 = vmatprep.subr.mxu0 0.0
        %362 = vmatpush1.msra.mxu0 0.0
        %363 = vmatprep.subr.mxu0 0.0
        %364 = vmatpush1.msra.mxu0 0.0
        %365 = vmatprep.subr.mxu0 0.0
        %366 = vmatpush1.msra.mxu0 0.0
        %367 = vmatprep.subr.mxu0 0.0
        %368 = vmatpush1.msra.mxu0 0.0
        %369 = vmatprep.subr.mxu0 0.0
        %370 = vmatpush1.msra.mxu0 0.0
        %371 = vmatprep.subr.mxu0 0.0
        %372 = vmatpush1.msra.mxu0 0.0
        %373 = vmatprep.subr.mxu0 0.0
        %374 = vmatpush1.msra.mxu0 0.0
        %375 = vmatprep.subr.mxu0 0.0
        %376 = vmatpush1.msra.mxu0 0.0
        %377 = vmatprep.subr.mxu0 0.0
        %378 = vmatpush1.msra.mxu0 0.0
        %379 = vmatprep.subr.mxu0 0.0
        %380 = vmatpush1.msra.mxu0 0.0
        %381 = vmatprep.subr.mxu0 0.0
        %382 = vmatpush1.msra.mxu0 0.0
        %383 = vmatprep.subr.mxu0 0.0
        %384 = vmatpush1.msra.mxu0 0.0
        %385 = vmatprep.subr.mxu0 0.0
        %386 = vmatpush1.msra.mxu0 0.0
        %387 = vmatprep.subr.mxu0 0.0
        %388 = vmatpush1.msra.mxu0 0.0
        %389 = vmatprep.subr.mxu0 0.0
        %390 = vmatpush1.msra.mxu0 0.0
        %391 = vmatprep.subr.mxu0 0.0
        %392 = vmatpush1.msra.mxu0 0.0
        %393 = vmatprep.subr.mxu0 0.0
        %394 = vmatpush1.msra.mxu0 0.0
        %395 = vmatprep.mubr.f32.mxu0 0.0
        %396 = vmatmul.mubr.f32.gmra.mrb[0].mxu0 %v329
        %v397 = vpop.f32.mrb[0].mxu0
        %v398 = vadd.f32 %v310, %v397
        %v399 = vpop.f32.mrb[0].mxu0
        %v400 = vadd.f32 %v314, %v399
        %401 = vdwg.mxu0
        %402 = vmatprep.subr.mxu0 %v304
        %403 = vmatpush1.msra.mxu0 %v303
        %404 = vmatprep.subr.mxu0 0.0
        %405 = vmatpush1.msra.mxu0 0.0
        %406 = vmatprep.subr.mxu0 0.0
        %407 = vmatpush1.msra.mxu0 0.0
        %408 = vmatprep.subr.mxu0 0.0
        %409 = vmatpush1.msra.mxu0 0.0
        %410 = vmatprep.subr.mxu0 0.0
        %411 = vmatpush1.msra.mxu0 0.0
        %412 = vmatprep.subr.mxu0 0.0
        %413 = vmatpush1.msra.mxu0 0.0
        %414 = vmatprep.subr.mxu0 0.0
        %415 = vmatpush1.msra.mxu0 0.0
        %416 = vmatprep.subr.mxu0 0.0
        %417 = vmatpush1.msra.mxu0 0.0
        %418 = vmatprep.subr.mxu0 0.0
        %419 = vmatpush1.msra.mxu0 0.0
        %420 = vmatprep.subr.mxu0 0.0
        %421 = vmatpush1.msra.mxu0 0.0
        %422 = vmatprep.subr.mxu0 0.0
        %423 = vmatpush1.msra.mxu0 0.0
        %424 = vmatprep.subr.mxu0 0.0
        %425 = vmatpush1.msra.mxu0 0.0
        %426 = vmatprep.subr.mxu0 0.0
        %427 = vmatpush1.msra.mxu0 0.0
        %428 = vmatprep.subr.mxu0 0.0
        %429 = vmatpush1.msra.mxu0 0.0
        %430 = vmatprep.subr.mxu0 0.0
        %431 = vmatpush1.msra.mxu0 0.0
        %432 = vmatprep.subr.mxu0 0.0
        %433 = vmatpush1.msra.mxu0 0.0
        %434 = vmatprep.subr.mxu0 0.0
        %435 = vmatpush1.msra.mxu0 0.0
        %436 = vmatprep.subr.mxu0 0.0
        %437 = vmatpush1.msra.mxu0 0.0
        %438 = vmatprep.subr.mxu0 0.0
        %439 = vmatpush1.msra.mxu0 0.0
        %440 = vmatprep.subr.mxu0 0.0
        %441 = vmatpush1.msra.mxu0 0.0
        %442 = vmatprep.subr.mxu0 0.0
        %443 = vmatpush1.msra.mxu0 0.0
        %444 = vmatprep.subr.mxu0 0.0
        %445 = vmatpush1.msra.mxu0 0.0
        %446 = vmatprep.subr.mxu0 0.0
        %447 = vmatpush1.msra.mxu0 0.0
        %448 = vmatprep.subr.mxu0 0.0
        %449 = vmatpush1.msra.mxu0 0.0
        %450 = vmatprep.subr.mxu0 0.0
        %451 = vmatpush1.msra.mxu0 0.0
        %452 = vmatprep.subr.mxu0 0.0
        %453 = vmatpush1.msra.mxu0 0.0
        %454 = vmatprep.subr.mxu0 0.0
        %455 = vmatpush1.msra.mxu0 0.0
        %456 = vmatprep.subr.mxu0 0.0
        %457 = vmatpush1.msra.mxu0 0.0
        %458 = vmatprep.subr.mxu0 0.0
        %459 = vmatpush1.msra.mxu0 0.0
        %460 = vmatprep.subr.mxu0 0.0
        %461 = vmatpush1.msra.mxu0 0.0
        %462 = vmatprep.subr.mxu0 0.0
        %463 = vmatpush1.msra.mxu0 0.0
        %464 = vmatprep.subr.mxu0 0.0
        %465 = vmatpush1.msra.mxu0 0.0
        %466 = vmatprep.mubr.f32.mxu0 0.0
        %467 = vmatmul.mubr.f32.gmra.mrb[0].mxu0 %v329
        %v468 = vpop.f32.mrb[0].mxu0
        %v469 = vadd.f32 %v318, %v468
        %v470 = vpop.f32.mrb[0].mxu0
        %v471 = vadd.f32 %v322, %v470
        %472 = vdwg.mxu0
        %v473 = vmax.f32 %v398, 0.0
        %v474 = vmax.f32 %v400, 0.0
        %v475 = vmax.f32 %v469, 0.0
        %v476 = vmax.f32 %v471, 0.0
        %v477 = vld [vmem:[#allocation4] sm:$0xff]
        %v478 = vld [vmem:[#allocation4 + $0x8] sm:$0xff]
        %v479 = vld [vmem:[#allocation4 + $0x10] sm:$0xff]
        %v480 = vld [vmem:[#allocation4 + $0x18] sm:$0xff]
        %v481 = vld [vmem:[#allocation4 + $0x20] sm:$0xff]
        %v482 = vld [vmem:[#allocation4 + $0x28] sm:$0xff]
        %v483 = vld [vmem:[#allocation4 + $0x30] sm:$0xff]
        %v484 = vld [vmem:[#allocation4 + $0x38] sm:$0xff]
        %v485 = vld [vmem:[#allocation4 + $0x40] sm:$0xff]
        %v486 = vld [vmem:[#allocation4 + $0x48] sm:$0xff]
        %v487 = vld [vmem:[#allocation4 + $0x50] sm:$0xff]
        %v488 = vld [vmem:[#allocation4 + $0x58] sm:$0xff]
        %v489 = vld [vmem:[#allocation4 + $0x60] sm:$0xff]
        %v490 = vld [vmem:[#allocation4 + $0x68] sm:$0xff]
        %v491 = vld [vmem:[#allocation4 + $0x70] sm:$0xff]
        %v492 = vld [vmem:[#allocation4 + $0x78] sm:$0xff]
        %v493 = vld [vmem:[#allocation4 + $0x80] sm:$0xff]
        %v494 = vld [vmem:[#allocation4 + $0x88] sm:$0xff]
        %v495 = vld [vmem:[#allocation4 + $0x90] sm:$0xff]
        %v496 = vld [vmem:[#allocation4 + $0x98] sm:$0xff]
        %v497 = vld [vmem:[#allocation4 + $0xa0] sm:$0xff]
        %v498 = vld [vmem:[#allocation4 + $0xa8] sm:$0xff]
        %v499 = vld [vmem:[#allocation4 + $0xb0] sm:$0xff]
        %v500 = vld [vmem:[#allocation4 + $0xb8] sm:$0xff]
        %v501 = vld [vmem:[#allocation4 + $0xc0] sm:$0xff]
        %v502 = vld [vmem:[#allocation4 + $0xc8] sm:$0xff]
        %v503 = vld [vmem:[#allocation4 + $0xd0] sm:$0xff]
        %v504 = vld [vmem:[#allocation4 + $0xd8] sm:$0xff]
        %v505 = vld [vmem:[#allocation4 + $0xe0] sm:$0xff]
        %v506 = vld [vmem:[#allocation4 + $0xe8] sm:$0xff]
        %v507 = vld [vmem:[#allocation4 + $0xf0] sm:$0xff]
        %v508 = vld [vmem:[#allocation4 + $0xf8] sm:$0xff]
        %v509 = vld [vmem:[#allocation4 + $0x100] sm:$0xff]
        %v510 = vld [vmem:[#allocation4 + $0x108] sm:$0xff]
        %v511 = vld [vmem:[#allocation4 + $0x110] sm:$0xff]
        %v512 = vld [vmem:[#allocation4 + $0x118] sm:$0xff]
        %v513 = vld [vmem:[#allocation4 + $0x120] sm:$0xff]
        %v514 = vld [vmem:[#allocation4 + $0x128] sm:$0xff]
        %v515 = vld [vmem:[#allocation4 + $0x130] sm:$0xff]
        %v516 = vld [vmem:[#allocation4 + $0x138] sm:$0xff]
        %v517 = vld [vmem:[#allocation4 + $0x140] sm:$0xff]
        %v518 = vld [vmem:[#allocation4 + $0x148] sm:$0xff]
        %v519 = vld [vmem:[#allocation4 + $0x150] sm:$0xff]
        %v520 = vld [vmem:[#allocation4 + $0x158] sm:$0xff]
        %v521 = vld [vmem:[#allocation4 + $0x160] sm:$0xff]
        %v522 = vld [vmem:[#allocation4 + $0x168] sm:$0xff]
        %v523 = vld [vmem:[#allocation4 + $0x170] sm:$0xff]
        %v524 = vld [vmem:[#allocation4 + $0x178] sm:$0xff]
        %v525 = vld [vmem:[#allocation4 + $0x180] sm:$0xff]
        %v526 = vld [vmem:[#allocation4 + $0x188] sm:$0xff]
        %v527 = vld [vmem:[#allocation4 + $0x190] sm:$0xff]
        %v528 = vld [vmem:[#allocation4 + $0x198] sm:$0xff]
        %v529 = vld [vmem:[#allocation4 + $0x1a0] sm:$0xff]
        %v530 = vld [vmem:[#allocation4 + $0x1a8] sm:$0xff]
        %v531 = vld [vmem:[#allocation4 + $0x1b0] sm:$0xff]
        %v532 = vld [vmem:[#allocation4 + $0x1b8] sm:$0xff]
        %v533 = vld [vmem:[#allocation4 + $0x1c0] sm:$0xff]
        %v534 = vld [vmem:[#allocation4 + $0x1c8] sm:$0xff]
        %v535 = vld [vmem:[#allocation4 + $0x1d0] sm:$0xff]
        %v536 = vld [vmem:[#allocation4 + $0x1d8] sm:$0xff]
        %v537 = vld [vmem:[#allocation4 + $0x1e0] sm:$0xff]
        %v538 = vld [vmem:[#allocation4 + $0x1e8] sm:$0xff]
        %v539 = vld [vmem:[#allocation4 + $0x1f0] sm:$0xff]
        %v540 = vld [vmem:[#allocation4 + $0x1f8] sm:$0xff]
        %v541 = vld [vmem:[#allocation4 + $0x200] sm:$0xff]
        %v542 = vld [vmem:[#allocation4 + $0x208] sm:$0xff]
        %v543 = vld [vmem:[#allocation4 + $0x210] sm:$0xff]
        %v544 = vld [vmem:[#allocation4 + $0x218] sm:$0xff]
        %v545 = vld [vmem:[#allocation4 + $0x220] sm:$0xff]
        %v546 = vld [vmem:[#allocation4 + $0x228] sm:$0xff]
        %v547 = vld [vmem:[#allocation4 + $0x230] sm:$0xff]
        %v548 = vld [vmem:[#allocation4 + $0x238] sm:$0xff]
        %v549 = vld [vmem:[#allocation4 + $0x240] sm:$0xff]
        %v550 = vld [vmem:[#allocation4 + $0x248] sm:$0xff]
        %v551 = vld [vmem:[#allocation4 + $0x250] sm:$0xff]
        %v552 = vld [vmem:[#allocation4 + $0x258] sm:$0xff]
        %v553 = vld [vmem:[#allocation4 + $0x260] sm:$0xff]
        %v554 = vld [vmem:[#allocation4 + $0x268] sm:$0xff]
        %v555 = vld [vmem:[#allocation4 + $0x270] sm:$0xff]
        %v556 = vld [vmem:[#allocation4 + $0x278] sm:$0xff]
        %v557 = vld [vmem:[#allocation4 + $0x280] sm:$0xff]
        %v558 = vld [vmem:[#allocation4 + $0x288] sm:$0xff]
        %v559 = vld [vmem:[#allocation4 + $0x290] sm:$0xff]
        %v560 = vld [vmem:[#allocation4 + $0x298] sm:$0xff]
        %v561 = vld [vmem:[#allocation4 + $0x2a0] sm:$0xff]
        %v562 = vld [vmem:[#allocation4 + $0x2a8] sm:$0xff]
        %v563 = vld [vmem:[#allocation4 + $0x2b0] sm:$0xff]
        %v564 = vld [vmem:[#allocation4 + $0x2b8] sm:$0xff]
        %v565 = vld [vmem:[#allocation4 + $0x2c0] sm:$0xff]
        %v566 = vld [vmem:[#allocation4 + $0x2c8] sm:$0xff]
        %v567 = vld [vmem:[#allocation4 + $0x2d0] sm:$0xff]
        %v568 = vld [vmem:[#allocation4 + $0x2d8] sm:$0xff]
        %v569 = vld [vmem:[#allocation4 + $0x2e0] sm:$0xff]
        %v570 = vld [vmem:[#allocation4 + $0x2e8] sm:$0xff]
        %v571 = vld [vmem:[#allocation4 + $0x2f0] sm:$0xff]
        %v572 = vld [vmem:[#allocation4 + $0x2f8] sm:$0xff]
        %v573 = vld [vmem:[#allocation4 + $0x300] sm:$0xff]
        %v574 = vld [vmem:[#allocation4 + $0x308] sm:$0xff]
        %v575 = vld [vmem:[#allocation4 + $0x310] sm:$0xff]
        %v576 = vld [vmem:[#allocation4 + $0x318] sm:$0xff]
        %v577 = vld [vmem:[#allocation4 + $0x320] sm:$0xff]
        %v578 = vld [vmem:[#allocation4 + $0x328] sm:$0xff]
        %v579 = vld [vmem:[#allocation4 + $0x330] sm:$0xff]
        %v580 = vld [vmem:[#allocation4 + $0x338] sm:$0xff]
        %v581 = vld [vmem:[#allocation4 + $0x340] sm:$0xff]
        %v582 = vld [vmem:[#allocation4 + $0x348] sm:$0xff]
        %v583 = vld [vmem:[#allocation4 + $0x350] sm:$0xff]
        %v584 = vld [vmem:[#allocation4 + $0x358] sm:$0xff]
        %v585 = vld [vmem:[#allocation4 + $0x360] sm:$0xff]
        %v586 = vld [vmem:[#allocation4 + $0x368] sm:$0xff]
        %v587 = vld [vmem:[#allocation4 + $0x370] sm:$0xff]
        %v588 = vld [vmem:[#allocation4 + $0x378] sm:$0xff]
        %v589 = vld [vmem:[#allocation4 + $0x380] sm:$0xff]
        %v590 = vld [vmem:[#allocation4 + $0x388] sm:$0xff]
        %v591 = vld [vmem:[#allocation4 + $0x390] sm:$0xff]
        %v592 = vld [vmem:[#allocation4 + $0x398] sm:$0xff]
        %v593 = vld [vmem:[#allocation4 + $0x3a0] sm:$0xff]
        %v594 = vld [vmem:[#allocation4 + $0x3a8] sm:$0xff]
        %v595 = vld [vmem:[#allocation4 + $0x3b0] sm:$0xff]
        %v596 = vld [vmem:[#allocation4 + $0x3b8] sm:$0xff]
        %v597 = vld [vmem:[#allocation4 + $0x3c0] sm:$0xff]
        %v598 = vld [vmem:[#allocation4 + $0x3c8] sm:$0xff]
        %v599 = vld [vmem:[#allocation4 + $0x3d0] sm:$0xff]
        %v600 = vld [vmem:[#allocation4 + $0x3d8] sm:$0xff]
        %v601 = vld [vmem:[#allocation4 + $0x3e0] sm:$0xff]
        %v602 = vld [vmem:[#allocation4 + $0x3e8] sm:$0xff]
        %v603 = vld [vmem:[#allocation4 + $0x3f0] sm:$0xff]
        %v604 = vld [vmem:[#allocation4 + $0x3f8] sm:$0xff]
        %v605 = vld [vmem:[#allocation4 + $0x400] sm:$0xff]
        %v606 = vld [vmem:[#allocation4 + $0x408] sm:$0xff]
        %v607 = vld [vmem:[#allocation4 + $0x410] sm:$0xff]
        %v608 = vld [vmem:[#allocation4 + $0x418] sm:$0xff]
        %v609 = vld [vmem:[#allocation4 + $0x420] sm:$0xff]
        %v610 = vld [vmem:[#allocation4 + $0x428] sm:$0xff]
        %v611 = vld [vmem:[#allocation4 + $0x430] sm:$0xff]
        %v612 = vld [vmem:[#allocation4 + $0x438] sm:$0xff]
        %v613 = vld [vmem:[#allocation4 + $0x440] sm:$0xff]
        %v614 = vld [vmem:[#allocation4 + $0x448] sm:$0xff]
        %v615 = vld [vmem:[#allocation4 + $0x450] sm:$0xff]
        %v616 = vld [vmem:[#allocation4 + $0x458] sm:$0xff]
        %v617 = vld [vmem:[#allocation4 + $0x460] sm:$0xff]
        %v618 = vld [vmem:[#allocation4 + $0x468] sm:$0xff]
        %v619 = vld [vmem:[#allocation4 + $0x470] sm:$0xff]
        %v620 = vld [vmem:[#allocation4 + $0x478] sm:$0xff]
        %v621 = vld [vmem:[#allocation4 + $0x480] sm:$0xff]
        %v622 = vld [vmem:[#allocation4 + $0x488] sm:$0xff]
        %v623 = vld [vmem:[#allocation4 + $0x490] sm:$0xff]
        %v624 = vld [vmem:[#allocation4 + $0x498] sm:$0xff]
        %v625 = vld [vmem:[#allocation4 + $0x4a0] sm:$0xff]
        %v626 = vld [vmem:[#allocation4 + $0x4a8] sm:$0xff]
        %v627 = vld [vmem:[#allocation4 + $0x4b0] sm:$0xff]
        %v628 = vld [vmem:[#allocation4 + $0x4b8] sm:$0xff]
        %v629 = vld [vmem:[#allocation4 + $0x4c0] sm:$0xff]
        %v630 = vld [vmem:[#allocation4 + $0x4c8] sm:$0xff]
        %v631 = vld [vmem:[#allocation4 + $0x4d0] sm:$0xff]
        %v632 = vld [vmem:[#allocation4 + $0x4d8] sm:$0xff]
        %v633 = vld [vmem:[#allocation4 + $0x4e0] sm:$0xff]
        %v634 = vld [vmem:[#allocation4 + $0x4e8] sm:$0xff]
        %v635 = vld [vmem:[#allocation4 + $0x4f0] sm:$0xff]
        %v636 = vld [vmem:[#allocation4 + $0x4f8] sm:$0xff]
        %v637 = vld [vmem:[#allocation4 + $0x500] sm:$0xff]
        %v638 = vld [vmem:[#allocation4 + $0x508] sm:$0xff]
        %v639 = vld [vmem:[#allocation4 + $0x510] sm:$0xff]
        %v640 = vld [vmem:[#allocation4 + $0x518] sm:$0xff]
        %v641 = vld [vmem:[#allocation4 + $0x520] sm:$0xff]
        %v642 = vld [vmem:[#allocation4 + $0x528] sm:$0xff]
        %v643 = vld [vmem:[#allocation4 + $0x530] sm:$0xff]
        %v644 = vld [vmem:[#allocation4 + $0x538] sm:$0xff]
        %v645 = vld [vmem:[#allocation4 + $0x540] sm:$0xff]
        %v646 = vld [vmem:[#allocation4 + $0x548] sm:$0xff]
        %v647 = vld [vmem:[#allocation4 + $0x550] sm:$0xff]
        %v648 = vld [vmem:[#allocation4 + $0x558] sm:$0xff]
        %v649 = vld [vmem:[#allocation4 + $0x560] sm:$0xff]
        %v650 = vld [vmem:[#allocation4 + $0x568] sm:$0xff]
        %v651 = vld [vmem:[#allocation4 + $0x570] sm:$0xff]
        %v652 = vld [vmem:[#allocation4 + $0x578] sm:$0xff]
        %v653 = vld [vmem:[#allocation4 + $0x580] sm:$0xff]
        %v654 = vld [vmem:[#allocation4 + $0x588] sm:$0xff]
        %v655 = vld [vmem:[#allocation4 + $0x590] sm:$0xff]
        %v656 = vld [vmem:[#allocation4 + $0x598] sm:$0xff]
        %v657 = vld [vmem:[#allocation4 + $0x5a0] sm:$0xff]
        %v658 = vld [vmem:[#allocation4 + $0x5a8] sm:$0xff]
        %v659 = vld [vmem:[#allocation4 + $0x5b0] sm:$0xff]
        %v660 = vld [vmem:[#allocation4 + $0x5b8] sm:$0xff]
        %v661 = vld [vmem:[#allocation4 + $0x5c0] sm:$0xff]
        %v662 = vld [vmem:[#allocation4 + $0x5c8] sm:$0xff]
        %v663 = vld [vmem:[#allocation4 + $0x5d0] sm:$0xff]
        %v664 = vld [vmem:[#allocation4 + $0x5d8] sm:$0xff]
        %v665 = vld [vmem:[#allocation4 + $0x5e0] sm:$0xff]
        %v666 = vld [vmem:[#allocation4 + $0x5e8] sm:$0xff]
        %v667 = vld [vmem:[#allocation4 + $0x5f0] sm:$0xff]
        %v668 = vld [vmem:[#allocation4 + $0x5f8] sm:$0xff]
        %v669 = vld [vmem:[#allocation4 + $0x600] sm:$0xff]
        %v670 = vld [vmem:[#allocation4 + $0x608] sm:$0xff]
        %v671 = vld [vmem:[#allocation4 + $0x610] sm:$0xff]
        %v672 = vld [vmem:[#allocation4 + $0x618] sm:$0xff]
        %v673 = vld [vmem:[#allocation4 + $0x620] sm:$0xff]
        %v674 = vld [vmem:[#allocation4 + $0x628] sm:$0xff]
        %v675 = vld [vmem:[#allocation4 + $0x630] sm:$0xff]
        %v676 = vld [vmem:[#allocation4 + $0x638] sm:$0xff]
        %s677 = scalar_lea.vmem [#allocation6], 1
        %v678 = vld [vmem:[%s677] ss:$8 sm:$0xf]
        %v680 = vlaneseq
        %v681 = vshrl.u32 %v680, 7
        %v682 = vsub.s32 0, %v681
        %v683 = vrot.slane %v678, %v682
        %v684 = vlaneseq
        %v685 = vshrl.u32 %v684, 7
        %v686 = vsub.s32 1, %v685
        %v687 = vrot.slane %v678, %v686
        %v688 = vlaneseq
        %v689 = vshrl.u32 %v688, 7
        %v690 = vsub.s32 2, %v689
        %v691 = vrot.slane %v678, %v690
        %v692 = vlaneseq
        %v693 = vshrl.u32 %v692, 7
        %v694 = vsub.s32 3, %v693
        %v695 = vrot.slane %v678, %v694
        %vm700 = vcmask 130048
        %v702 = vsel %vm700, %v476, 0
        %704 = vmatprep.subr.mxu0 %v478
        %705 = vmatpush1.msra.mxu0 %v477
        %706 = vmatprep.subr.mxu0 %v482
        %707 = vmatpush1.msra.mxu0 %v481
        %708 = vmatprep.subr.mxu0 %v486
        %709 = vmatpush1.msra.mxu0 %v485
        %710 = vmatprep.subr.mxu0 %v490
        %711 = vmatpush1.msra.mxu0 %v489
        %712 = vmatprep.subr.mxu0 %v494
        %713 = vmatpush1.msra.mxu0 %v493
        %714 = vmatprep.subr.mxu0 %v498
        %715 = vmatpush1.msra.mxu0 %v497
        %716 = vmatprep.subr.mxu0 %v502
        %717 = vmatpush1.msra.mxu0 %v501
        %718 = vmatprep.subr.mxu0 %v506
        %719 = vmatpush1.msra.mxu0 %v505
        %720 = vmatprep.subr.mxu0 %v510
        %721 = vmatpush1.msra.mxu0 %v509
        %722 = vmatprep.subr.mxu0 %v514
        %723 = vmatpush1.msra.mxu0 %v513
        %724 = vmatprep.subr.mxu0 %v518
        %725 = vmatpush1.msra.mxu0 %v517
        %726 = vmatprep.subr.mxu0 %v522
        %727 = vmatpush1.msra.mxu0 %v521
        %728 = vmatprep.subr.mxu0 %v526
        %729 = vmatpush1.msra.mxu0 %v525
        %730 = vmatprep.subr.mxu0 %v530
        %731 = vmatpush1.msra.mxu0 %v529
        %732 = vmatprep.subr.mxu0 %v534
        %733 = vmatpush1.msra.mxu0 %v533
        %734 = vmatprep.subr.mxu0 %v538
        %735 = vmatpush1.msra.mxu0 %v537
        %736 = vmatprep.subr.mxu0 %v542
        %737 = vmatpush1.msra.mxu0 %v541
        %738 = vmatprep.subr.mxu0 %v546
        %739 = vmatpush1.msra.mxu0 %v545
        %740 = vmatprep.subr.mxu0 %v550
        %741 = vmatpush1.msra.mxu0 %v549
        %742 = vmatprep.subr.mxu0 %v554
        %743 = vmatpush1.msra.mxu0 %v553
        %744 = vmatprep.subr.mxu0 %v558
        %745 = vmatpush1.msra.mxu0 %v557
        %746 = vmatprep.subr.mxu0 %v562
        %747 = vmatpush1.msra.mxu0 %v561
        %748 = vmatprep.subr.mxu0 %v566
        %749 = vmatpush1.msra.mxu0 %v565
        %750 = vmatprep.subr.mxu0 %v570
        %751 = vmatpush1.msra.mxu0 %v569
        %752 = vmatprep.subr.mxu0 %v574
        %753 = vmatpush1.msra.mxu0 %v573
        %754 = vmatprep.subr.mxu0 %v578
        %755 = vmatpush1.msra.mxu0 %v577
        %756 = vmatprep.subr.mxu0 %v582
        %757 = vmatpush1.msra.mxu0 %v581
        %758 = vmatprep.subr.mxu0 %v586
        %759 = vmatpush1.msra.mxu0 %v585
        %760 = vmatprep.subr.mxu0 %v590
        %761 = vmatpush1.msra.mxu0 %v589
        %762 = vmatprep.subr.mxu0 %v594
        %763 = vmatpush1.msra.mxu0 %v593
        %764 = vmatprep.subr.mxu0 %v598
        %765 = vmatpush1.msra.mxu0 %v597
        %766 = vmatprep.subr.mxu0 %v602
        %767 = vmatpush1.msra.mxu0 %v601
        %768 = vmatprep.mubr.f32.mxu0 %v474
        %769 = vmatmul.mubr.f32.gmra.mrb[0].mxu0 %v473
        %v770 = vpop.f32.mrb[0].mxu0
        %v771 = vadd.f32 %v683, %v770
        %v772 = vpop.f32.mrb[0].mxu0
        %v773 = vadd.f32 %v687, %v772
        %774 = vdwg.mxu0
        %775 = vmatprep.subr.mxu0 %v606
        %776 = vmatpush1.msra.mxu0 %v605
        %777 = vmatprep.subr.mxu0 %v610
        %778 = vmatpush1.msra.mxu0 %v609
        %779 = vmatprep.subr.mxu0 %v614
        %780 = vmatpush1.msra.mxu0 %v613
        %781 = vmatprep.subr.mxu0 %v618
        %782 = vmatpush1.msra.mxu0 %v617
        %783 = vmatprep.subr.mxu0 %v622
        %784 = vmatpush1.msra.mxu0 %v621
        %785 = vmatprep.subr.mxu0 %v626
        %786 = vmatpush1.msra.mxu0 %v625
        %787 = vmatprep.subr.mxu0 %v630
        %788 = vmatpush1.msra.mxu0 %v629
        %789 = vmatprep.subr.mxu0 %v634
        %790 = vmatpush1.msra.mxu0 %v633
        %791 = vmatprep.subr.mxu0 %v638
        %792 = vmatpush1.msra.mxu0 %v637
        %793 = vmatprep.subr.mxu0 %v642
        %794 = vmatpush1.msra.mxu0 %v641
        %795 = vmatprep.subr.mxu0 %v646
        %796 = vmatpush1.msra.mxu0 %v645
        %797 = vmatprep.subr.mxu0 %v650
        %798 = vmatpush1.msra.mxu0 %v649
        %799 = vmatprep.subr.mxu0 %v654
        %800 = vmatpush1.msra.mxu0 %v653
        %801 = vmatprep.subr.mxu0 %v658
        %802 = vmatpush1.msra.mxu0 %v657
        %803 = vmatprep.subr.mxu0 %v662
        %804 = vmatpush1.msra.mxu0 %v661
        %805 = vmatprep.subr.mxu0 %v666
        %806 = vmatpush1.msra.mxu0 %v665
        %807 = vmatprep.subr.mxu0 %v670
        %808 = vmatpush1.msra.mxu0 %v669
        %809 = vmatprep.subr.mxu0 %v674
        %810 = vmatpush1.msra.mxu0 %v673
        %811 = vmatprep.subr.mxu0 0.0
        %812 = vmatpush1.msra.mxu0 0.0
        %813 = vmatprep.subr.mxu0 0.0
        %814 = vmatpush1.msra.mxu0 0.0
        %815 = vmatprep.subr.mxu0 0.0
        %816 = vmatpush1.msra.mxu0 0.0
        %817 = vmatprep.subr.mxu0 0.0
        %818 = vmatpush1.msra.mxu0 0.0
        %819 = vmatprep.subr.mxu0 0.0
        %820 = vmatpush1.msra.mxu0 0.0
        %821 = vmatprep.subr.mxu0 0.0
        %822 = vmatpush1.msra.mxu0 0.0
        %823 = vmatprep.subr.mxu0 0.0
        %824 = vmatpush1.msra.mxu0 0.0
        %825 = vmatprep.subr.mxu0 0.0
        %826 = vmatpush1.msra.mxu0 0.0
        %827 = vmatprep.subr.mxu0 0.0
        %828 = vmatpush1.msra.mxu0 0.0
        %829 = vmatprep.subr.mxu0 0.0
        %830 = vmatpush1.msra.mxu0 0.0
        %831 = vmatprep.subr.mxu0 0.0
        %832 = vmatpush1.msra.mxu0 0.0
        %833 = vmatprep.subr.mxu0 0.0
        %834 = vmatpush1.msra.mxu0 0.0
        %835 = vmatprep.subr.mxu0 0.0
        %836 = vmatpush1.msra.mxu0 0.0
        %837 = vmatprep.subr.mxu0 0.0
        %838 = vmatpush1.msra.mxu0 0.0
        %839 = vmatprep.mubr.f32.mxu0 %v702
        %840 = vmatmul.mubr.f32.gmra.mrb[0].mxu0 %v475
        %v841 = vpop.f32.mrb[0].mxu0
        %v842 = vadd.f32 %v771, %v841
        %v843 = vpop.f32.mrb[0].mxu0
        %v844 = vadd.f32 %v773, %v843
        %845 = vdwg.mxu0
        %846 = vmatprep.subr.mxu0 %v480
        %847 = vmatpush1.msra.mxu0 %v479
        %848 = vmatprep.subr.mxu0 %v484
        %849 = vmatpush1.msra.mxu0 %v483
        %850 = vmatprep.subr.mxu0 %v488
        %851 = vmatpush1.msra.mxu0 %v487
        %852 = vmatprep.subr.mxu0 %v492
        %853 = vmatpush1.msra.mxu0 %v491
        %854 = vmatprep.subr.mxu0 %v496
        %855 = vmatpush1.msra.mxu0 %v495
        %856 = vmatprep.subr.mxu0 %v500
        %857 = vmatpush1.msra.mxu0 %v499
        %858 = vmatprep.subr.mxu0 %v504
        %859 = vmatpush1.msra.mxu0 %v503
        %860 = vmatprep.subr.mxu0 %v508
        %861 = vmatpush1.msra.mxu0 %v507
        %862 = vmatprep.subr.mxu0 %v512
        %863 = vmatpush1.msra.mxu0 %v511
        %864 = vmatprep.subr.mxu0 %v516
        %865 = vmatpush1.msra.mxu0 %v515
        %866 = vmatprep.subr.mxu0 %v520
        %867 = vmatpush1.msra.mxu0 %v519
        %868 = vmatprep.subr.mxu0 %v524
        %869 = vmatpush1.msra.mxu0 %v523
        %870 = vmatprep.subr.mxu0 %v528
        %871 = vmatpush1.msra.mxu0 %v527
        %872 = vmatprep.subr.mxu0 %v532
        %873 = vmatpush1.msra.mxu0 %v531
        %874 = vmatprep.subr.mxu0 %v536
        %875 = vmatpush1.msra.mxu0 %v535
        %876 = vmatprep.subr.mxu0 %v540
        %877 = vmatpush1.msra.mxu0 %v539
        %878 = vmatprep.subr.mxu0 %v544
        %879 = vmatpush1.msra.mxu0 %v543
        %880 = vmatprep.subr.mxu0 %v548
        %881 = vmatpush1.msra.mxu0 %v547
        %882 = vmatprep.subr.mxu0 %v552
        %883 = vmatpush1.msra.mxu0 %v551
        %884 = vmatprep.subr.mxu0 %v556
        %885 = vmatpush1.msra.mxu0 %v555
        %886 = vmatprep.subr.mxu0 %v560
        %887 = vmatpush1.msra.mxu0 %v559
        %888 = vmatprep.subr.mxu0 %v564
        %889 = vmatpush1.msra.mxu0 %v563
        %890 = vmatprep.subr.mxu0 %v568
        %891 = vmatpush1.msra.mxu0 %v567
        %892 = vmatprep.subr.mxu0 %v572
        %893 = vmatpush1.msra.mxu0 %v571
        %894 = vmatprep.subr.mxu0 %v576
        %895 = vmatpush1.msra.mxu0 %v575
        %896 = vmatprep.subr.mxu0 %v580
        %897 = vmatpush1.msra.mxu0 %v579
        %898 = vmatprep.subr.mxu0 %v584
        %899 = vmatpush1.msra.mxu0 %v583
        %900 = vmatprep.subr.mxu0 %v588
        %901 = vmatpush1.msra.mxu0 %v587
        %902 = vmatprep.subr.mxu0 %v592
        %903 = vmatpush1.msra.mxu0 %v591
        %904 = vmatprep.subr.mxu0 %v596
        %905 = vmatpush1.msra.mxu0 %v595
        %906 = vmatprep.subr.mxu0 %v600
        %907 = vmatpush1.msra.mxu0 %v599
        %908 = vmatprep.subr.mxu0 %v604
        %909 = vmatpush1.msra.mxu0 %v603
        %910 = vmatprep.mubr.f32.mxu0 %v474
        %911 = vmatmul.mubr.f32.gmra.mrb[0].mxu0 %v473
        %v912 = vpop.f32.mrb[0].mxu0
        %v913 = vadd.f32 %v691, %v912
        %v914 = vpop.f32.mrb[0].mxu0
        %v915 = vadd.f32 %v695, %v914
        %916 = vdwg.mxu0
        %917 = vmatprep.subr.mxu0 %v608
        %918 = vmatpush1.msra.mxu0 %v607
        %919 = vmatprep.subr.mxu0 %v612
        %920 = vmatpush1.msra.mxu0 %v611
        %921 = vmatprep.subr.mxu0 %v616
        %922 = vmatpush1.msra.mxu0 %v615
        %923 = vmatprep.subr.mxu0 %v620
        %924 = vmatpush1.msra.mxu0 %v619
        %925 = vmatprep.subr.mxu0 %v624
        %926 = vmatpush1.msra.mxu0 %v623
        %927 = vmatprep.subr.mxu0 %v628
        %928 = vmatpush1.msra.mxu0 %v627
        %929 = vmatprep.subr.mxu0 %v632
        %930 = vmatpush1.msra.mxu0 %v631
        %931 = vmatprep.subr.mxu0 %v636
        %932 = vmatpush1.msra.mxu0 %v635
        %933 = vmatprep.subr.mxu0 %v640
        %934 = vmatpush1.msra.mxu0 %v639
        %935 = vmatprep.subr.mxu0 %v644
        %936 = vmatpush1.msra.mxu0 %v643
        %937 = vmatprep.subr.mxu0 %v648
        %938 = vmatpush1.msra.mxu0 %v647
        %939 = vmatprep.subr.mxu0 %v652
        %940 = vmatpush1.msra.mxu0 %v651
        %941 = vmatprep.subr.mxu0 %v656
        %942 = vmatpush1.msra.mxu0 %v655
        %943 = vmatprep.subr.mxu0 %v660
        %944 = vmatpush1.msra.mxu0 %v659
        %945 = vmatprep.subr.mxu0 %v664
        %946 = vmatpush1.msra.mxu0 %v663
        %947 = vmatprep.subr.mxu0 %v668
        %948 = vmatpush1.msra.mxu0 %v667
        %949 = vmatprep.subr.mxu0 %v672
        %950 = vmatpush1.msra.mxu0 %v671
        %951 = vmatprep.subr.mxu0 %v676
        %952 = vmatpush1.msra.mxu0 %v675
        %953 = vmatprep.subr.mxu0 0.0
        %954 = vmatpush1.msra.mxu0 0.0
        %955 = vmatprep.subr.mxu0 0.0
        %956 = vmatpush1.msra.mxu0 0.0
        %957 = vmatprep.subr.mxu0 0.0
        %958 = vmatpush1.msra.mxu0 0.0
        %959 = vmatprep.subr.mxu0 0.0
        %960 = vmatpush1.msra.mxu0 0.0
        %961 = vmatprep.subr.mxu0 0.0
        %962 = vmatpush1.msra.mxu0 0.0
        %963 = vmatprep.subr.mxu0 0.0
        %964 = vmatpush1.msra.mxu0 0.0
        %965 = vmatprep.subr.mxu0 0.0
        %966 = vmatpush1.msra.mxu0 0.0
        %967 = vmatprep.subr.mxu0 0.0
        %968 = vmatpush1.msra.mxu0 0.0
        %969 = vmatprep.subr.mxu0 0.0
        %970 = vmatpush1.msra.mxu0 0.0
        %971 = vmatprep.subr.mxu0 0.0
        %972 = vmatpush1.msra.mxu0 0.0
        %973 = vmatprep.subr.mxu0 0.0
        %974 = vmatpush1.msra.mxu0 0.0
        %975 = vmatprep.subr.mxu0 0.0
        %976 = vmatpush1.msra.mxu0 0.0
        %977 = vmatprep.subr.mxu0 0.0
        %978 = vmatpush1.msra.mxu0 0.0
        %979 = vmatprep.subr.mxu0 0.0
        %980 = vmatpush1.msra.mxu0 0.0
        %981 = vmatprep.mubr.f32.mxu0 %v702
        %982 = vmatmul.mubr.f32.gmra.mrb[0].mxu0 %v475
        %v983 = vpop.f32.mrb[0].mxu0
        %v984 = vadd.f32 %v913, %v983
        %v985 = vpop.f32.mrb[0].mxu0
        %v986 = vadd.f32 %v915, %v985
        %987 = vdwg.mxu0
        %v988 = vmax.f32 %v842, 0.0
        %v989 = vmax.f32 %v844, 0.0
        %v990 = vmax.f32 %v984, 0.0
        %v991 = vmax.f32 %v986, 0.0
        %s992 = scalar_lea.vmem [#allocation4], 1600
        %v993 = vld [vmem:[%s992] sm:$0xff]
        %v994 = vld [vmem:[%s992 + $0x8] sm:$0xff]
        %v995 = vld [vmem:[%s992 + $0x10] sm:$0xff]
        %v996 = vld [vmem:[%s992 + $0x18] sm:$0xff]
        %v997 = vld [vmem:[%s992 + $0x20] sm:$0xff]
        %v998 = vld [vmem:[%s992 + $0x28] sm:$0xff]
        %v999 = vld [vmem:[%s992 + $0x30] sm:$0xff]
        %v1000 = vld [vmem:[%s992 + $0x38] sm:$0xff]
        %v1001 = vld [vmem:[%s992 + $0x40] sm:$0xff]
        %v1002 = vld [vmem:[%s992 + $0x48] sm:$0xff]
        %v1003 = vld [vmem:[%s992 + $0x50] sm:$0xff]
        %v1004 = vld [vmem:[%s992 + $0x58] sm:$0xff]
        %v1005 = vld [vmem:[%s992 + $0x60] sm:$0xff]
        %v1006 = vld [vmem:[%s992 + $0x68] sm:$0xff]
        %v1007 = vld [vmem:[%s992 + $0x70] sm:$0xff]
        %v1008 = vld [vmem:[%s992 + $0x78] sm:$0xff]
        %v1009 = vld [vmem:[%s992 + $0x80] sm:$0xff]
        %v1010 = vld [vmem:[%s992 + $0x88] sm:$0xff]
        %v1011 = vld [vmem:[%s992 + $0x90] sm:$0xff]
        %v1012 = vld [vmem:[%s992 + $0x98] sm:$0xff]
        %v1013 = vld [vmem:[%s992 + $0xa0] sm:$0xff]
        %v1014 = vld [vmem:[%s992 + $0xa8] sm:$0xff]
        %v1015 = vld [vmem:[%s992 + $0xb0] sm:$0xff]
        %v1016 = vld [vmem:[%s992 + $0xb8] sm:$0xff]
        %v1017 = vld [vmem:[%s992 + $0xc0] sm:$0xff]
        %v1018 = vld [vmem:[%s992 + $0xc8] sm:$0xff]
        %v1019 = vld [vmem:[%s992 + $0xd0] sm:$0xff]
        %v1020 = vld [vmem:[%s992 + $0xd8] sm:$0xff]
        %v1021 = vld [vmem:[%s992 + $0xe0] sm:$0xff]
        %v1022 = vld [vmem:[%s992 + $0xe8] sm:$0xff]
        %v1023 = vld [vmem:[%s992 + $0xf0] sm:$0xff]
        %v1024 = vld [vmem:[%s992 + $0xf8] sm:$0xff]
        %v1025 = vld [vmem:[%s992 + $0x100] sm:$0xff]
        %v1026 = vld [vmem:[%s992 + $0x108] sm:$0xff]
        %v1027 = vld [vmem:[%s992 + $0x110] sm:$0xff]
        %v1028 = vld [vmem:[%s992 + $0x118] sm:$0xff]
        %v1029 = vld [vmem:[%s992 + $0x120] sm:$0xff]
        %v1030 = vld [vmem:[%s992 + $0x128] sm:$0xff]
        %v1031 = vld [vmem:[%s992 + $0x130] sm:$0xff]
        %v1032 = vld [vmem:[%s992 + $0x138] sm:$0xff]
        %v1033 = vld [vmem:[%s992 + $0x140] sm:$0xff]
        %v1034 = vld [vmem:[%s992 + $0x148] sm:$0xff]
        %v1035 = vld [vmem:[%s992 + $0x150] sm:$0xff]
        %v1036 = vld [vmem:[%s992 + $0x158] sm:$0xff]
        %v1037 = vld [vmem:[%s992 + $0x160] sm:$0xff]
        %v1038 = vld [vmem:[%s992 + $0x168] sm:$0xff]
        %v1039 = vld [vmem:[%s992 + $0x170] sm:$0xff]
        %v1040 = vld [vmem:[%s992 + $0x178] sm:$0xff]
        %v1041 = vld [vmem:[%s992 + $0x180] sm:$0xff]
        %v1042 = vld [vmem:[%s992 + $0x188] sm:$0xff]
        %v1043 = vld [vmem:[%s992 + $0x190] sm:$0xff]
        %v1044 = vld [vmem:[%s992 + $0x198] sm:$0xff]
        %v1045 = vld [vmem:[%s992 + $0x1a0] sm:$0xff]
        %v1046 = vld [vmem:[%s992 + $0x1a8] sm:$0xff]
        %v1047 = vld [vmem:[%s992 + $0x1b0] sm:$0xff]
        %v1048 = vld [vmem:[%s992 + $0x1b8] sm:$0xff]
        %v1049 = vld [vmem:[%s992 + $0x1c0] sm:$0xff]
        %v1050 = vld [vmem:[%s992 + $0x1c8] sm:$0xff]
        %v1051 = vld [vmem:[%s992 + $0x1d0] sm:$0xff]
        %v1052 = vld [vmem:[%s992 + $0x1d8] sm:$0xff]
        %v1053 = vld [vmem:[%s992 + $0x1e0] sm:$0xff]
        %v1054 = vld [vmem:[%s992 + $0x1e8] sm:$0xff]
        %v1055 = vld [vmem:[%s992 + $0x1f0] sm:$0xff]
        %v1056 = vld [vmem:[%s992 + $0x1f8] sm:$0xff]
        %v1057 = vld [vmem:[%s992 + $0x200] sm:$0xff]
        %v1058 = vld [vmem:[%s992 + $0x208] sm:$0xff]
        %v1059 = vld [vmem:[%s992 + $0x210] sm:$0xff]
        %v1060 = vld [vmem:[%s992 + $0x218] sm:$0xff]
        %v1061 = vld [vmem:[%s992 + $0x220] sm:$0xff]
        %v1062 = vld [vmem:[%s992 + $0x228] sm:$0xff]
        %v1063 = vld [vmem:[%s992 + $0x230] sm:$0xff]
        %v1064 = vld [vmem:[%s992 + $0x238] sm:$0xff]
        %v1065 = vld [vmem:[%s992 + $0x240] sm:$0xff]
        %v1066 = vld [vmem:[%s992 + $0x248] sm:$0xff]
        %v1067 = vld [vmem:[%s992 + $0x250] sm:$0xff]
        %v1068 = vld [vmem:[%s992 + $0x258] sm:$0xff]
        %v1069 = vld [vmem:[%s992 + $0x260] sm:$0xff]
        %v1070 = vld [vmem:[%s992 + $0x268] sm:$0xff]
        %v1071 = vld [vmem:[%s992 + $0x270] sm:$0xff]
        %v1072 = vld [vmem:[%s992 + $0x278] sm:$0xff]
        %v1073 = vld [vmem:[%s992 + $0x280] sm:$0xff]
        %v1074 = vld [vmem:[%s992 + $0x288] sm:$0xff]
        %v1075 = vld [vmem:[%s992 + $0x290] sm:$0xff]
        %v1076 = vld [vmem:[%s992 + $0x298] sm:$0xff]
        %v1077 = vld [vmem:[%s992 + $0x2a0] sm:$0xff]
        %v1078 = vld [vmem:[%s992 + $0x2a8] sm:$0xff]
        %v1079 = vld [vmem:[%s992 + $0x2b0] sm:$0xff]
        %v1080 = vld [vmem:[%s992 + $0x2b8] sm:$0xff]
        %v1081 = vld [vmem:[%s992 + $0x2c0] sm:$0xff]
        %v1082 = vld [vmem:[%s992 + $0x2c8] sm:$0xff]
        %v1083 = vld [vmem:[%s992 + $0x2d0] sm:$0xff]
        %v1084 = vld [vmem:[%s992 + $0x2d8] sm:$0xff]
        %v1085 = vld [vmem:[%s992 + $0x2e0] sm:$0xff]
        %v1086 = vld [vmem:[%s992 + $0x2e8] sm:$0xff]
        %v1087 = vld [vmem:[%s992 + $0x2f0] sm:$0xff]
        %v1088 = vld [vmem:[%s992 + $0x2f8] sm:$0xff]
        %v1089 = vld [vmem:[%s992 + $0x300] sm:$0xff]
        %v1090 = vld [vmem:[%s992 + $0x308] sm:$0xff]
        %v1091 = vld [vmem:[%s992 + $0x310] sm:$0xff]
        %v1092 = vld [vmem:[%s992 + $0x318] sm:$0xff]
        %v1093 = vld [vmem:[%s992 + $0x320] sm:$0xff]
        %v1094 = vld [vmem:[%s992 + $0x328] sm:$0xff]
        %v1095 = vld [vmem:[%s992 + $0x330] sm:$0xff]
        %v1096 = vld [vmem:[%s992 + $0x338] sm:$0xff]
        %v1097 = vld [vmem:[%s992 + $0x340] sm:$0xff]
        %v1098 = vld [vmem:[%s992 + $0x348] sm:$0xff]
        %v1099 = vld [vmem:[%s992 + $0x350] sm:$0xff]
        %v1100 = vld [vmem:[%s992 + $0x358] sm:$0xff]
        %v1101 = vld [vmem:[%s992 + $0x360] sm:$0xff]
        %v1102 = vld [vmem:[%s992 + $0x368] sm:$0xff]
        %v1103 = vld [vmem:[%s992 + $0x370] sm:$0xff]
        %v1104 = vld [vmem:[%s992 + $0x378] sm:$0xff]
        %v1105 = vld [vmem:[%s992 + $0x380] sm:$0xff]
        %v1106 = vld [vmem:[%s992 + $0x388] sm:$0xff]
        %v1107 = vld [vmem:[%s992 + $0x390] sm:$0xff]
        %v1108 = vld [vmem:[%s992 + $0x398] sm:$0xff]
        %v1109 = vld [vmem:[%s992 + $0x3a0] sm:$0xff]
        %v1110 = vld [vmem:[%s992 + $0x3a8] sm:$0xff]
        %v1111 = vld [vmem:[%s992 + $0x3b0] sm:$0xff]
        %v1112 = vld [vmem:[%s992 + $0x3b8] sm:$0xff]
        %v1113 = vld [vmem:[%s992 + $0x3c0] sm:$0xff]
        %v1114 = vld [vmem:[%s992 + $0x3c8] sm:$0xff]
        %v1115 = vld [vmem:[%s992 + $0x3d0] sm:$0xff]
        %v1116 = vld [vmem:[%s992 + $0x3d8] sm:$0xff]
        %v1117 = vld [vmem:[%s992 + $0x3e0] sm:$0xff]
        %v1118 = vld [vmem:[%s992 + $0x3e8] sm:$0xff]
        %v1119 = vld [vmem:[%s992 + $0x3f0] sm:$0xff]
        %v1120 = vld [vmem:[%s992 + $0x3f8] sm:$0xff]
        %v1121 = vld [vmem:[%s992 + $0x400] sm:$0xff]
        %v1122 = vld [vmem:[%s992 + $0x408] sm:$0xff]
        %v1123 = vld [vmem:[%s992 + $0x410] sm:$0xff]
        %v1124 = vld [vmem:[%s992 + $0x418] sm:$0xff]
        %v1125 = vld [vmem:[%s992 + $0x420] sm:$0xff]
        %v1126 = vld [vmem:[%s992 + $0x428] sm:$0xff]
        %v1127 = vld [vmem:[%s992 + $0x430] sm:$0xff]
        %v1128 = vld [vmem:[%s992 + $0x438] sm:$0xff]
        %v1129 = vld [vmem:[%s992 + $0x440] sm:$0xff]
        %v1130 = vld [vmem:[%s992 + $0x448] sm:$0xff]
        %v1131 = vld [vmem:[%s992 + $0x450] sm:$0xff]
        %v1132 = vld [vmem:[%s992 + $0x458] sm:$0xff]
        %v1133 = vld [vmem:[%s992 + $0x460] sm:$0xff]
        %v1134 = vld [vmem:[%s992 + $0x468] sm:$0xff]
        %v1135 = vld [vmem:[%s992 + $0x470] sm:$0xff]
        %v1136 = vld [vmem:[%s992 + $0x478] sm:$0xff]
        %v1137 = vld [vmem:[%s992 + $0x480] sm:$0xff]
        %v1138 = vld [vmem:[%s992 + $0x488] sm:$0xff]
        %v1139 = vld [vmem:[%s992 + $0x490] sm:$0xff]
        %v1140 = vld [vmem:[%s992 + $0x498] sm:$0xff]
        %v1141 = vld [vmem:[%s992 + $0x4a0] sm:$0xff]
        %v1142 = vld [vmem:[%s992 + $0x4a8] sm:$0xff]
        %v1143 = vld [vmem:[%s992 + $0x4b0] sm:$0xff]
        %v1144 = vld [vmem:[%s992 + $0x4b8] sm:$0xff]
        %v1145 = vld [vmem:[%s992 + $0x4c0] sm:$0xff]
        %v1146 = vld [vmem:[%s992 + $0x4c8] sm:$0xff]
        %v1147 = vld [vmem:[%s992 + $0x4d0] sm:$0xff]
        %v1148 = vld [vmem:[%s992 + $0x4d8] sm:$0xff]
        %v1149 = vld [vmem:[%s992 + $0x4e0] sm:$0xff]
        %v1150 = vld [vmem:[%s992 + $0x4e8] sm:$0xff]
        %v1151 = vld [vmem:[%s992 + $0x4f0] sm:$0xff]
        %v1152 = vld [vmem:[%s992 + $0x4f8] sm:$0xff]
        %v1153 = vld [vmem:[%s992 + $0x500] sm:$0xff]
        %v1154 = vld [vmem:[%s992 + $0x508] sm:$0xff]
        %v1155 = vld [vmem:[%s992 + $0x510] sm:$0xff]
        %v1156 = vld [vmem:[%s992 + $0x518] sm:$0xff]
        %v1157 = vld [vmem:[%s992 + $0x520] sm:$0xff]
        %v1158 = vld [vmem:[%s992 + $0x528] sm:$0xff]
        %v1159 = vld [vmem:[%s992 + $0x530] sm:$0xff]
        %v1160 = vld [vmem:[%s992 + $0x538] sm:$0xff]
        %v1161 = vld [vmem:[%s992 + $0x540] sm:$0xff]
        %v1162 = vld [vmem:[%s992 + $0x548] sm:$0xff]
        %v1163 = vld [vmem:[%s992 + $0x550] sm:$0xff]
        %v1164 = vld [vmem:[%s992 + $0x558] sm:$0xff]
        %v1165 = vld [vmem:[%s992 + $0x560] sm:$0xff]
        %v1166 = vld [vmem:[%s992 + $0x568] sm:$0xff]
        %v1167 = vld [vmem:[%s992 + $0x570] sm:$0xff]
        %v1168 = vld [vmem:[%s992 + $0x578] sm:$0xff]
        %v1169 = vld [vmem:[%s992 + $0x580] sm:$0xff]
        %v1170 = vld [vmem:[%s992 + $0x588] sm:$0xff]
        %v1171 = vld [vmem:[%s992 + $0x590] sm:$0xff]
        %v1172 = vld [vmem:[%s992 + $0x598] sm:$0xff]
        %v1173 = vld [vmem:[%s992 + $0x5a0] sm:$0xff]
        %v1174 = vld [vmem:[%s992 + $0x5a8] sm:$0xff]
        %v1175 = vld [vmem:[%s992 + $0x5b0] sm:$0xff]
        %v1176 = vld [vmem:[%s992 + $0x5b8] sm:$0xff]
        %v1177 = vld [vmem:[%s992 + $0x5c0] sm:$0xff]
        %v1178 = vld [vmem:[%s992 + $0x5c8] sm:$0xff]
        %v1179 = vld [vmem:[%s992 + $0x5d0] sm:$0xff]
        %v1180 = vld [vmem:[%s992 + $0x5d8] sm:$0xff]
        %v1181 = vld [vmem:[%s992 + $0x5e0] sm:$0xff]
        %v1182 = vld [vmem:[%s992 + $0x5e8] sm:$0xff]
        %v1183 = vld [vmem:[%s992 + $0x5f0] sm:$0xff]
        %v1184 = vld [vmem:[%s992 + $0x5f8] sm:$0xff]
        %v1185 = vld [vmem:[%s992 + $0x600] sm:$0xff]
        %v1186 = vld [vmem:[%s992 + $0x608] sm:$0xff]
        %v1187 = vld [vmem:[%s992 + $0x610] sm:$0xff]
        %v1188 = vld [vmem:[%s992 + $0x618] sm:$0xff]
        %v1189 = vld [vmem:[%s992 + $0x620] sm:$0xff]
        %v1190 = vld [vmem:[%s992 + $0x628] sm:$0xff]
        %v1191 = vld [vmem:[%s992 + $0x630] sm:$0xff]
        %v1192 = vld [vmem:[%s992 + $0x638] sm:$0xff]
        %s1193 = scalar_lea.vmem [#allocation6], 2
        %v1194 = vld [vmem:[%s1193] ss:$8 sm:$0xf]
        %v1196 = vlaneseq
        %v1197 = vshrl.u32 %v1196, 7
        %v1198 = vsub.s32 0, %v1197
        %v1199 = vrot.slane %v1194, %v1198
        %v1200 = vlaneseq
        %v1201 = vshrl.u32 %v1200, 7
        %v1202 = vsub.s32 1, %v1201
        %v1203 = vrot.slane %v1194, %v1202
        %v1204 = vlaneseq
        %v1205 = vshrl.u32 %v1204, 7
        %v1206 = vsub.s32 2, %v1205
        %v1207 = vrot.slane %v1194, %v1206
        %v1208 = vlaneseq
        %v1209 = vshrl.u32 %v1208, 7
        %v1210 = vsub.s32 3, %v1209
        %v1211 = vrot.slane %v1194, %v1210
        %v1217 = vsel %vm700, %v991, 0
        %1219 = vmatprep.subr.mxu0 %v994
        %1220 = vmatpush1.msra.mxu0 %v993
        %1221 = vmatprep.subr.mxu0 %v998
        %1222 = vmatpush1.msra.mxu0 %v997
        %1223 = vmatprep.subr.mxu0 %v1002
        %1224 = vmatpush1.msra.mxu0 %v1001
        %1225 = vmatprep.subr.mxu0 %v1006
        %1226 = vmatpush1.msra.mxu0 %v1005
        %1227 = vmatprep.subr.mxu0 %v1010
        %1228 = vmatpush1.msra.mxu0 %v1009
        %1229 = vmatprep.subr.mxu0 %v1014
        %1230 = vmatpush1.msra.mxu0 %v1013
        %1231 = vmatprep.subr.mxu0 %v1018
        %1232 = vmatpush1.msra.mxu0 %v1017
        %1233 = vmatprep.subr.mxu0 %v1022
        %1234 = vmatpush1.msra.mxu0 %v1021
        %1235 = vmatprep.subr.mxu0 %v1026
        %1236 = vmatpush1.msra.mxu0 %v1025
        %1237 = vmatprep.subr.mxu0 %v1030
        %1238 = vmatpush1.msra.mxu0 %v1029
        %1239 = vmatprep.subr.mxu0 %v1034
        %1240 = vmatpush1.msra.mxu0 %v1033
        %1241 = vmatprep.subr.mxu0 %v1038
        %1242 = vmatpush1.msra.mxu0 %v1037
        %1243 = vmatprep.subr.mxu0 %v1042
        %1244 = vmatpush1.msra.mxu0 %v1041
        %1245 = vmatprep.subr.mxu0 %v1046
        %1246 = vmatpush1.msra.mxu0 %v1045
        %1247 = vmatprep.subr.mxu0 %v1050
        %1248 = vmatpush1.msra.mxu0 %v1049
        %1249 = vmatprep.subr.mxu0 %v1054
        %1250 = vmatpush1.msra.mxu0 %v1053
        %1251 = vmatprep.subr.mxu0 %v1058
        %1252 = vmatpush1.msra.mxu0 %v1057
        %1253 = vmatprep.subr.mxu0 %v1062
        %1254 = vmatpush1.msra.mxu0 %v1061
        %1255 = vmatprep.subr.mxu0 %v1066
        %1256 = vmatpush1.msra.mxu0 %v1065
        %1257 = vmatprep.subr.mxu0 %v1070
        %1258 = vmatpush1.msra.mxu0 %v1069
        %1259 = vmatprep.subr.mxu0 %v1074
        %1260 = vmatpush1.msra.mxu0 %v1073
        %1261 = vmatprep.subr.mxu0 %v1078
        %1262 = vmatpush1.msra.mxu0 %v1077
        %1263 = vmatprep.subr.mxu0 %v1082
        %1264 = vmatpush1.msra.mxu0 %v1081
        %1265 = vmatprep.subr.mxu0 %v1086
        %1266 = vmatpush1.msra.mxu0 %v1085
        %1267 = vmatprep.subr.mxu0 %v1090
        %1268 = vmatpush1.msra.mxu0 %v1089
        %1269 = vmatprep.subr.mxu0 %v1094
        %1270 = vmatpush1.msra.mxu0 %v1093
        %1271 = vmatprep.subr.mxu0 %v1098
        %1272 = vmatpush1.msra.mxu0 %v1097
        %1273 = vmatprep.subr.mxu0 %v1102
        %1274 = vmatpush1.msra.mxu0 %v1101
        %1275 = vmatprep.subr.mxu0 %v1106
        %1276 = vmatpush1.msra.mxu0 %v1105
        %1277 = vmatprep.subr.mxu0 %v1110
        %1278 = vmatpush1.msra.mxu0 %v1109
        %1279 = vmatprep.subr.mxu0 %v1114
        %1280 = vmatpush1.msra.mxu0 %v1113
        %1281 = vmatprep.subr.mxu0 %v1118
        %1282 = vmatpush1.msra.mxu0 %v1117
        %1283 = vmatprep.mubr.f32.mxu0 %v989
        %1284 = vmatmul.mubr.f32.gmra.mrb[0].mxu0 %v988
        %v1285 = vpop.f32.mrb[0].mxu0
        %v1286 = vadd.f32 %v1199, %v1285
        %v1287 = vpop.f32.mrb[0].mxu0
        %v1288 = vadd.f32 %v1203, %v1287
        %1289 = vdwg.mxu0
        %1290 = vmatprep.subr.mxu0 %v1122
        %1291 = vmatpush1.msra.mxu0 %v1121
        %1292 = vmatprep.subr.mxu0 %v1126
        %1293 = vmatpush1.msra.mxu0 %v1125
        %1294 = vmatprep.subr.mxu0 %v1130
        %1295 = vmatpush1.msra.mxu0 %v1129
        %1296 = vmatprep.subr.mxu0 %v1134
        %1297 = vmatpush1.msra.mxu0 %v1133
        %1298 = vmatprep.subr.mxu0 %v1138
        %1299 = vmatpush1.msra.mxu0 %v1137
        %1300 = vmatprep.subr.mxu0 %v1142
        %1301 = vmatpush1.msra.mxu0 %v1141
        %1302 = vmatprep.subr.mxu0 %v1146
        %1303 = vmatpush1.msra.mxu0 %v1145
        %1304 = vmatprep.subr.mxu0 %v1150
        %1305 = vmatpush1.msra.mxu0 %v1149
        %1306 = vmatprep.subr.mxu0 %v1154
        %1307 = vmatpush1.msra.mxu0 %v1153
        %1308 = vmatprep.subr.mxu0 %v1158
        %1309 = vmatpush1.msra.mxu0 %v1157
        %1310 = vmatprep.subr.mxu0 %v1162
        %1311 = vmatpush1.msra.mxu0 %v1161
        %1312 = vmatprep.subr.mxu0 %v1166
        %1313 = vmatpush1.msra.mxu0 %v1165
        %1314 = vmatprep.subr.mxu0 %v1170
        %1315 = vmatpush1.msra.mxu0 %v1169
        %1316 = vmatprep.subr.mxu0 %v1174
        %1317 = vmatpush1.msra.mxu0 %v1173
        %1318 = vmatprep.subr.mxu0 %v1178
        %1319 = vmatpush1.msra.mxu0 %v1177
        %1320 = vmatprep.subr.mxu0 %v1182
        %1321 = vmatpush1.msra.mxu0 %v1181
        %1322 = vmatprep.subr.mxu0 %v1186
        %1323 = vmatpush1.msra.mxu0 %v1185
        %1324 = vmatprep.subr.mxu0 %v1190
        %1325 = vmatpush1.msra.mxu0 %v1189
        %1326 = vmatprep.subr.mxu0 0.0
        %1327 = vmatpush1.msra.mxu0 0.0
        %1328 = vmatprep.subr.mxu0 0.0
        %1329 = vmatpush1.msra.mxu0 0.0
        %1330 = vmatprep.subr.mxu0 0.0
        %1331 = vmatpush1.msra.mxu0 0.0
        %1332 = vmatprep.subr.mxu0 0.0
        %1333 = vmatpush1.msra.mxu0 0.0
        %1334 = vmatprep.subr.mxu0 0.0
        %1335 = vmatpush1.msra.mxu0 0.0
        %1336 = vmatprep.subr.mxu0 0.0
        %1337 = vmatpush1.msra.mxu0 0.0
        %1338 = vmatprep.subr.mxu0 0.0
        %1339 = vmatpush1.msra.mxu0 0.0
        %1340 = vmatprep.subr.mxu0 0.0
        %1341 = vmatpush1.msra.mxu0 0.0
        %1342 = vmatprep.subr.mxu0 0.0
        %1343 = vmatpush1.msra.mxu0 0.0
        %1344 = vmatprep.subr.mxu0 0.0
        %1345 = vmatpush1.msra.mxu0 0.0
        %1346 = vmatprep.subr.mxu0 0.0
        %1347 = vmatpush1.msra.mxu0 0.0
        %1348 = vmatprep.subr.mxu0 0.0
        %1349 = vmatpush1.msra.mxu0 0.0
        %1350 = vmatprep.subr.mxu0 0.0
        %1351 = vmatpush1.msra.mxu0 0.0
        %1352 = vmatprep.subr.mxu0 0.0
        %1353 = vmatpush1.msra.mxu0 0.0
        %1354 = vmatprep.mubr.f32.mxu0 %v1217
        %1355 = vmatmul.mubr.f32.gmra.mrb[0].mxu0 %v990
        %v1356 = vpop.f32.mrb[0].mxu0
        %v1357 = vadd.f32 %v1286, %v1356
        %v1358 = vpop.f32.mrb[0].mxu0
        %v1359 = vadd.f32 %v1288, %v1358
        %1360 = vdwg.mxu0
        %1361 = vmatprep.subr.mxu0 %v996
        %1362 = vmatpush1.msra.mxu0 %v995
        %1363 = vmatprep.subr.mxu0 %v1000
        %1364 = vmatpush1.msra.mxu0 %v999
        %1365 = vmatprep.subr.mxu0 %v1004
        %1366 = vmatpush1.msra.mxu0 %v1003
        %1367 = vmatprep.subr.mxu0 %v1008
        %1368 = vmatpush1.msra.mxu0 %v1007
        %1369 = vmatprep.subr.mxu0 %v1012
        %1370 = vmatpush1.msra.mxu0 %v1011
        %1371 = vmatprep.subr.mxu0 %v1016
        %1372 = vmatpush1.msra.mxu0 %v1015
        %1373 = vmatprep.subr.mxu0 %v1020
        %1374 = vmatpush1.msra.mxu0 %v1019
        %1375 = vmatprep.subr.mxu0 %v1024
        %1376 = vmatpush1.msra.mxu0 %v1023
        %1377 = vmatprep.subr.mxu0 %v1028
        %1378 = vmatpush1.msra.mxu0 %v1027
        %1379 = vmatprep.subr.mxu0 %v1032
        %1380 = vmatpush1.msra.mxu0 %v1031
        %1381 = vmatprep.subr.mxu0 %v1036
        %1382 = vmatpush1.msra.mxu0 %v1035
        %1383 = vmatprep.subr.mxu0 %v1040
        %1384 = vmatpush1.msra.mxu0 %v1039
        %1385 = vmatprep.subr.mxu0 %v1044
        %1386 = vmatpush1.msra.mxu0 %v1043
        %1387 = vmatprep.subr.mxu0 %v1048
        %1388 = vmatpush1.msra.mxu0 %v1047
        %1389 = vmatprep.subr.mxu0 %v1052
        %1390 = vmatpush1.msra.mxu0 %v1051
        %1391 = vmatprep.subr.mxu0 %v1056
        %1392 = vmatpush1.msra.mxu0 %v1055
        %1393 = vmatprep.subr.mxu0 %v1060
        %1394 = vmatpush1.msra.mxu0 %v1059
        %1395 = vmatprep.subr.mxu0 %v1064
        %1396 = vmatpush1.msra.mxu0 %v1063
        %1397 = vmatprep.subr.mxu0 %v1068
        %1398 = vmatpush1.msra.mxu0 %v1067
        %1399 = vmatprep.subr.mxu0 %v1072
        %1400 = vmatpush1.msra.mxu0 %v1071
        %1401 = vmatprep.subr.mxu0 %v1076
        %1402 = vmatpush1.msra.mxu0 %v1075
        %1403 = vmatprep.subr.mxu0 %v1080
        %1404 = vmatpush1.msra.mxu0 %v1079
        %1405 = vmatprep.subr.mxu0 %v1084
        %1406 = vmatpush1.msra.mxu0 %v1083
        %1407 = vmatprep.subr.mxu0 %v1088
        %1408 = vmatpush1.msra.mxu0 %v1087
        %1409 = vmatprep.subr.mxu0 %v1092
        %1410 = vmatpush1.msra.mxu0 %v1091
        %1411 = vmatprep.subr.mxu0 %v1096
        %1412 = vmatpush1.msra.mxu0 %v1095
        %1413 = vmatprep.subr.mxu0 %v1100
        %1414 = vmatpush1.msra.mxu0 %v1099
        %1415 = vmatprep.subr.mxu0 %v1104
        %1416 = vmatpush1.msra.mxu0 %v1103
        %1417 = vmatprep.subr.mxu0 %v1108
        %1418 = vmatpush1.msra.mxu0 %v1107
        %1419 = vmatprep.subr.mxu0 %v1112
        %1420 = vmatpush1.msra.mxu0 %v1111
        %1421 = vmatprep.subr.mxu0 %v1116
        %1422 = vmatpush1.msra.mxu0 %v1115
        %1423 = vmatprep.subr.mxu0 %v1120
        %1424 = vmatpush1.msra.mxu0 %v1119
        %1425 = vmatprep.mubr.f32.mxu0 %v989
        %1426 = vmatmul.mubr.f32.gmra.mrb[0].mxu0 %v988
        %v1427 = vpop.f32.mrb[0].mxu0
        %v1428 = vadd.f32 %v1207, %v1427
        %v1429 = vpop.f32.mrb[0].mxu0
        %v1430 = vadd.f32 %v1211, %v1429
        %1431 = vdwg.mxu0
        %1432 = vmatprep.subr.mxu0 %v1124
        %1433 = vmatpush1.msra.mxu0 %v1123
        %1434 = vmatprep.subr.mxu0 %v1128
        %1435 = vmatpush1.msra.mxu0 %v1127
        %1436 = vmatprep.subr.mxu0 %v1132
        %1437 = vmatpush1.msra.mxu0 %v1131
        %1438 = vmatprep.subr.mxu0 %v1136
        %1439 = vmatpush1.msra.mxu0 %v1135
        %1440 = vmatprep.subr.mxu0 %v1140
        %1441 = vmatpush1.msra.mxu0 %v1139
        %1442 = vmatprep.subr.mxu0 %v1144
        %1443 = vmatpush1.msra.mxu0 %v1143
        %1444 = vmatprep.subr.mxu0 %v1148
        %1445 = vmatpush1.msra.mxu0 %v1147
        %1446 = vmatprep.subr.mxu0 %v1152
        %1447 = vmatpush1.msra.mxu0 %v1151
        %1448 = vmatprep.subr.mxu0 %v1156
        %1449 = vmatpush1.msra.mxu0 %v1155
        %1450 = vmatprep.subr.mxu0 %v1160
        %1451 = vmatpush1.msra.mxu0 %v1159
        %1452 = vmatprep.subr.mxu0 %v1164
        %1453 = vmatpush1.msra.mxu0 %v1163
        %1454 = vmatprep.subr.mxu0 %v1168
        %1455 = vmatpush1.msra.mxu0 %v1167
        %1456 = vmatprep.subr.mxu0 %v1172
        %1457 = vmatpush1.msra.mxu0 %v1171
        %1458 = vmatprep.subr.mxu0 %v1176
        %1459 = vmatpush1.msra.mxu0 %v1175
        %1460 = vmatprep.subr.mxu0 %v1180
        %1461 = vmatpush1.msra.mxu0 %v1179
        %1462 = vmatprep.subr.mxu0 %v1184
        %1463 = vmatpush1.msra.mxu0 %v1183
        %1464 = vmatprep.subr.mxu0 %v1188
        %1465 = vmatpush1.msra.mxu0 %v1187
        %1466 = vmatprep.subr.mxu0 %v1192
        %1467 = vmatpush1.msra.mxu0 %v1191
        %1468 = vmatprep.subr.mxu0 0.0
        %1469 = vmatpush1.msra.mxu0 0.0
        %1470 = vmatprep.subr.mxu0 0.0
        %1471 = vmatpush1.msra.mxu0 0.0
        %1472 = vmatprep.subr.mxu0 0.0
        %1473 = vmatpush1.msra.mxu0 0.0
        %1474 = vmatprep.subr.mxu0 0.0
        %1475 = vmatpush1.msra.mxu0 0.0
        %1476 = vmatprep.subr.mxu0 0.0
        %1477 = vmatpush1.msra.mxu0 0.0
        %1478 = vmatprep.subr.mxu0 0.0
        %1479 = vmatpush1.msra.mxu0 0.0
        %1480 = vmatprep.subr.mxu0 0.0
        %1481 = vmatpush1.msra.mxu0 0.0
        %1482 = vmatprep.subr.mxu0 0.0
        %1483 = vmatpush1.msra.mxu0 0.0
        %1484 = vmatprep.subr.mxu0 0.0
        %1485 = vmatpush1.msra.mxu0 0.0
        %1486 = vmatprep.subr.mxu0 0.0
        %1487 = vmatpush1.msra.mxu0 0.0
        %1488 = vmatprep.subr.mxu0 0.0
        %1489 = vmatpush1.msra.mxu0 0.0
        %1490 = vmatprep.subr.mxu0 0.0
        %1491 = vmatpush1.msra.mxu0 0.0
        %1492 = vmatprep.subr.mxu0 0.0
        %1493 = vmatpush1.msra.mxu0 0.0
        %1494 = vmatprep.subr.mxu0 0.0
        %1495 = vmatpush1.msra.mxu0 0.0
        %1496 = vmatprep.mubr.f32.mxu0 %v1217
        %1497 = vmatmul.mubr.f32.gmra.mrb[0].mxu0 %v990
        %v1498 = vpop.f32.mrb[0].mxu0
        %v1499 = vadd.f32 %v1428, %v1498
        %v1500 = vpop.f32.mrb[0].mxu0
        %v1501 = vadd.f32 %v1430, %v1500
        %1502 = vdwg.mxu0
        %v1503 = vmax.f32 %v1357, 0.0
        %v1504 = vmax.f32 %v1359, 0.0
        %v1505 = vmax.f32 %v1499, 0.0
        %v1506 = vmax.f32 %v1501, 0.0
        %s1507 = scalar_lea.vmem [#allocation4], 3200
        %v1508 = vld [vmem:[%s1507] sm:$0xff]
        %v1509 = vld [vmem:[%s1507 + $0x8] sm:$0xff]
        %v1510 = vld [vmem:[%s1507 + $0x10] sm:$0xff]
        %v1511 = vld [vmem:[%s1507 + $0x18] sm:$0xff]
        %v1512 = vld [vmem:[%s1507 + $0x20] sm:$0xff]
        %v1513 = vld [vmem:[%s1507 + $0x28] sm:$0xff]
        %v1514 = vld [vmem:[%s1507 + $0x30] sm:$0xff]
        %v1515 = vld [vmem:[%s1507 + $0x38] sm:$0xff]
        %v1516 = vld [vmem:[%s1507 + $0x40] sm:$0xff]
        %v1517 = vld [vmem:[%s1507 + $0x48] sm:$0xff]
        %v1518 = vld [vmem:[%s1507 + $0x50] sm:$0xff]
        %v1519 = vld [vmem:[%s1507 + $0x58] sm:$0xff]
        %v1520 = vld [vmem:[%s1507 + $0x60] sm:$0xff]
        %v1521 = vld [vmem:[%s1507 + $0x68] sm:$0xff]
        %v1522 = vld [vmem:[%s1507 + $0x70] sm:$0xff]
        %v1523 = vld [vmem:[%s1507 + $0x78] sm:$0xff]
        %v1524 = vld [vmem:[%s1507 + $0x80] sm:$0xff]
        %v1525 = vld [vmem:[%s1507 + $0x88] sm:$0xff]
        %v1526 = vld [vmem:[%s1507 + $0x90] sm:$0xff]
        %v1527 = vld [vmem:[%s1507 + $0x98] sm:$0xff]
        %v1528 = vld [vmem:[%s1507 + $0xa0] sm:$0xff]
        %v1529 = vld [vmem:[%s1507 + $0xa8] sm:$0xff]
        %v1530 = vld [vmem:[%s1507 + $0xb0] sm:$0xff]
        %v1531 = vld [vmem:[%s1507 + $0xb8] sm:$0xff]
        %v1532 = vld [vmem:[%s1507 + $0xc0] sm:$0xff]
        %v1533 = vld [vmem:[%s1507 + $0xc8] sm:$0xff]
        %v1534 = vld [vmem:[%s1507 + $0xd0] sm:$0xff]
        %v1535 = vld [vmem:[%s1507 + $0xd8] sm:$0xff]
        %v1536 = vld [vmem:[%s1507 + $0xe0] sm:$0xff]
        %v1537 = vld [vmem:[%s1507 + $0xe8] sm:$0xff]
        %v1538 = vld [vmem:[%s1507 + $0xf0] sm:$0xff]
        %v1539 = vld [vmem:[%s1507 + $0xf8] sm:$0xff]
        %v1540 = vld [vmem:[%s1507 + $0x100] sm:$0xff]
        %v1541 = vld [vmem:[%s1507 + $0x108] sm:$0xff]
        %v1542 = vld [vmem:[%s1507 + $0x110] sm:$0xff]
        %v1543 = vld [vmem:[%s1507 + $0x118] sm:$0xff]
        %v1544 = vld [vmem:[%s1507 + $0x120] sm:$0xff]
        %v1545 = vld [vmem:[%s1507 + $0x128] sm:$0xff]
        %v1546 = vld [vmem:[%s1507 + $0x130] sm:$0xff]
        %v1547 = vld [vmem:[%s1507 + $0x138] sm:$0xff]
        %v1548 = vld [vmem:[%s1507 + $0x140] sm:$0xff]
        %v1549 = vld [vmem:[%s1507 + $0x148] sm:$0xff]
        %v1550 = vld [vmem:[%s1507 + $0x150] sm:$0xff]
        %v1551 = vld [vmem:[%s1507 + $0x158] sm:$0xff]
        %v1552 = vld [vmem:[%s1507 + $0x160] sm:$0xff]
        %v1553 = vld [vmem:[%s1507 + $0x168] sm:$0xff]
        %v1554 = vld [vmem:[%s1507 + $0x170] sm:$0xff]
        %v1555 = vld [vmem:[%s1507 + $0x178] sm:$0xff]
        %v1556 = vld [vmem:[%s1507 + $0x180] sm:$0xff]
        %v1557 = vld [vmem:[%s1507 + $0x188] sm:$0xff]
        %v1558 = vld [vmem:[%s1507 + $0x190] sm:$0xff]
        %v1559 = vld [vmem:[%s1507 + $0x198] sm:$0xff]
        %v1560 = vld [vmem:[%s1507 + $0x1a0] sm:$0xff]
        %v1561 = vld [vmem:[%s1507 + $0x1a8] sm:$0xff]
        %v1562 = vld [vmem:[%s1507 + $0x1b0] sm:$0xff]
        %v1563 = vld [vmem:[%s1507 + $0x1b8] sm:$0xff]
        %v1564 = vld [vmem:[%s1507 + $0x1c0] sm:$0xff]
        %v1565 = vld [vmem:[%s1507 + $0x1c8] sm:$0xff]
        %v1566 = vld [vmem:[%s1507 + $0x1d0] sm:$0xff]
        %v1567 = vld [vmem:[%s1507 + $0x1d8] sm:$0xff]
        %v1568 = vld [vmem:[%s1507 + $0x1e0] sm:$0xff]
        %v1569 = vld [vmem:[%s1507 + $0x1e8] sm:$0xff]
        %v1570 = vld [vmem:[%s1507 + $0x1f0] sm:$0xff]
        %v1571 = vld [vmem:[%s1507 + $0x1f8] sm:$0xff]
        %v1572 = vld [vmem:[%s1507 + $0x200] sm:$0xff]
        %v1573 = vld [vmem:[%s1507 + $0x208] sm:$0xff]
        %v1574 = vld [vmem:[%s1507 + $0x210] sm:$0xff]
        %v1575 = vld [vmem:[%s1507 + $0x218] sm:$0xff]
        %v1576 = vld [vmem:[%s1507 + $0x220] sm:$0xff]
        %v1577 = vld [vmem:[%s1507 + $0x228] sm:$0xff]
        %v1578 = vld [vmem:[%s1507 + $0x230] sm:$0xff]
        %v1579 = vld [vmem:[%s1507 + $0x238] sm:$0xff]
        %v1580 = vld [vmem:[%s1507 + $0x240] sm:$0xff]
        %v1581 = vld [vmem:[%s1507 + $0x248] sm:$0xff]
        %v1582 = vld [vmem:[%s1507 + $0x250] sm:$0xff]
        %v1583 = vld [vmem:[%s1507 + $0x258] sm:$0xff]
        %v1584 = vld [vmem:[%s1507 + $0x260] sm:$0xff]
        %v1585 = vld [vmem:[%s1507 + $0x268] sm:$0xff]
        %v1586 = vld [vmem:[%s1507 + $0x270] sm:$0xff]
        %v1587 = vld [vmem:[%s1507 + $0x278] sm:$0xff]
        %v1588 = vld [vmem:[%s1507 + $0x280] sm:$0xff]
        %v1589 = vld [vmem:[%s1507 + $0x288] sm:$0xff]
        %v1590 = vld [vmem:[%s1507 + $0x290] sm:$0xff]
        %v1591 = vld [vmem:[%s1507 + $0x298] sm:$0xff]
        %v1592 = vld [vmem:[%s1507 + $0x2a0] sm:$0xff]
        %v1593 = vld [vmem:[%s1507 + $0x2a8] sm:$0xff]
        %v1594 = vld [vmem:[%s1507 + $0x2b0] sm:$0xff]
        %v1595 = vld [vmem:[%s1507 + $0x2b8] sm:$0xff]
        %v1596 = vld [vmem:[%s1507 + $0x2c0] sm:$0xff]
        %v1597 = vld [vmem:[%s1507 + $0x2c8] sm:$0xff]
        %v1598 = vld [vmem:[%s1507 + $0x2d0] sm:$0xff]
        %v1599 = vld [vmem:[%s1507 + $0x2d8] sm:$0xff]
        %v1600 = vld [vmem:[%s1507 + $0x2e0] sm:$0xff]
        %v1601 = vld [vmem:[%s1507 + $0x2e8] sm:$0xff]
        %v1602 = vld [vmem:[%s1507 + $0x2f0] sm:$0xff]
        %v1603 = vld [vmem:[%s1507 + $0x2f8] sm:$0xff]
        %v1604 = vld [vmem:[%s1507 + $0x300] sm:$0xff]
        %v1605 = vld [vmem:[%s1507 + $0x308] sm:$0xff]
        %v1606 = vld [vmem:[%s1507 + $0x310] sm:$0xff]
        %v1607 = vld [vmem:[%s1507 + $0x318] sm:$0xff]
        %v1608 = vld [vmem:[%s1507 + $0x320] sm:$0xff]
        %v1609 = vld [vmem:[%s1507 + $0x328] sm:$0xff]
        %v1610 = vld [vmem:[%s1507 + $0x330] sm:$0xff]
        %v1611 = vld [vmem:[%s1507 + $0x338] sm:$0xff]
        %v1612 = vld [vmem:[%s1507 + $0x340] sm:$0xff]
        %v1613 = vld [vmem:[%s1507 + $0x348] sm:$0xff]
        %v1614 = vld [vmem:[%s1507 + $0x350] sm:$0xff]
        %v1615 = vld [vmem:[%s1507 + $0x358] sm:$0xff]
        %v1616 = vld [vmem:[%s1507 + $0x360] sm:$0xff]
        %v1617 = vld [vmem:[%s1507 + $0x368] sm:$0xff]
        %v1618 = vld [vmem:[%s1507 + $0x370] sm:$0xff]
        %v1619 = vld [vmem:[%s1507 + $0x378] sm:$0xff]
        %v1620 = vld [vmem:[%s1507 + $0x380] sm:$0xff]
        %v1621 = vld [vmem:[%s1507 + $0x388] sm:$0xff]
        %v1622 = vld [vmem:[%s1507 + $0x390] sm:$0xff]
        %v1623 = vld [vmem:[%s1507 + $0x398] sm:$0xff]
        %v1624 = vld [vmem:[%s1507 + $0x3a0] sm:$0xff]
        %v1625 = vld [vmem:[%s1507 + $0x3a8] sm:$0xff]
        %v1626 = vld [vmem:[%s1507 + $0x3b0] sm:$0xff]
        %v1627 = vld [vmem:[%s1507 + $0x3b8] sm:$0xff]
        %v1628 = vld [vmem:[%s1507 + $0x3c0] sm:$0xff]
        %v1629 = vld [vmem:[%s1507 + $0x3c8] sm:$0xff]
        %v1630 = vld [vmem:[%s1507 + $0x3d0] sm:$0xff]
        %v1631 = vld [vmem:[%s1507 + $0x3d8] sm:$0xff]
        %v1632 = vld [vmem:[%s1507 + $0x3e0] sm:$0xff]
        %v1633 = vld [vmem:[%s1507 + $0x3e8] sm:$0xff]
        %v1634 = vld [vmem:[%s1507 + $0x3f0] sm:$0xff]
        %v1635 = vld [vmem:[%s1507 + $0x3f8] sm:$0xff]
        %v1636 = vld [vmem:[%s1507 + $0x400] sm:$0xff]
        %v1637 = vld [vmem:[%s1507 + $0x408] sm:$0xff]
        %v1638 = vld [vmem:[%s1507 + $0x410] sm:$0xff]
        %v1639 = vld [vmem:[%s1507 + $0x418] sm:$0xff]
        %v1640 = vld [vmem:[%s1507 + $0x420] sm:$0xff]
        %v1641 = vld [vmem:[%s1507 + $0x428] sm:$0xff]
        %v1642 = vld [vmem:[%s1507 + $0x430] sm:$0xff]
        %v1643 = vld [vmem:[%s1507 + $0x438] sm:$0xff]
        %v1644 = vld [vmem:[%s1507 + $0x440] sm:$0xff]
        %v1645 = vld [vmem:[%s1507 + $0x448] sm:$0xff]
        %v1646 = vld [vmem:[%s1507 + $0x450] sm:$0xff]
        %v1647 = vld [vmem:[%s1507 + $0x458] sm:$0xff]
        %v1648 = vld [vmem:[%s1507 + $0x460] sm:$0xff]
        %v1649 = vld [vmem:[%s1507 + $0x468] sm:$0xff]
        %v1650 = vld [vmem:[%s1507 + $0x470] sm:$0xff]
        %v1651 = vld [vmem:[%s1507 + $0x478] sm:$0xff]
        %v1652 = vld [vmem:[%s1507 + $0x480] sm:$0xff]
        %v1653 = vld [vmem:[%s1507 + $0x488] sm:$0xff]
        %v1654 = vld [vmem:[%s1507 + $0x490] sm:$0xff]
        %v1655 = vld [vmem:[%s1507 + $0x498] sm:$0xff]
        %v1656 = vld [vmem:[%s1507 + $0x4a0] sm:$0xff]
        %v1657 = vld [vmem:[%s1507 + $0x4a8] sm:$0xff]
        %v1658 = vld [vmem:[%s1507 + $0x4b0] sm:$0xff]
        %v1659 = vld [vmem:[%s1507 + $0x4b8] sm:$0xff]
        %v1660 = vld [vmem:[%s1507 + $0x4c0] sm:$0xff]
        %v1661 = vld [vmem:[%s1507 + $0x4c8] sm:$0xff]
        %v1662 = vld [vmem:[%s1507 + $0x4d0] sm:$0xff]
        %v1663 = vld [vmem:[%s1507 + $0x4d8] sm:$0xff]
        %v1664 = vld [vmem:[%s1507 + $0x4e0] sm:$0xff]
        %v1665 = vld [vmem:[%s1507 + $0x4e8] sm:$0xff]
        %v1666 = vld [vmem:[%s1507 + $0x4f0] sm:$0xff]
        %v1667 = vld [vmem:[%s1507 + $0x4f8] sm:$0xff]
        %v1668 = vld [vmem:[%s1507 + $0x500] sm:$0xff]
        %v1669 = vld [vmem:[%s1507 + $0x508] sm:$0xff]
        %v1670 = vld [vmem:[%s1507 + $0x510] sm:$0xff]
        %v1671 = vld [vmem:[%s1507 + $0x518] sm:$0xff]
        %v1672 = vld [vmem:[%s1507 + $0x520] sm:$0xff]
        %v1673 = vld [vmem:[%s1507 + $0x528] sm:$0xff]
        %v1674 = vld [vmem:[%s1507 + $0x530] sm:$0xff]
        %v1675 = vld [vmem:[%s1507 + $0x538] sm:$0xff]
        %v1676 = vld [vmem:[%s1507 + $0x540] sm:$0xff]
        %v1677 = vld [vmem:[%s1507 + $0x548] sm:$0xff]
        %v1678 = vld [vmem:[%s1507 + $0x550] sm:$0xff]
        %v1679 = vld [vmem:[%s1507 + $0x558] sm:$0xff]
        %v1680 = vld [vmem:[%s1507 + $0x560] sm:$0xff]
        %v1681 = vld [vmem:[%s1507 + $0x568] sm:$0xff]
        %v1682 = vld [vmem:[%s1507 + $0x570] sm:$0xff]
        %v1683 = vld [vmem:[%s1507 + $0x578] sm:$0xff]
        %v1684 = vld [vmem:[%s1507 + $0x580] sm:$0xff]
        %v1685 = vld [vmem:[%s1507 + $0x588] sm:$0xff]
        %v1686 = vld [vmem:[%s1507 + $0x590] sm:$0xff]
        %v1687 = vld [vmem:[%s1507 + $0x598] sm:$0xff]
        %v1688 = vld [vmem:[%s1507 + $0x5a0] sm:$0xff]
        %v1689 = vld [vmem:[%s1507 + $0x5a8] sm:$0xff]
        %v1690 = vld [vmem:[%s1507 + $0x5b0] sm:$0xff]
        %v1691 = vld [vmem:[%s1507 + $0x5b8] sm:$0xff]
        %v1692 = vld [vmem:[%s1507 + $0x5c0] sm:$0xff]
        %v1693 = vld [vmem:[%s1507 + $0x5c8] sm:$0xff]
        %v1694 = vld [vmem:[%s1507 + $0x5d0] sm:$0xff]
        %v1695 = vld [vmem:[%s1507 + $0x5d8] sm:$0xff]
        %v1696 = vld [vmem:[%s1507 + $0x5e0] sm:$0xff]
        %v1697 = vld [vmem:[%s1507 + $0x5e8] sm:$0xff]
        %v1698 = vld [vmem:[%s1507 + $0x5f0] sm:$0xff]
        %v1699 = vld [vmem:[%s1507 + $0x5f8] sm:$0xff]
        %v1700 = vld [vmem:[%s1507 + $0x600] sm:$0xff]
        %v1701 = vld [vmem:[%s1507 + $0x608] sm:$0xff]
        %v1702 = vld [vmem:[%s1507 + $0x610] sm:$0xff]
        %v1703 = vld [vmem:[%s1507 + $0x618] sm:$0xff]
        %v1704 = vld [vmem:[%s1507 + $0x620] sm:$0xff]
        %v1705 = vld [vmem:[%s1507 + $0x628] sm:$0xff]
        %v1706 = vld [vmem:[%s1507 + $0x630] sm:$0xff]
        %v1707 = vld [vmem:[%s1507 + $0x638] sm:$0xff]
        %s1708 = scalar_lea.vmem [#allocation6], 3
        %v1709 = vld [vmem:[%s1708] ss:$8 sm:$0xf]
        %v1711 = vlaneseq
        %v1712 = vshrl.u32 %v1711, 7
        %v1713 = vsub.s32 0, %v1712
        %v1714 = vrot.slane %v1709, %v1713
        %v1715 = vlaneseq
        %v1716 = vshrl.u32 %v1715, 7
        %v1717 = vsub.s32 1, %v1716
        %v1718 = vrot.slane %v1709, %v1717
        %v1719 = vlaneseq
        %v1720 = vshrl.u32 %v1719, 7
        %v1721 = vsub.s32 2, %v1720
        %v1722 = vrot.slane %v1709, %v1721
        %v1723 = vlaneseq
        %v1724 = vshrl.u32 %v1723, 7
        %v1725 = vsub.s32 3, %v1724
        %v1726 = vrot.slane %v1709, %v1725
        %v1732 = vsel %vm700, %v1506, 0
        %1734 = vmatprep.subr.mxu0 %v1509
        %1735 = vmatpush1.msra.mxu0 %v1508
        %1736 = vmatprep.subr.mxu0 %v1513
        %1737 = vmatpush1.msra.mxu0 %v1512
        %1738 = vmatprep.subr.mxu0 %v1517
        %1739 = vmatpush1.msra.mxu0 %v1516
        %1740 = vmatprep.subr.mxu0 %v1521
        %1741 = vmatpush1.msra.mxu0 %v1520
        %1742 = vmatprep.subr.mxu0 %v1525
        %1743 = vmatpush1.msra.mxu0 %v1524
        %1744 = vmatprep.subr.mxu0 %v1529
        %1745 = vmatpush1.msra.mxu0 %v1528
        %1746 = vmatprep.subr.mxu0 %v1533
        %1747 = vmatpush1.msra.mxu0 %v1532
        %1748 = vmatprep.subr.mxu0 %v1537
        %1749 = vmatpush1.msra.mxu0 %v1536
        %1750 = vmatprep.subr.mxu0 %v1541
        %1751 = vmatpush1.msra.mxu0 %v1540
        %1752 = vmatprep.subr.mxu0 %v1545
        %1753 = vmatpush1.msra.mxu0 %v1544
        %1754 = vmatprep.subr.mxu0 %v1549
        %1755 = vmatpush1.msra.mxu0 %v1548
        %1756 = vmatprep.subr.mxu0 %v1553
        %1757 = vmatpush1.msra.mxu0 %v1552
        %1758 = vmatprep.subr.mxu0 %v1557
        %1759 = vmatpush1.msra.mxu0 %v1556
        %1760 = vmatprep.subr.mxu0 %v1561
        %1761 = vmatpush1.msra.mxu0 %v1560
        %1762 = vmatprep.subr.mxu0 %v1565
        %1763 = vmatpush1.msra.mxu0 %v1564
        %1764 = vmatprep.subr.mxu0 %v1569
        %1765 = vmatpush1.msra.mxu0 %v1568
        %1766 = vmatprep.subr.mxu0 %v1573
        %1767 = vmatpush1.msra.mxu0 %v1572
        %1768 = vmatprep.subr.mxu0 %v1577
        %1769 = vmatpush1.msra.mxu0 %v1576
        %1770 = vmatprep.subr.mxu0 %v1581
        %1771 = vmatpush1.msra.mxu0 %v1580
        %1772 = vmatprep.subr.mxu0 %v1585
        %1773 = vmatpush1.msra.mxu0 %v1584
        %1774 = vmatprep.subr.mxu0 %v1589
        %1775 = vmatpush1.msra.mxu0 %v1588
        %1776 = vmatprep.subr.mxu0 %v1593
        %1777 = vmatpush1.msra.mxu0 %v1592
        %1778 = vmatprep.subr.mxu0 %v1597
        %1779 = vmatpush1.msra.mxu0 %v1596
        %1780 = vmatprep.subr.mxu0 %v1601
        %1781 = vmatpush1.msra.mxu0 %v1600
        %1782 = vmatprep.subr.mxu0 %v1605
        %1783 = vmatpush1.msra.mxu0 %v1604
        %1784 = vmatprep.subr.mxu0 %v1609
        %1785 = vmatpush1.msra.mxu0 %v1608
        %1786 = vmatprep.subr.mxu0 %v1613
        %1787 = vmatpush1.msra.mxu0 %v1612
        %1788 = vmatprep.subr.mxu0 %v1617
        %1789 = vmatpush1.msra.mxu0 %v1616
        %1790 = vmatprep.subr.mxu0 %v1621
        %1791 = vmatpush1.msra.mxu0 %v1620
        %1792 = vmatprep.subr.mxu0 %v1625
        %1793 = vmatpush1.msra.mxu0 %v1624
        %1794 = vmatprep.subr.mxu0 %v1629
        %1795 = vmatpush1.msra.mxu0 %v1628
        %1796 = vmatprep.subr.mxu0 %v1633
        %1797 = vmatpush1.msra.mxu0 %v1632
        %1798 = vmatprep.mubr.f32.mxu0 %v1504
        %1799 = vmatmul.mubr.f32.gmra.mrb[0].mxu0 %v1503
        %v1800 = vpop.f32.mrb[0].mxu0
        %v1801 = vadd.f32 %v1714, %v1800
        %v1802 = vpop.f32.mrb[0].mxu0
        %v1803 = vadd.f32 %v1718, %v1802
        %1804 = vdwg.mxu0
        %1805 = vmatprep.subr.mxu0 %v1637
        %1806 = vmatpush1.msra.mxu0 %v1636
        %1807 = vmatprep.subr.mxu0 %v1641
        %1808 = vmatpush1.msra.mxu0 %v1640
        %1809 = vmatprep.subr.mxu0 %v1645
        %1810 = vmatpush1.msra.mxu0 %v1644
        %1811 = vmatprep.subr.mxu0 %v1649
        %1812 = vmatpush1.msra.mxu0 %v1648
        %1813 = vmatprep.subr.mxu0 %v1653
        %1814 = vmatpush1.msra.mxu0 %v1652
        %1815 = vmatprep.subr.mxu0 %v1657
        %1816 = vmatpush1.msra.mxu0 %v1656
        %1817 = vmatprep.subr.mxu0 %v1661
        %1818 = vmatpush1.msra.mxu0 %v1660
        %1819 = vmatprep.subr.mxu0 %v1665
        %1820 = vmatpush1.msra.mxu0 %v1664
        %1821 = vmatprep.subr.mxu0 %v1669
        %1822 = vmatpush1.msra.mxu0 %v1668
        %1823 = vmatprep.subr.mxu0 %v1673
        %1824 = vmatpush1.msra.mxu0 %v1672
        %1825 = vmatprep.subr.mxu0 %v1677
        %1826 = vmatpush1.msra.mxu0 %v1676
        %1827 = vmatprep.subr.mxu0 %v1681
        %1828 = vmatpush1.msra.mxu0 %v1680
        %1829 = vmatprep.subr.mxu0 %v1685
        %1830 = vmatpush1.msra.mxu0 %v1684
        %1831 = vmatprep.subr.mxu0 %v1689
        %1832 = vmatpush1.msra.mxu0 %v1688
        %1833 = vmatprep.subr.mxu0 %v1693
        %1834 = vmatpush1.msra.mxu0 %v1692
        %1835 = vmatprep.subr.mxu0 %v1697
        %1836 = vmatpush1.msra.mxu0 %v1696
        %1837 = vmatprep.subr.mxu0 %v1701
        %1838 = vmatpush1.msra.mxu0 %v1700
        %1839 = vmatprep.subr.mxu0 %v1705
        %1840 = vmatpush1.msra.mxu0 %v1704
        %1841 = vmatprep.subr.mxu0 0.0
        %1842 = vmatpush1.msra.mxu0 0.0
        %1843 = vmatprep.subr.mxu0 0.0
        %1844 = vmatpush1.msra.mxu0 0.0
        %1845 = vmatprep.subr.mxu0 0.0
        %1846 = vmatpush1.msra.mxu0 0.0
        %1847 = vmatprep.subr.mxu0 0.0
        %1848 = vmatpush1.msra.mxu0 0.0
        %1849 = vmatprep.subr.mxu0 0.0
        %1850 = vmatpush1.msra.mxu0 0.0
        %1851 = vmatprep.subr.mxu0 0.0
        %1852 = vmatpush1.msra.mxu0 0.0
        %1853 = vmatprep.subr.mxu0 0.0
        %1854 = vmatpush1.msra.mxu0 0.0
        %1855 = vmatprep.subr.mxu0 0.0
        %1856 = vmatpush1.msra.mxu0 0.0
        %1857 = vmatprep.subr.mxu0 0.0
        %1858 = vmatpush1.msra.mxu0 0.0
        %1859 = vmatprep.subr.mxu0 0.0
        %1860 = vmatpush1.msra.mxu0 0.0
        %1861 = vmatprep.subr.mxu0 0.0
        %1862 = vmatpush1.msra.mxu0 0.0
        %1863 = vmatprep.subr.mxu0 0.0
        %1864 = vmatpush1.msra.mxu0 0.0
        %1865 = vmatprep.subr.mxu0 0.0
        %1866 = vmatpush1.msra.mxu0 0.0
        %1867 = vmatprep.subr.mxu0 0.0
        %1868 = vmatpush1.msra.mxu0 0.0
        %1869 = vmatprep.mubr.f32.mxu0 %v1732
        %1870 = vmatmul.mubr.f32.gmra.mrb[0].mxu0 %v1505
        %v1871 = vpop.f32.mrb[0].mxu0
        %v1872 = vadd.f32 %v1801, %v1871
        %v1873 = vpop.f32.mrb[0].mxu0
        %v1874 = vadd.f32 %v1803, %v1873
        %1875 = vdwg.mxu0
        %1876 = vmatprep.subr.mxu0 %v1511
        %1877 = vmatpush1.msra.mxu0 %v1510
        %1878 = vmatprep.subr.mxu0 %v1515
        %1879 = vmatpush1.msra.mxu0 %v1514
        %1880 = vmatprep.subr.mxu0 %v1519
        %1881 = vmatpush1.msra.mxu0 %v1518
        %1882 = vmatprep.subr.mxu0 %v1523
        %1883 = vmatpush1.msra.mxu0 %v1522
        %1884 = vmatprep.subr.mxu0 %v1527
        %1885 = vmatpush1.msra.mxu0 %v1526
        %1886 = vmatprep.subr.mxu0 %v1531
        %1887 = vmatpush1.msra.mxu0 %v1530
        %1888 = vmatprep.subr.mxu0 %v1535
        %1889 = vmatpush1.msra.mxu0 %v1534
        %1890 = vmatprep.subr.mxu0 %v1539
        %1891 = vmatpush1.msra.mxu0 %v1538
        %1892 = vmatprep.subr.mxu0 %v1543
        %1893 = vmatpush1.msra.mxu0 %v1542
        %1894 = vmatprep.subr.mxu0 %v1547
        %1895 = vmatpush1.msra.mxu0 %v1546
        %1896 = vmatprep.subr.mxu0 %v1551
        %1897 = vmatpush1.msra.mxu0 %v1550
        %1898 = vmatprep.subr.mxu0 %v1555
        %1899 = vmatpush1.msra.mxu0 %v1554
        %1900 = vmatprep.subr.mxu0 %v1559
        %1901 = vmatpush1.msra.mxu0 %v1558
        %1902 = vmatprep.subr.mxu0 %v1563
        %1903 = vmatpush1.msra.mxu0 %v1562
        %1904 = vmatprep.subr.mxu0 %v1567
        %1905 = vmatpush1.msra.mxu0 %v1566
        %1906 = vmatprep.subr.mxu0 %v1571
        %1907 = vmatpush1.msra.mxu0 %v1570
        %1908 = vmatprep.subr.mxu0 %v1575
        %1909 = vmatpush1.msra.mxu0 %v1574
        %1910 = vmatprep.subr.mxu0 %v1579
        %1911 = vmatpush1.msra.mxu0 %v1578
        %1912 = vmatprep.subr.mxu0 %v1583
        %1913 = vmatpush1.msra.mxu0 %v1582
        %1914 = vmatprep.subr.mxu0 %v1587
        %1915 = vmatpush1.msra.mxu0 %v1586
        %1916 = vmatprep.subr.mxu0 %v1591
        %1917 = vmatpush1.msra.mxu0 %v1590
        %1918 = vmatprep.subr.mxu0 %v1595
        %1919 = vmatpush1.msra.mxu0 %v1594
        %1920 = vmatprep.subr.mxu0 %v1599
        %1921 = vmatpush1.msra.mxu0 %v1598
        %1922 = vmatprep.subr.mxu0 %v1603
        %1923 = vmatpush1.msra.mxu0 %v1602
        %1924 = vmatprep.subr.mxu0 %v1607
        %1925 = vmatpush1.msra.mxu0 %v1606
        %1926 = vmatprep.subr.mxu0 %v1611
        %1927 = vmatpush1.msra.mxu0 %v1610
        %1928 = vmatprep.subr.mxu0 %v1615
        %1929 = vmatpush1.msra.mxu0 %v1614
        %1930 = vmatprep.subr.mxu0 %v1619
        %1931 = vmatpush1.msra.mxu0 %v1618
        %1932 = vmatprep.subr.mxu0 %v1623
        %1933 = vmatpush1.msra.mxu0 %v1622
        %1934 = vmatprep.subr.mxu0 %v1627
        %1935 = vmatpush1.msra.mxu0 %v1626
        %1936 = vmatprep.subr.mxu0 %v1631
        %1937 = vmatpush1.msra.mxu0 %v1630
        %1938 = vmatprep.subr.mxu0 %v1635
        %1939 = vmatpush1.msra.mxu0 %v1634
        %1940 = vmatprep.mubr.f32.mxu0 %v1504
        %1941 = vmatmul.mubr.f32.gmra.mrb[0].mxu0 %v1503
        %v1942 = vpop.f32.mrb[0].mxu0
        %v1943 = vadd.f32 %v1722, %v1942
        %v1944 = vpop.f32.mrb[0].mxu0
        %v1945 = vadd.f32 %v1726, %v1944
        %1946 = vdwg.mxu0
        %1947 = vmatprep.subr.mxu0 %v1639
        %1948 = vmatpush1.msra.mxu0 %v1638
        %1949 = vmatprep.subr.mxu0 %v1643
        %1950 = vmatpush1.msra.mxu0 %v1642
        %1951 = vmatprep.subr.mxu0 %v1647
        %1952 = vmatpush1.msra.mxu0 %v1646
        %1953 = vmatprep.subr.mxu0 %v1651
        %1954 = vmatpush1.msra.mxu0 %v1650
        %1955 = vmatprep.subr.mxu0 %v1655
        %1956 = vmatpush1.msra.mxu0 %v1654
        %1957 = vmatprep.subr.mxu0 %v1659
        %1958 = vmatpush1.msra.mxu0 %v1658
        %1959 = vmatprep.subr.mxu0 %v1663
        %1960 = vmatpush1.msra.mxu0 %v1662
        %1961 = vmatprep.subr.mxu0 %v1667
        %1962 = vmatpush1.msra.mxu0 %v1666
        %1963 = vmatprep.subr.mxu0 %v1671
        %1964 = vmatpush1.msra.mxu0 %v1670
        %1965 = vmatprep.subr.mxu0 %v1675
        %1966 = vmatpush1.msra.mxu0 %v1674
        %1967 = vmatprep.subr.mxu0 %v1679
        %1968 = vmatpush1.msra.mxu0 %v1678
        %1969 = vmatprep.subr.mxu0 %v1683
        %1970 = vmatpush1.msra.mxu0 %v1682
        %1971 = vmatprep.subr.mxu0 %v1687
        %1972 = vmatpush1.msra.mxu0 %v1686
        %1973 = vmatprep.subr.mxu0 %v1691
        %1974 = vmatpush1.msra.mxu0 %v1690
        %1975 = vmatprep.subr.mxu0 %v1695
        %1976 = vmatpush1.msra.mxu0 %v1694
        %1977 = vmatprep.subr.mxu0 %v1699
        %1978 = vmatpush1.msra.mxu0 %v1698
        %1979 = vmatprep.subr.mxu0 %v1703
        %1980 = vmatpush1.msra.mxu0 %v1702
        %1981 = vmatprep.subr.mxu0 %v1707
        %1982 = vmatpush1.msra.mxu0 %v1706
        %1983 = vmatprep.subr.mxu0 0.0
        %1984 = vmatpush1.msra.mxu0 0.0
        %1985 = vmatprep.subr.mxu0 0.0
        %1986 = vmatpush1.msra.mxu0 0.0
        %1987 = vmatprep.subr.mxu0 0.0
        %1988 = vmatpush1.msra.mxu0 0.0
        %1989 = vmatprep.subr.mxu0 0.0
        %1990 = vmatpush1.msra.mxu0 0.0
        %1991 = vmatprep.subr.mxu0 0.0
        %1992 = vmatpush1.msra.mxu0 0.0
        %1993 = vmatprep.subr.mxu0 0.0
        %1994 = vmatpush1.msra.mxu0 0.0
        %1995 = vmatprep.subr.mxu0 0.0
        %1996 = vmatpush1.msra.mxu0 0.0
        %1997 = vmatprep.subr.mxu0 0.0
        %1998 = vmatpush1.msra.mxu0 0.0
        %1999 = vmatprep.subr.mxu0 0.0
        %2000 = vmatpush1.msra.mxu0 0.0
        %2001 = vmatprep.subr.mxu0 0.0
        %2002 = vmatpush1.msra.mxu0 0.0
        %2003 = vmatprep.subr.mxu0 0.0
        %2004 = vmatpush1.msra.mxu0 0.0
        %2005 = vmatprep.subr.mxu0 0.0
        %2006 = vmatpush1.msra.mxu0 0.0
        %2007 = vmatprep.subr.mxu0 0.0
        %2008 = vmatpush1.msra.mxu0 0.0
        %2009 = vmatprep.subr.mxu0 0.0
        %2010 = vmatpush1.msra.mxu0 0.0
        %2011 = vmatprep.mubr.f32.mxu0 %v1732
        %2012 = vmatmul.mubr.f32.gmra.mrb[0].mxu0 %v1505
        %v2013 = vpop.f32.mrb[0].mxu0
        %v2014 = vadd.f32 %v1943, %v2013
        %v2015 = vpop.f32.mrb[0].mxu0
        %v2016 = vadd.f32 %v1945, %v2015
        %2017 = vdwg.mxu0
        %v2018 = vmax.f32 %v1872, 0.0
        %v2019 = vmax.f32 %v1874, 0.0
        %v2020 = vmax.f32 %v2014, 0.0
        %v2021 = vmax.f32 %v2016, 0.0
        %s2022 = scalar_lea.vmem [#allocation4], 4800
        %v2023 = vld [vmem:[%s2022] sm:$0xff]
        %v2024 = vld [vmem:[%s2022 + $0x8] sm:$0xff]
        %v2025 = vld [vmem:[%s2022 + $0x10] sm:$0xff]
        %v2026 = vld [vmem:[%s2022 + $0x18] sm:$0xff]
        %v2027 = vld [vmem:[%s2022 + $0x20] sm:$0xff]
        %v2028 = vld [vmem:[%s2022 + $0x28] sm:$0xff]
        %v2029 = vld [vmem:[%s2022 + $0x30] sm:$0xff]
        %v2030 = vld [vmem:[%s2022 + $0x38] sm:$0xff]
        %v2031 = vld [vmem:[%s2022 + $0x40] sm:$0xff]
        %v2032 = vld [vmem:[%s2022 + $0x48] sm:$0xff]
        %v2033 = vld [vmem:[%s2022 + $0x50] sm:$0xff]
        %v2034 = vld [vmem:[%s2022 + $0x58] sm:$0xff]
        %v2035 = vld [vmem:[%s2022 + $0x60] sm:$0xff]
        %v2036 = vld [vmem:[%s2022 + $0x68] sm:$0xff]
        %v2037 = vld [vmem:[%s2022 + $0x70] sm:$0xff]
        %v2038 = vld [vmem:[%s2022 + $0x78] sm:$0xff]
        %v2039 = vld [vmem:[%s2022 + $0x80] sm:$0xff]
        %v2040 = vld [vmem:[%s2022 + $0x88] sm:$0xff]
        %v2041 = vld [vmem:[%s2022 + $0x90] sm:$0xff]
        %v2042 = vld [vmem:[%s2022 + $0x98] sm:$0xff]
        %v2043 = vld [vmem:[%s2022 + $0xa0] sm:$0xff]
        %v2044 = vld [vmem:[%s2022 + $0xa8] sm:$0xff]
        %v2045 = vld [vmem:[%s2022 + $0xb0] sm:$0xff]
        %v2046 = vld [vmem:[%s2022 + $0xb8] sm:$0xff]
        %v2047 = vld [vmem:[%s2022 + $0xc0] sm:$0xff]
        %v2048 = vld [vmem:[%s2022 + $0xc8] sm:$0xff]
        %v2049 = vld [vmem:[%s2022 + $0xd0] sm:$0xff]
        %v2050 = vld [vmem:[%s2022 + $0xd8] sm:$0xff]
        %v2051 = vld [vmem:[%s2022 + $0xe0] sm:$0xff]
        %v2052 = vld [vmem:[%s2022 + $0xe8] sm:$0xff]
        %v2053 = vld [vmem:[%s2022 + $0xf0] sm:$0xff]
        %v2054 = vld [vmem:[%s2022 + $0xf8] sm:$0xff]
        %v2055 = vld [vmem:[%s2022 + $0x100] sm:$0xff]
        %v2056 = vld [vmem:[%s2022 + $0x108] sm:$0xff]
        %v2057 = vld [vmem:[%s2022 + $0x110] sm:$0xff]
        %v2058 = vld [vmem:[%s2022 + $0x118] sm:$0xff]
        %v2059 = vld [vmem:[%s2022 + $0x120] sm:$0xff]
        %v2060 = vld [vmem:[%s2022 + $0x128] sm:$0xff]
        %v2061 = vld [vmem:[%s2022 + $0x130] sm:$0xff]
        %v2062 = vld [vmem:[%s2022 + $0x138] sm:$0xff]
        %v2063 = vld [vmem:[%s2022 + $0x140] sm:$0xff]
        %v2064 = vld [vmem:[%s2022 + $0x148] sm:$0xff]
        %v2065 = vld [vmem:[%s2022 + $0x150] sm:$0xff]
        %v2066 = vld [vmem:[%s2022 + $0x158] sm:$0xff]
        %v2067 = vld [vmem:[%s2022 + $0x160] sm:$0xff]
        %v2068 = vld [vmem:[%s2022 + $0x168] sm:$0xff]
        %v2069 = vld [vmem:[%s2022 + $0x170] sm:$0xff]
        %v2070 = vld [vmem:[%s2022 + $0x178] sm:$0xff]
        %v2071 = vld [vmem:[%s2022 + $0x180] sm:$0xff]
        %v2072 = vld [vmem:[%s2022 + $0x188] sm:$0xff]
        %v2073 = vld [vmem:[%s2022 + $0x190] sm:$0xff]
        %v2074 = vld [vmem:[%s2022 + $0x198] sm:$0xff]
        %v2075 = vld [vmem:[%s2022 + $0x1a0] sm:$0xff]
        %v2076 = vld [vmem:[%s2022 + $0x1a8] sm:$0xff]
        %v2077 = vld [vmem:[%s2022 + $0x1b0] sm:$0xff]
        %v2078 = vld [vmem:[%s2022 + $0x1b8] sm:$0xff]
        %v2079 = vld [vmem:[%s2022 + $0x1c0] sm:$0xff]
        %v2080 = vld [vmem:[%s2022 + $0x1c8] sm:$0xff]
        %v2081 = vld [vmem:[%s2022 + $0x1d0] sm:$0xff]
        %v2082 = vld [vmem:[%s2022 + $0x1d8] sm:$0xff]
        %v2083 = vld [vmem:[%s2022 + $0x1e0] sm:$0xff]
        %v2084 = vld [vmem:[%s2022 + $0x1e8] sm:$0xff]
        %v2085 = vld [vmem:[%s2022 + $0x1f0] sm:$0xff]
        %v2086 = vld [vmem:[%s2022 + $0x1f8] sm:$0xff]
        %v2087 = vld [vmem:[%s2022 + $0x200] sm:$0xff]
        %v2088 = vld [vmem:[%s2022 + $0x208] sm:$0xff]
        %v2089 = vld [vmem:[%s2022 + $0x210] sm:$0xff]
        %v2090 = vld [vmem:[%s2022 + $0x218] sm:$0xff]
        %v2091 = vld [vmem:[%s2022 + $0x220] sm:$0xff]
        %v2092 = vld [vmem:[%s2022 + $0x228] sm:$0xff]
        %v2093 = vld [vmem:[%s2022 + $0x230] sm:$0xff]
        %v2094 = vld [vmem:[%s2022 + $0x238] sm:$0xff]
        %v2095 = vld [vmem:[%s2022 + $0x240] sm:$0xff]
        %v2096 = vld [vmem:[%s2022 + $0x248] sm:$0xff]
        %v2097 = vld [vmem:[%s2022 + $0x250] sm:$0xff]
        %v2098 = vld [vmem:[%s2022 + $0x258] sm:$0xff]
        %v2099 = vld [vmem:[%s2022 + $0x260] sm:$0xff]
        %v2100 = vld [vmem:[%s2022 + $0x268] sm:$0xff]
        %v2101 = vld [vmem:[%s2022 + $0x270] sm:$0xff]
        %v2102 = vld [vmem:[%s2022 + $0x278] sm:$0xff]
        %v2103 = vld [vmem:[%s2022 + $0x280] sm:$0xff]
        %v2104 = vld [vmem:[%s2022 + $0x288] sm:$0xff]
        %v2105 = vld [vmem:[%s2022 + $0x290] sm:$0xff]
        %v2106 = vld [vmem:[%s2022 + $0x298] sm:$0xff]
        %v2107 = vld [vmem:[%s2022 + $0x2a0] sm:$0xff]
        %v2108 = vld [vmem:[%s2022 + $0x2a8] sm:$0xff]
        %v2109 = vld [vmem:[%s2022 + $0x2b0] sm:$0xff]
        %v2110 = vld [vmem:[%s2022 + $0x2b8] sm:$0xff]
        %v2111 = vld [vmem:[%s2022 + $0x2c0] sm:$0xff]
        %v2112 = vld [vmem:[%s2022 + $0x2c8] sm:$0xff]
        %v2113 = vld [vmem:[%s2022 + $0x2d0] sm:$0xff]
        %v2114 = vld [vmem:[%s2022 + $0x2d8] sm:$0xff]
        %v2115 = vld [vmem:[%s2022 + $0x2e0] sm:$0xff]
        %v2116 = vld [vmem:[%s2022 + $0x2e8] sm:$0xff]
        %v2117 = vld [vmem:[%s2022 + $0x2f0] sm:$0xff]
        %v2118 = vld [vmem:[%s2022 + $0x2f8] sm:$0xff]
        %v2119 = vld [vmem:[%s2022 + $0x300] sm:$0xff]
        %v2120 = vld [vmem:[%s2022 + $0x308] sm:$0xff]
        %v2121 = vld [vmem:[%s2022 + $0x310] sm:$0xff]
        %v2122 = vld [vmem:[%s2022 + $0x318] sm:$0xff]
        %v2123 = vld [vmem:[%s2022 + $0x320] sm:$0xff]
        %v2124 = vld [vmem:[%s2022 + $0x328] sm:$0xff]
        %v2125 = vld [vmem:[%s2022 + $0x330] sm:$0xff]
        %v2126 = vld [vmem:[%s2022 + $0x338] sm:$0xff]
        %v2127 = vld [vmem:[%s2022 + $0x340] sm:$0xff]
        %v2128 = vld [vmem:[%s2022 + $0x348] sm:$0xff]
        %v2129 = vld [vmem:[%s2022 + $0x350] sm:$0xff]
        %v2130 = vld [vmem:[%s2022 + $0x358] sm:$0xff]
        %v2131 = vld [vmem:[%s2022 + $0x360] sm:$0xff]
        %v2132 = vld [vmem:[%s2022 + $0x368] sm:$0xff]
        %v2133 = vld [vmem:[%s2022 + $0x370] sm:$0xff]
        %v2134 = vld [vmem:[%s2022 + $0x378] sm:$0xff]
        %v2135 = vld [vmem:[%s2022 + $0x380] sm:$0xff]
        %v2136 = vld [vmem:[%s2022 + $0x388] sm:$0xff]
        %v2137 = vld [vmem:[%s2022 + $0x390] sm:$0xff]
        %v2138 = vld [vmem:[%s2022 + $0x398] sm:$0xff]
        %v2139 = vld [vmem:[%s2022 + $0x3a0] sm:$0xff]
        %v2140 = vld [vmem:[%s2022 + $0x3a8] sm:$0xff]
        %v2141 = vld [vmem:[%s2022 + $0x3b0] sm:$0xff]
        %v2142 = vld [vmem:[%s2022 + $0x3b8] sm:$0xff]
        %v2143 = vld [vmem:[%s2022 + $0x3c0] sm:$0xff]
        %v2144 = vld [vmem:[%s2022 + $0x3c8] sm:$0xff]
        %v2145 = vld [vmem:[%s2022 + $0x3d0] sm:$0xff]
        %v2146 = vld [vmem:[%s2022 + $0x3d8] sm:$0xff]
        %v2147 = vld [vmem:[%s2022 + $0x3e0] sm:$0xff]
        %v2148 = vld [vmem:[%s2022 + $0x3e8] sm:$0xff]
        %v2149 = vld [vmem:[%s2022 + $0x3f0] sm:$0xff]
        %v2150 = vld [vmem:[%s2022 + $0x3f8] sm:$0xff]
        %v2151 = vld [vmem:[%s2022 + $0x400] sm:$0xff]
        %v2152 = vld [vmem:[%s2022 + $0x408] sm:$0xff]
        %v2153 = vld [vmem:[%s2022 + $0x410] sm:$0xff]
        %v2154 = vld [vmem:[%s2022 + $0x418] sm:$0xff]
        %v2155 = vld [vmem:[%s2022 + $0x420] sm:$0xff]
        %v2156 = vld [vmem:[%s2022 + $0x428] sm:$0xff]
        %v2157 = vld [vmem:[%s2022 + $0x430] sm:$0xff]
        %v2158 = vld [vmem:[%s2022 + $0x438] sm:$0xff]
        %v2159 = vld [vmem:[%s2022 + $0x440] sm:$0xff]
        %v2160 = vld [vmem:[%s2022 + $0x448] sm:$0xff]
        %v2161 = vld [vmem:[%s2022 + $0x450] sm:$0xff]
        %v2162 = vld [vmem:[%s2022 + $0x458] sm:$0xff]
        %v2163 = vld [vmem:[%s2022 + $0x460] sm:$0xff]
        %v2164 = vld [vmem:[%s2022 + $0x468] sm:$0xff]
        %v2165 = vld [vmem:[%s2022 + $0x470] sm:$0xff]
        %v2166 = vld [vmem:[%s2022 + $0x478] sm:$0xff]
        %v2167 = vld [vmem:[%s2022 + $0x480] sm:$0xff]
        %v2168 = vld [vmem:[%s2022 + $0x488] sm:$0xff]
        %v2169 = vld [vmem:[%s2022 + $0x490] sm:$0xff]
        %v2170 = vld [vmem:[%s2022 + $0x498] sm:$0xff]
        %v2171 = vld [vmem:[%s2022 + $0x4a0] sm:$0xff]
        %v2172 = vld [vmem:[%s2022 + $0x4a8] sm:$0xff]
        %v2173 = vld [vmem:[%s2022 + $0x4b0] sm:$0xff]
        %v2174 = vld [vmem:[%s2022 + $0x4b8] sm:$0xff]
        %v2175 = vld [vmem:[%s2022 + $0x4c0] sm:$0xff]
        %v2176 = vld [vmem:[%s2022 + $0x4c8] sm:$0xff]
        %v2177 = vld [vmem:[%s2022 + $0x4d0] sm:$0xff]
        %v2178 = vld [vmem:[%s2022 + $0x4d8] sm:$0xff]
        %v2179 = vld [vmem:[%s2022 + $0x4e0] sm:$0xff]
        %v2180 = vld [vmem:[%s2022 + $0x4e8] sm:$0xff]
        %v2181 = vld [vmem:[%s2022 + $0x4f0] sm:$0xff]
        %v2182 = vld [vmem:[%s2022 + $0x4f8] sm:$0xff]
        %v2183 = vld [vmem:[%s2022 + $0x500] sm:$0xff]
        %v2184 = vld [vmem:[%s2022 + $0x508] sm:$0xff]
        %v2185 = vld [vmem:[%s2022 + $0x510] sm:$0xff]
        %v2186 = vld [vmem:[%s2022 + $0x518] sm:$0xff]
        %v2187 = vld [vmem:[%s2022 + $0x520] sm:$0xff]
        %v2188 = vld [vmem:[%s2022 + $0x528] sm:$0xff]
        %v2189 = vld [vmem:[%s2022 + $0x530] sm:$0xff]
        %v2190 = vld [vmem:[%s2022 + $0x538] sm:$0xff]
        %v2191 = vld [vmem:[%s2022 + $0x540] sm:$0xff]
        %v2192 = vld [vmem:[%s2022 + $0x548] sm:$0xff]
        %v2193 = vld [vmem:[%s2022 + $0x550] sm:$0xff]
        %v2194 = vld [vmem:[%s2022 + $0x558] sm:$0xff]
        %v2195 = vld [vmem:[%s2022 + $0x560] sm:$0xff]
        %v2196 = vld [vmem:[%s2022 + $0x568] sm:$0xff]
        %v2197 = vld [vmem:[%s2022 + $0x570] sm:$0xff]
        %v2198 = vld [vmem:[%s2022 + $0x578] sm:$0xff]
        %v2199 = vld [vmem:[%s2022 + $0x580] sm:$0xff]
        %v2200 = vld [vmem:[%s2022 + $0x588] sm:$0xff]
        %v2201 = vld [vmem:[%s2022 + $0x590] sm:$0xff]
        %v2202 = vld [vmem:[%s2022 + $0x598] sm:$0xff]
        %v2203 = vld [vmem:[%s2022 + $0x5a0] sm:$0xff]
        %v2204 = vld [vmem:[%s2022 + $0x5a8] sm:$0xff]
        %v2205 = vld [vmem:[%s2022 + $0x5b0] sm:$0xff]
        %v2206 = vld [vmem:[%s2022 + $0x5b8] sm:$0xff]
        %v2207 = vld [vmem:[%s2022 + $0x5c0] sm:$0xff]
        %v2208 = vld [vmem:[%s2022 + $0x5c8] sm:$0xff]
        %v2209 = vld [vmem:[%s2022 + $0x5d0] sm:$0xff]
        %v2210 = vld [vmem:[%s2022 + $0x5d8] sm:$0xff]
        %v2211 = vld [vmem:[%s2022 + $0x5e0] sm:$0xff]
        %v2212 = vld [vmem:[%s2022 + $0x5e8] sm:$0xff]
        %v2213 = vld [vmem:[%s2022 + $0x5f0] sm:$0xff]
        %v2214 = vld [vmem:[%s2022 + $0x5f8] sm:$0xff]
        %v2215 = vld [vmem:[%s2022 + $0x600] sm:$0xff]
        %v2216 = vld [vmem:[%s2022 + $0x608] sm:$0xff]
        %v2217 = vld [vmem:[%s2022 + $0x610] sm:$0xff]
        %v2218 = vld [vmem:[%s2022 + $0x618] sm:$0xff]
        %v2219 = vld [vmem:[%s2022 + $0x620] sm:$0xff]
        %v2220 = vld [vmem:[%s2022 + $0x628] sm:$0xff]
        %v2221 = vld [vmem:[%s2022 + $0x630] sm:$0xff]
        %v2222 = vld [vmem:[%s2022 + $0x638] sm:$0xff]
        %s2223 = scalar_lea.vmem [#allocation6], 4
        %v2224 = vld [vmem:[%s2223] ss:$8 sm:$0xf]
        %v2226 = vlaneseq
        %v2227 = vshrl.u32 %v2226, 7
        %v2228 = vsub.s32 0, %v2227
        %v2229 = vrot.slane %v2224, %v2228
        %v2230 = vlaneseq
        %v2231 = vshrl.u32 %v2230, 7
        %v2232 = vsub.s32 1, %v2231
        %v2233 = vrot.slane %v2224, %v2232
        %v2234 = vlaneseq
        %v2235 = vshrl.u32 %v2234, 7
        %v2236 = vsub.s32 2, %v2235
        %v2237 = vrot.slane %v2224, %v2236
        %v2238 = vlaneseq
        %v2239 = vshrl.u32 %v2238, 7
        %v2240 = vsub.s32 3, %v2239
        %v2241 = vrot.slane %v2224, %v2240
        %v2247 = vsel %vm700, %v2021, 0
        %2249 = vmatprep.subr.mxu0 %v2024
        %2250 = vmatpush1.msra.mxu0 %v2023
        %2251 = vmatprep.subr.mxu0 %v2028
        %2252 = vmatpush1.msra.mxu0 %v2027
        %2253 = vmatprep.subr.mxu0 %v2032
        %2254 = vmatpush1.msra.mxu0 %v2031
        %2255 = vmatprep.subr.mxu0 %v2036
        %2256 = vmatpush1.msra.mxu0 %v2035
        %2257 = vmatprep.subr.mxu0 %v2040
        %2258 = vmatpush1.msra.mxu0 %v2039
        %2259 = vmatprep.subr.mxu0 %v2044
        %2260 = vmatpush1.msra.mxu0 %v2043
        %2261 = vmatprep.subr.mxu0 %v2048
        %2262 = vmatpush1.msra.mxu0 %v2047
        %2263 = vmatprep.subr.mxu0 %v2052
        %2264 = vmatpush1.msra.mxu0 %v2051
        %2265 = vmatprep.subr.mxu0 %v2056
        %2266 = vmatpush1.msra.mxu0 %v2055
        %2267 = vmatprep.subr.mxu0 %v2060
        %2268 = vmatpush1.msra.mxu0 %v2059
        %2269 = vmatprep.subr.mxu0 %v2064
        %2270 = vmatpush1.msra.mxu0 %v2063
        %2271 = vmatprep.subr.mxu0 %v2068
        %2272 = vmatpush1.msra.mxu0 %v2067
        %2273 = vmatprep.subr.mxu0 %v2072
        %2274 = vmatpush1.msra.mxu0 %v2071
        %2275 = vmatprep.subr.mxu0 %v2076
        %2276 = vmatpush1.msra.mxu0 %v2075
        %2277 = vmatprep.subr.mxu0 %v2080
        %2278 = vmatpush1.msra.mxu0 %v2079
        %2279 = vmatprep.subr.mxu0 %v2084
        %2280 = vmatpush1.msra.mxu0 %v2083
        %2281 = vmatprep.subr.mxu0 %v2088
        %2282 = vmatpush1.msra.mxu0 %v2087
        %2283 = vmatprep.subr.mxu0 %v2092
        %2284 = vmatpush1.msra.mxu0 %v2091
        %2285 = vmatprep.subr.mxu0 %v2096
        %2286 = vmatpush1.msra.mxu0 %v2095
        %2287 = vmatprep.subr.mxu0 %v2100
        %2288 = vmatpush1.msra.mxu0 %v2099
        %2289 = vmatprep.subr.mxu0 %v2104
        %2290 = vmatpush1.msra.mxu0 %v2103
        %2291 = vmatprep.subr.mxu0 %v2108
        %2292 = vmatpush1.msra.mxu0 %v2107
        %2293 = vmatprep.subr.mxu0 %v2112
        %2294 = vmatpush1.msra.mxu0 %v2111
        %2295 = vmatprep.subr.mxu0 %v2116
        %2296 = vmatpush1.msra.mxu0 %v2115
        %2297 = vmatprep.subr.mxu0 %v2120
        %2298 = vmatpush1.msra.mxu0 %v2119
        %2299 = vmatprep.subr.mxu0 %v2124
        %2300 = vmatpush1.msra.mxu0 %v2123
        %2301 = vmatprep.subr.mxu0 %v2128
        %2302 = vmatpush1.msra.mxu0 %v2127
        %2303 = vmatprep.subr.mxu0 %v2132
        %2304 = vmatpush1.msra.mxu0 %v2131
        %2305 = vmatprep.subr.mxu0 %v2136
        %2306 = vmatpush1.msra.mxu0 %v2135
        %2307 = vmatprep.subr.mxu0 %v2140
        %2308 = vmatpush1.msra.mxu0 %v2139
        %2309 = vmatprep.subr.mxu0 %v2144
        %2310 = vmatpush1.msra.mxu0 %v2143
        %2311 = vmatprep.subr.mxu0 %v2148
        %2312 = vmatpush1.msra.mxu0 %v2147
        %2313 = vmatprep.mubr.f32.mxu0 %v2019
        %2314 = vmatmul.mubr.f32.gmra.mrb[0].mxu0 %v2018
        %v2315 = vpop.f32.mrb[0].mxu0
        %v2316 = vadd.f32 %v2229, %v2315
        %v2317 = vpop.f32.mrb[0].mxu0
        %v2318 = vadd.f32 %v2233, %v2317
        %2319 = vdwg.mxu0
        %2320 = vmatprep.subr.mxu0 %v2152
        %2321 = vmatpush1.msra.mxu0 %v2151
        %2322 = vmatprep.subr.mxu0 %v2156
        %2323 = vmatpush1.msra.mxu0 %v2155
        %2324 = vmatprep.subr.mxu0 %v2160
        %2325 = vmatpush1.msra.mxu0 %v2159
        %2326 = vmatprep.subr.mxu0 %v2164
        %2327 = vmatpush1.msra.mxu0 %v2163
        %2328 = vmatprep.subr.mxu0 %v2168
        %2329 = vmatpush1.msra.mxu0 %v2167
        %2330 = vmatprep.subr.mxu0 %v2172
        %2331 = vmatpush1.msra.mxu0 %v2171
        %2332 = vmatprep.subr.mxu0 %v2176
        %2333 = vmatpush1.msra.mxu0 %v2175
        %2334 = vmatprep.subr.mxu0 %v2180
        %2335 = vmatpush1.msra.mxu0 %v2179
        %2336 = vmatprep.subr.mxu0 %v2184
        %2337 = vmatpush1.msra.mxu0 %v2183
        %2338 = vmatprep.subr.mxu0 %v2188
        %2339 = vmatpush1.msra.mxu0 %v2187
        %2340 = vmatprep.subr.mxu0 %v2192
        %2341 = vmatpush1.msra.mxu0 %v2191
        %2342 = vmatprep.subr.mxu0 %v2196
        %2343 = vmatpush1.msra.mxu0 %v2195
        %2344 = vmatprep.subr.mxu0 %v2200
        %2345 = vmatpush1.msra.mxu0 %v2199
        %2346 = vmatprep.subr.mxu0 %v2204
        %2347 = vmatpush1.msra.mxu0 %v2203
        %2348 = vmatprep.subr.mxu0 %v2208
        %2349 = vmatpush1.msra.mxu0 %v2207
        %2350 = vmatprep.subr.mxu0 %v2212
        %2351 = vmatpush1.msra.mxu0 %v2211
        %2352 = vmatprep.subr.mxu0 %v2216
        %2353 = vmatpush1.msra.mxu0 %v2215
        %2354 = vmatprep.subr.mxu0 %v2220
        %2355 = vmatpush1.msra.mxu0 %v2219
        %2356 = vmatprep.subr.mxu0 0.0
        %2357 = vmatpush1.msra.mxu0 0.0
        %2358 = vmatprep.subr.mxu0 0.0
        %2359 = vmatpush1.msra.mxu0 0.0
        %2360 = vmatprep.subr.mxu0 0.0
        %2361 = vmatpush1.msra.mxu0 0.0
        %2362 = vmatprep.subr.mxu0 0.0
        %2363 = vmatpush1.msra.mxu0 0.0
        %2364 = vmatprep.subr.mxu0 0.0
        %2365 = vmatpush1.msra.mxu0 0.0
        %2366 = vmatprep.subr.mxu0 0.0
        %2367 = vmatpush1.msra.mxu0 0.0
        %2368 = vmatprep.subr.mxu0 0.0
        %2369 = vmatpush1.msra.mxu0 0.0
        %2370 = vmatprep.subr.mxu0 0.0
        %2371 = vmatpush1.msra.mxu0 0.0
        %2372 = vmatprep.subr.mxu0 0.0
        %2373 = vmatpush1.msra.mxu0 0.0
        %2374 = vmatprep.subr.mxu0 0.0
        %2375 = vmatpush1.msra.mxu0 0.0
        %2376 = vmatprep.subr.mxu0 0.0
        %2377 = vmatpush1.msra.mxu0 0.0
        %2378 = vmatprep.subr.mxu0 0.0
        %2379 = vmatpush1.msra.mxu0 0.0
        %2380 = vmatprep.subr.mxu0 0.0
        %2381 = vmatpush1.msra.mxu0 0.0
        %2382 = vmatprep.subr.mxu0 0.0
        %2383 = vmatpush1.msra.mxu0 0.0
        %2384 = vmatprep.mubr.f32.mxu0 %v2247
        %2385 = vmatmul.mubr.f32.gmra.mrb[0].mxu0 %v2020
        %v2386 = vpop.f32.mrb[0].mxu0
        %v2387 = vadd.f32 %v2316, %v2386
        %v2388 = vpop.f32.mrb[0].mxu0
        %v2389 = vadd.f32 %v2318, %v2388
        %2390 = vdwg.mxu0
        %2391 = vmatprep.subr.mxu0 %v2026
        %2392 = vmatpush1.msra.mxu0 %v2025
        %2393 = vmatprep.subr.mxu0 %v2030
        %2394 = vmatpush1.msra.mxu0 %v2029
        %2395 = vmatprep.subr.mxu0 %v2034
        %2396 = vmatpush1.msra.mxu0 %v2033
        %2397 = vmatprep.subr.mxu0 %v2038
        %2398 = vmatpush1.msra.mxu0 %v2037
        %2399 = vmatprep.subr.mxu0 %v2042
        %2400 = vmatpush1.msra.mxu0 %v2041
        %2401 = vmatprep.subr.mxu0 %v2046
        %2402 = vmatpush1.msra.mxu0 %v2045
        %2403 = vmatprep.subr.mxu0 %v2050
        %2404 = vmatpush1.msra.mxu0 %v2049
        %2405 = vmatprep.subr.mxu0 %v2054
        %2406 = vmatpush1.msra.mxu0 %v2053
        %2407 = vmatprep.subr.mxu0 %v2058
        %2408 = vmatpush1.msra.mxu0 %v2057
        %2409 = vmatprep.subr.mxu0 %v2062
        %2410 = vmatpush1.msra.mxu0 %v2061
        %2411 = vmatprep.subr.mxu0 %v2066
        %2412 = vmatpush1.msra.mxu0 %v2065
        %2413 = vmatprep.subr.mxu0 %v2070
        %2414 = vmatpush1.msra.mxu0 %v2069
        %2415 = vmatprep.subr.mxu0 %v2074
        %2416 = vmatpush1.msra.mxu0 %v2073
        %2417 = vmatprep.subr.mxu0 %v2078
        %2418 = vmatpush1.msra.mxu0 %v2077
        %2419 = vmatprep.subr.mxu0 %v2082
        %2420 = vmatpush1.msra.mxu0 %v2081
        %2421 = vmatprep.subr.mxu0 %v2086
        %2422 = vmatpush1.msra.mxu0 %v2085
        %2423 = vmatprep.subr.mxu0 %v2090
        %2424 = vmatpush1.msra.mxu0 %v2089
        %2425 = vmatprep.subr.mxu0 %v2094
        %2426 = vmatpush1.msra.mxu0 %v2093
        %2427 = vmatprep.subr.mxu0 %v2098
        %2428 = vmatpush1.msra.mxu0 %v2097
        %2429 = vmatprep.subr.mxu0 %v2102
        %2430 = vmatpush1.msra.mxu0 %v2101
        %2431 = vmatprep.subr.mxu0 %v2106
        %2432 = vmatpush1.msra.mxu0 %v2105
        %2433 = vmatprep.subr.mxu0 %v2110
        %2434 = vmatpush1.msra.mxu0 %v2109
        %2435 = vmatprep.subr.mxu0 %v2114
        %2436 = vmatpush1.msra.mxu0 %v2113
        %2437 = vmatprep.subr.mxu0 %v2118
        %2438 = vmatpush1.msra.mxu0 %v2117
        %2439 = vmatprep.subr.mxu0 %v2122
        %2440 = vmatpush1.msra.mxu0 %v2121
        %2441 = vmatprep.subr.mxu0 %v2126
        %2442 = vmatpush1.msra.mxu0 %v2125
        %2443 = vmatprep.subr.mxu0 %v2130
        %2444 = vmatpush1.msra.mxu0 %v2129
        %2445 = vmatprep.subr.mxu0 %v2134
        %2446 = vmatpush1.msra.mxu0 %v2133
        %2447 = vmatprep.subr.mxu0 %v2138
        %2448 = vmatpush1.msra.mxu0 %v2137
        %2449 = vmatprep.subr.mxu0 %v2142
        %2450 = vmatpush1.msra.mxu0 %v2141
        %2451 = vmatprep.subr.mxu0 %v2146
        %2452 = vmatpush1.msra.mxu0 %v2145
        %2453 = vmatprep.subr.mxu0 %v2150
        %2454 = vmatpush1.msra.mxu0 %v2149
        %2455 = vmatprep.mubr.f32.mxu0 %v2019
        %2456 = vmatmul.mubr.f32.gmra.mrb[0].mxu0 %v2018
        %v2457 = vpop.f32.mrb[0].mxu0
        %v2458 = vadd.f32 %v2237, %v2457
        %v2459 = vpop.f32.mrb[0].mxu0
        %v2460 = vadd.f32 %v2241, %v2459
        %2461 = vdwg.mxu0
        %2462 = vmatprep.subr.mxu0 %v2154
        %2463 = vmatpush1.msra.mxu0 %v2153
        %2464 = vmatprep.subr.mxu0 %v2158
        %2465 = vmatpush1.msra.mxu0 %v2157
        %2466 = vmatprep.subr.mxu0 %v2162
        %2467 = vmatpush1.msra.mxu0 %v2161
        %2468 = vmatprep.subr.mxu0 %v2166
        %2469 = vmatpush1.msra.mxu0 %v2165
        %2470 = vmatprep.subr.mxu0 %v2170
        %2471 = vmatpush1.msra.mxu0 %v2169
        %2472 = vmatprep.subr.mxu0 %v2174
        %2473 = vmatpush1.msra.mxu0 %v2173
        %2474 = vmatprep.subr.mxu0 %v2178
        %2475 = vmatpush1.msra.mxu0 %v2177
        %2476 = vmatprep.subr.mxu0 %v2182
        %2477 = vmatpush1.msra.mxu0 %v2181
        %2478 = vmatprep.subr.mxu0 %v2186
        %2479 = vmatpush1.msra.mxu0 %v2185
        %2480 = vmatprep.subr.mxu0 %v2190
        %2481 = vmatpush1.msra.mxu0 %v2189
        %2482 = vmatprep.subr.mxu0 %v2194
        %2483 = vmatpush1.msra.mxu0 %v2193
        %2484 = vmatprep.subr.mxu0 %v2198
        %2485 = vmatpush1.msra.mxu0 %v2197
        %2486 = vmatprep.subr.mxu0 %v2202
        %2487 = vmatpush1.msra.mxu0 %v2201
        %2488 = vmatprep.subr.mxu0 %v2206
        %2489 = vmatpush1.msra.mxu0 %v2205
        %2490 = vmatprep.subr.mxu0 %v2210
        %2491 = vmatpush1.msra.mxu0 %v2209
        %2492 = vmatprep.subr.mxu0 %v2214
        %2493 = vmatpush1.msra.mxu0 %v2213
        %2494 = vmatprep.subr.mxu0 %v2218
        %2495 = vmatpush1.msra.mxu0 %v2217
        %2496 = vmatprep.subr.mxu0 %v2222
        %2497 = vmatpush1.msra.mxu0 %v2221
        %2498 = vmatprep.subr.mxu0 0.0
        %2499 = vmatpush1.msra.mxu0 0.0
        %2500 = vmatprep.subr.mxu0 0.0
        %2501 = vmatpush1.msra.mxu0 0.0
        %2502 = vmatprep.subr.mxu0 0.0
        %2503 = vmatpush1.msra.mxu0 0.0
        %2504 = vmatprep.subr.mxu0 0.0
        %2505 = vmatpush1.msra.mxu0 0.0
        %2506 = vmatprep.subr.mxu0 0.0
        %2507 = vmatpush1.msra.mxu0 0.0
        %2508 = vmatprep.subr.mxu0 0.0
        %2509 = vmatpush1.msra.mxu0 0.0
        %2510 = vmatprep.subr.mxu0 0.0
        %2511 = vmatpush1.msra.mxu0 0.0
        %2512 = vmatprep.subr.mxu0 0.0
        %2513 = vmatpush1.msra.mxu0 0.0
        %2514 = vmatprep.subr.mxu0 0.0
        %2515 = vmatpush1.msra.mxu0 0.0
        %2516 = vmatprep.subr.mxu0 0.0
        %2517 = vmatpush1.msra.mxu0 0.0
        %2518 = vmatprep.subr.mxu0 0.0
        %2519 = vmatpush1.msra.mxu0 0.0
        %2520 = vmatprep.subr.mxu0 0.0
        %2521 = vmatpush1.msra.mxu0 0.0
        %2522 = vmatprep.subr.mxu0 0.0
        %2523 = vmatpush1.msra.mxu0 0.0
        %2524 = vmatprep.subr.mxu0 0.0
        %2525 = vmatpush1.msra.mxu0 0.0
        %2526 = vmatprep.mubr.f32.mxu0 %v2247
        %2527 = vmatmul.mubr.f32.gmra.mrb[0].mxu0 %v2020
        %v2528 = vpop.f32.mrb[0].mxu0
        %v2529 = vadd.f32 %v2458, %v2528
        %v2530 = vpop.f32.mrb[0].mxu0
        %v2531 = vadd.f32 %v2460, %v2530
        %2532 = vdwg.mxu0
        %v2533 = vmax.f32 %v2387, 0.0
        %v2534 = vmax.f32 %v2389, 0.0
        %v2535 = vmax.f32 %v2529, 0.0
        %v2536 = vmax.f32 %v2531, 0.0
        %v2537 = vld [vmem:[%s3] sm:$0xff]
        %v2538 = vld [vmem:[%s3 + $0x8] sm:$0xff]
        %v2539 = vld [vmem:[%s3 + $0x10] sm:$0xff]
        %v2540 = vld [vmem:[%s3 + $0x18] sm:$0xff]
        %v2541 = vld [vmem:[%s3 + $0x20] sm:$0xff]
        %v2542 = vld [vmem:[%s3 + $0x28] sm:$0xff]
        %v2543 = vld [vmem:[%s3 + $0x30] sm:$0xff]
        %v2544 = vld [vmem:[%s3 + $0x38] sm:$0xff]
        %v2545 = vld [vmem:[%s3 + $0x40] sm:$0xff]
        %v2546 = vld [vmem:[%s3 + $0x48] sm:$0xff]
        %v2547 = vld [vmem:[%s3 + $0x50] sm:$0xff]
        %v2548 = vld [vmem:[%s3 + $0x58] sm:$0xff]
        %v2549 = vld [vmem:[%s3 + $0x60] sm:$0xff]
        %v2550 = vld [vmem:[%s3 + $0x68] sm:$0xff]
        %v2551 = vld [vmem:[%s3 + $0x70] sm:$0xff]
        %v2552 = vld [vmem:[%s3 + $0x78] sm:$0xff]
        %v2553 = vld [vmem:[%s3 + $0x80] sm:$0xff]
        %v2554 = vld [vmem:[%s3 + $0x88] sm:$0xff]
        %v2555 = vld [vmem:[%s3 + $0x90] sm:$0xff]
        %v2556 = vld [vmem:[%s3 + $0x98] sm:$0xff]
        %v2557 = vld [vmem:[%s3 + $0xa0] sm:$0xff]
        %v2558 = vld [vmem:[%s3 + $0xa8] sm:$0xff]
        %v2559 = vld [vmem:[%s3 + $0xb0] sm:$0xff]
        %v2560 = vld [vmem:[%s3 + $0xb8] sm:$0xff]
        %v2561 = vld [vmem:[%s3 + $0xc0] sm:$0xff]
        %v2562 = vld [vmem:[%s3 + $0xc8] sm:$0xff]
        %v2563 = vld [vmem:[%s3 + $0xd0] sm:$0xff]
        %v2564 = vld [vmem:[%s3 + $0xd8] sm:$0xff]
        %v2565 = vld [vmem:[%s3 + $0xe0] sm:$0xff]
        %v2566 = vld [vmem:[%s3 + $0xe8] sm:$0xff]
        %v2567 = vld [vmem:[%s3 + $0xf0] sm:$0xff]
        %v2568 = vld [vmem:[%s3 + $0xf8] sm:$0xff]
        %v2569 = vld [vmem:[%s3 + $0x100] sm:$0xff]
        %v2570 = vld [vmem:[%s3 + $0x108] sm:$0xff]
        %v2571 = vld [vmem:[%s3 + $0x110] sm:$0xff]
        %v2572 = vld [vmem:[%s3 + $0x118] sm:$0xff]
        %v2573 = vld [vmem:[%s3 + $0x120] sm:$0xff]
        %v2574 = vld [vmem:[%s3 + $0x128] sm:$0xff]
        %v2575 = vld [vmem:[%s3 + $0x130] sm:$0xff]
        %v2576 = vld [vmem:[%s3 + $0x138] sm:$0xff]
        %v2577 = vld [vmem:[%s3 + $0x140] sm:$0xff]
        %v2578 = vld [vmem:[%s3 + $0x148] sm:$0xff]
        %v2579 = vld [vmem:[%s3 + $0x150] sm:$0xff]
        %v2580 = vld [vmem:[%s3 + $0x158] sm:$0xff]
        %v2581 = vld [vmem:[%s3 + $0x160] sm:$0xff]
        %v2582 = vld [vmem:[%s3 + $0x168] sm:$0xff]
        %v2583 = vld [vmem:[%s3 + $0x170] sm:$0xff]
        %v2584 = vld [vmem:[%s3 + $0x178] sm:$0xff]
        %v2585 = vld [vmem:[%s3 + $0x180] sm:$0xff]
        %v2586 = vld [vmem:[%s3 + $0x188] sm:$0xff]
        %v2587 = vld [vmem:[#allocation7] sm:$0x1]
        %v2589 = vlaneseq
        %v2590 = vshrl.u32 %v2589, 7
        %v2591 = vsub.s32 0, %v2590
        %v2592 = vrot.slane %v2587, %v2591
        %v2595 = vsel %vm700, %v2536, 0
        %2597 = vmatprep.subr.mxu0 0.0
        %2598 = vmatpush1.msra.mxu0 %v2537
        %2599 = vmatprep.subr.mxu0 0.0
        %2600 = vmatpush1.msra.mxu0 %v2538
        %2601 = vmatprep.subr.mxu0 0.0
        %2602 = vmatpush1.msra.mxu0 %v2539
        %2603 = vmatprep.subr.mxu0 0.0
        %2604 = vmatpush1.msra.mxu0 %v2540
        %2605 = vmatprep.subr.mxu0 0.0
        %2606 = vmatpush1.msra.mxu0 %v2541
        %2607 = vmatprep.subr.mxu0 0.0
        %2608 = vmatpush1.msra.mxu0 %v2542
        %2609 = vmatprep.subr.mxu0 0.0
        %2610 = vmatpush1.msra.mxu0 %v2543
        %2611 = vmatprep.subr.mxu0 0.0
        %2612 = vmatpush1.msra.mxu0 %v2544
        %2613 = vmatprep.subr.mxu0 0.0
        %2614 = vmatpush1.msra.mxu0 %v2545
        %2615 = vmatprep.subr.mxu0 0.0
        %2616 = vmatpush1.msra.mxu0 %v2546
        %2617 = vmatprep.subr.mxu0 0.0
        %2618 = vmatpush1.msra.mxu0 %v2547
        %2619 = vmatprep.subr.mxu0 0.0
        %2620 = vmatpush1.msra.mxu0 %v2548
        %2621 = vmatprep.subr.mxu0 0.0
        %2622 = vmatpush1.msra.mxu0 %v2549
        %2623 = vmatprep.subr.mxu0 0.0
        %2624 = vmatpush1.msra.mxu0 %v2550
        %2625 = vmatprep.subr.mxu0 0.0
        %2626 = vmatpush1.msra.mxu0 %v2551
        %2627 = vmatprep.subr.mxu0 0.0
        %2628 = vmatpush1.msra.mxu0 %v2552
        %2629 = vmatprep.subr.mxu0 0.0
        %2630 = vmatpush1.msra.mxu0 %v2553
        %2631 = vmatprep.subr.mxu0 0.0
        %2632 = vmatpush1.msra.mxu0 %v2554
        %2633 = vmatprep.subr.mxu0 0.0
        %2634 = vmatpush1.msra.mxu0 %v2555
        %2635 = vmatprep.subr.mxu0 0.0
        %2636 = vmatpush1.msra.mxu0 %v2556
        %2637 = vmatprep.subr.mxu0 0.0
        %2638 = vmatpush1.msra.mxu0 %v2557
        %2639 = vmatprep.subr.mxu0 0.0
        %2640 = vmatpush1.msra.mxu0 %v2558
        %2641 = vmatprep.subr.mxu0 0.0
        %2642 = vmatpush1.msra.mxu0 %v2559
        %2643 = vmatprep.subr.mxu0 0.0
        %2644 = vmatpush1.msra.mxu0 %v2560
        %2645 = vmatprep.subr.mxu0 0.0
        %2646 = vmatpush1.msra.mxu0 %v2561
        %2647 = vmatprep.subr.mxu0 0.0
        %2648 = vmatpush1.msra.mxu0 %v2562
        %2649 = vmatprep.subr.mxu0 0.0
        %2650 = vmatpush1.msra.mxu0 %v2563
        %2651 = vmatprep.subr.mxu0 0.0
        %2652 = vmatpush1.msra.mxu0 %v2564
        %2653 = vmatprep.subr.mxu0 0.0
        %2654 = vmatpush1.msra.mxu0 %v2565
        %2655 = vmatprep.subr.mxu0 0.0
        %2656 = vmatpush1.msra.mxu0 %v2566
        %2657 = vmatprep.subr.mxu0 0.0
        %2658 = vmatpush1.msra.mxu0 %v2567
        %2659 = vmatprep.subr.mxu0 0.0
        %2660 = vmatpush1.msra.mxu0 %v2568
        %2661 = vmatprep.mubr.f32.mxu0 %v2534
        %2662 = vmatmul.mubr.f32.gmra.mrb[0].mxu0 %v2533
        %v2663 = vpop.f32.mrb[0].mxu0
        %v2664 = vadd.f32 %v2592, %v2663
        %v2665 = vpop.f32.mrb[0].mxu0
        %2666 = vdwg.mxu0
        %2667 = vmatprep.subr.mxu0 0.0
        %2668 = vmatpush1.msra.mxu0 %v2569
        %2669 = vmatprep.subr.mxu0 0.0
        %2670 = vmatpush1.msra.mxu0 %v2570
        %2671 = vmatprep.subr.mxu0 0.0
        %2672 = vmatpush1.msra.mxu0 %v2571
        %2673 = vmatprep.subr.mxu0 0.0
        %2674 = vmatpush1.msra.mxu0 %v2572
        %2675 = vmatprep.subr.mxu0 0.0
        %2676 = vmatpush1.msra.mxu0 %v2573
        %2677 = vmatprep.subr.mxu0 0.0
        %2678 = vmatpush1.msra.mxu0 %v2574
        %2679 = vmatprep.subr.mxu0 0.0
        %2680 = vmatpush1.msra.mxu0 %v2575
        %2681 = vmatprep.subr.mxu0 0.0
        %2682 = vmatpush1.msra.mxu0 %v2576
        %2683 = vmatprep.subr.mxu0 0.0
        %2684 = vmatpush1.msra.mxu0 %v2577
        %2685 = vmatprep.subr.mxu0 0.0
        %2686 = vmatpush1.msra.mxu0 %v2578
        %2687 = vmatprep.subr.mxu0 0.0
        %2688 = vmatpush1.msra.mxu0 %v2579
        %2689 = vmatprep.subr.mxu0 0.0
        %2690 = vmatpush1.msra.mxu0 %v2580
        %2691 = vmatprep.subr.mxu0 0.0
        %2692 = vmatpush1.msra.mxu0 %v2581
        %2693 = vmatprep.subr.mxu0 0.0
        %2694 = vmatpush1.msra.mxu0 %v2582
        %2695 = vmatprep.subr.mxu0 0.0
        %2696 = vmatpush1.msra.mxu0 %v2583
        %2697 = vmatprep.subr.mxu0 0.0
        %2698 = vmatpush1.msra.mxu0 %v2584
        %2699 = vmatprep.subr.mxu0 0.0
        %2700 = vmatpush1.msra.mxu0 %v2585
        %2701 = vmatprep.subr.mxu0 0.0
        %2702 = vmatpush1.msra.mxu0 %v2586
        %2703 = vmatprep.subr.mxu0 0.0
        %2704 = vmatpush1.msra.mxu0 0.0
        %2705 = vmatprep.subr.mxu0 0.0
        %2706 = vmatpush1.msra.mxu0 0.0
        %2707 = vmatprep.subr.mxu0 0.0
        %2708 = vmatpush1.msra.mxu0 0.0
        %2709 = vmatprep.subr.mxu0 0.0
        %2710 = vmatpush1.msra.mxu0 0.0
        %2711 = vmatprep.subr.mxu0 0.0
        %2712 = vmatpush1.msra.mxu0 0.0
        %2713 = vmatprep.subr.mxu0 0.0
        %2714 = vmatpush1.msra.mxu0 0.0
        %2715 = vmatprep.subr.mxu0 0.0
        %2716 = vmatpush1.msra.mxu0 0.0
        %2717 = vmatprep.subr.mxu0 0.0
        %2718 = vmatpush1.msra.mxu0 0.0
        %2719 = vmatprep.subr.mxu0 0.0
        %2720 = vmatpush1.msra.mxu0 0.0
        %2721 = vmatprep.subr.mxu0 0.0
        %2722 = vmatpush1.msra.mxu0 0.0
        %2723 = vmatprep.subr.mxu0 0.0
        %2724 = vmatpush1.msra.mxu0 0.0
        %2725 = vmatprep.subr.mxu0 0.0
        %2726 = vmatpush1.msra.mxu0 0.0
        %2727 = vmatprep.subr.mxu0 0.0
        %2728 = vmatpush1.msra.mxu0 0.0
        %2729 = vmatprep.subr.mxu0 0.0
        %2730 = vmatpush1.msra.mxu0 0.0
        %2731 = vmatprep.mubr.f32.mxu0 %v2595
        %2732 = vmatmul.mubr.f32.gmra.mrb[0].mxu0 %v2535
        %v2733 = vpop.f32.mrb[0].mxu0
        %v2734 = vadd.f32 %v2664, %v2733
        %v2735 = vpop.f32.mrb[0].mxu0
        %2736 = vdwg.mxu0
        %v2737 = vsub.f32 0.0, %v2734
        %v2738 = vmul.f32 %v2737, 1.442695
        %v2739 = vpow.pop %v2738
        %v2740 = vadd.f32 %v2739, 1.0
        %v2741 = vrcp.pop %v2740
        %v2742 = vmul.f32 1.0, %v2741
        %vm2743 = vcmask 15360
        %2744 = vst.msk [vmem:[%s299] sm:$0xff] %vm2743, %v2742
        %p2745 = scmp.lt.s32.totalorder %s20, 3
        %s2746 = scalar_select %p2745, %s20, 3
        %s2747 = smul.addr %s2746, 8
        %s2748 = scalar_lea.vmem %s6, %s2747
        // Predicated region
        $region61: #{tpu_custom_call.1} parent=43 // pred_check
          %p2749 = pneg %p169
        $region62: #{tpu_custom_call.1} parent=43 // pred_check_branch
          %2751 = sbr.rel (%p2749) target = $region64
        $region63: #{tpu_custom_call.1} parent=43 // pred_region
          _
        $region64: #{tpu_custom_call.1} parent=43 // pred_fallthru
          _
      $region44: #{tpu_custom_call.1} parent=5 // pred_fallthru
        _
      %p2752 = scmp.le.s32.totalorder 2, %s15
      // Predicated region
      $region65: #{tpu_custom_call.1} parent=5 // pred_check
        %p2753 = pneg %p2752
      $region66: #{tpu_custom_call.1} parent=5 // pred_check_branch
        %2755 = sbr.rel (%p2753) target = $region68
      $region67: #{tpu_custom_call.1} parent=5 // pred_region
        %s2756 = ssub.s32 %s15, 2
        // Predicated region
        $region69: #{tpu_custom_call.1} parent=67 // pred_check
          %p2757 = pneg %p175
        $region70: #{tpu_custom_call.1} parent=67 // pred_check_branch
          %2759 = sbr.rel (%p2757) target = $region72
        $region71: #{tpu_custom_call.1} parent=67 // pred_region
          %p2760 = scmp.lt.s32.totalorder %s21, 3
          %s2761 = scalar_select %p2760, %s21, 3
          %s2762 = smul.addr %s2761, 8
          %s2763 = scalar_lea.vmem %s6, %s2762
        $region72: #{tpu_custom_call.1} parent=67 // pred_fallthru
          _
      $region68: #{tpu_custom_call.1} parent=5 // pred_fallthru
        _
    $region6: #{tpu_custom_call.1} parent=1 // loop_footer
      %s19 = sadd.s32 1, %s15
    $region7: #{tpu_custom_call.1} parent=1 // loop_footer_branch
      %14 = sbr.rel target = $region3
    $region8: #{tpu_custom_call.1} parent=1 // loop_exit
      _
    %2764 = vsyncpa [#allocation3], 1
    %s2765 = scalar_lea.sflag [#allocation3], 1
    %2766 = vsyncpa %s2765, 1
    %2767 = vsyncpa [#allocation5], 1
    %2768 = vsyncpa [#allocation8], 1

</llo_original>
